<compile_context>
chip_gen: v6e
topology: v6e:2x2x1
jax: 0.10.0
libtpu: 0.0.40
codegen_flags: <defaults>
</compile_context>

<pallas_src>
import math
import functools
import numpy as np

import jax
import jax.numpy as jnp
from jax import lax
from jax.experimental import pallas as pl
from jax.experimental.pallas import tpu as pltpu

F32 = jnp.float32
BF16 = jnp.bfloat16
BN_EPS = 1e-5      # PyTorch BatchNorm2d default
KSIZE = 9          # unit_tcn temporal kernel size
PAD = (KSIZE - 1) // 2


def _mm(a, b):
    """Plain 2-D MXU matmul with f32 accumulation."""
    return jnp.dot(a, b, preferred_element_type=jnp.float32)


# ---------------------------------------------------------------------------
# The single fused kernel
# ---------------------------------------------------------------------------
def _tcn_gcn_kernel(x_ref, pe_ref,
                    wcx_ref, bcx_ref,
                    wth_ref, bth_ref, wphi_ref, bphi_ref,
                    bd_ref, bdm_ref, ptile_ref, ptilet_ref,
                    fcw_ref, fcb_ref, fbw_ref, fbb_ref,
                    bng_ref, bnb_ref,
                    wt_ref, bt_ref, tmask_ref,
                    o_ref, *, O, T, V, NB, has_down, inv_att_scale):
    TV = T * V
    bdm = bdm_ref[...]                                   # (TV, TV) same-frame mask

    def process(s):
        x2 = x_ref[s]                                    # (C, TV) channels-first, f32

        # ---- non-local attention map (done first to bound live ranges) -------
        xpe = x2 + pe_ref[...]                           # (C, TV)
        theta = _mm(wth_ref[...], xpe) + bth_ref[...]    # (IC, TV)
        phi = _mm(wphi_ref[...], xpe) + bphi_ref[...]    # (IC, TV)
        # gram[i,j] = sum_c theta[c,i] * phi[c,j]   (transposed-LHS dot, no relayout)
        gram = lax.dot_general(theta, phi, (((0,), (0,)), ((), ())),
                               preferred_element_type=jnp.float32) * bdm
        logits = _mm(_mm(ptilet_ref[...], gram), ptile_ref[...]) * inv_att_scale  # (V,V)
        lmax = jnp.max(logits, axis=0, keepdims=True)
        lexp = jnp.exp(logits - lmax)
        att = lexp * pl.reciprocal(jnp.sum(lexp, axis=0, keepdims=True), approx=True)
        # expand (V,V) -> per-frame block-diagonal (TV,TV): tiny matmul for the lane
        # replication, aligned sublane concat for the frame replication, VPU mask.
        att_rows = _mm(att, ptilet_ref[...])                           # (V, TV)
        bd_att = (jnp.concatenate([att_rows] * T, axis=0) * bdm).astype(BF16)

        # ---- all 1x1 channel mixes as ONE stacked MXU matmul ------------------
        # rows: [joint0 | joint1 | joint2 | part | body | nonlocal (| down | res)]
        z_all = _mm(wcx_ref[...], x2)                    # (S*O, TV) f32

        def z(i):
            return z_all[i * O:(i + 1) * O, :]           # (O, TV) f32

        def zb(i):
            return z(i).astype(BF16)

        # ---- graph branches: conv(x) @ blockdiag(adjacency) + bias ------------
        xnl = _mm(zb(5), bd_att) + bcx_ref[3]
        xj = (_mm(zb(0), bd_ref[0]) + _mm(zb(1), bd_ref[1]) + _mm(zb(2), bd_ref[2])
              + bcx_ref[0])                              # joint biases pre-summed
        xp = _mm(zb(3), bd_ref[3]) + bcx_ref[1]
        xb = _mm(zb(4), bd_ref[4]) + bcx_ref[2]

        # ---- branch selection: global avg pool -> fc -> 3-way softmax ---------
        x_sum = xj + xp + xb                                       # (O, TV)
        glo = jnp.sum(x_sum, axis=1, keepdims=True) * (1.0 / TV)   # (O, 1)
        fz = jnp.sum(fcw_ref[...] * glo, axis=0, keepdims=True) + fcb_ref[...]  # (1, d)
        a0 = jnp.sum(fbw_ref[0] * fz, axis=1, keepdims=True) + fbb_ref[0]       # (O, 1)
        a1 = jnp.sum(fbw_ref[1] * fz, axis=1, keepdims=True) + fbb_ref[1]
        a2 = jnp.sum(fbw_ref[2] * fz, axis=1, keepdims=True) + fbb_ref[2]
        amax = jnp.maximum(jnp.maximum(a0, a1), a2)
        e0 = jnp.exp(a0 - amax)
        e1 = jnp.exp(a1 - amax)
        e2 = jnp.exp(a2 - amax)
        inv_s = pl.reciprocal(e0 + e1 + e2, approx=True)
        y = (e0 * inv_s) * xj + (e1 * inv_s) * xp + (e2 * inv_s) * xb + xnl

        # ---- folded BatchNorm (eval) + down(x) + ReLU -> unit_gcn output ------
        y = y * bng_ref[...] + bnb_ref[...]
        if has_down:
            down = z(6) + bcx_ref[4]
            res = z(7) + bcx_ref[5]
        else:                       # in_channels == out_channels: identity paths
            down = x2
            res = x2
        y_gcn = jnp.maximum(y + down, 0.0)                         # (O, TV) f32

        # ---- unit_tcn: 9-tap temporal conv via XLU roll + VPU mask (BN folded) -
        tcn = jnp.zeros((O, TV), jnp.float32)
        for k in range(KSIZE):
            if k == PAD:
                yk = y_gcn
            else:
                shift = ((PAD - k) * V) % TV             # circular lane roll
                yk = pltpu.roll(y_gcn, shift, 1) * tmask_ref[k]
            tcn = tcn + _mm(wt_ref[k], yk.astype(BF16))
        tcn = tcn + bt_ref[...]

        # ---- TCN_GCN_unit residual + final ReLU --------------------------------
        o_ref[s] = jnp.maximum(tcn + res, 0.0)

    for s in range(NB):             # NB is small & static -> fully unrolled
        process(s)


# ---------------------------------------------------------------------------
# Constant helpers (plain numpy / JAX glue, tiny)
# ---------------------------------------------------------------------------
def make_positional_encoding(C, T, V):
    # TODO(synk): PositionalEncoding class is not included in the source file; this
    # reproduces the standard DSTA-Net sinusoidal 'spatial' encoding (position = joint id).
    position = np.tile(np.arange(V, dtype=np.float32), T)[:, None]             # (T*V, 1)
    div_term = np.exp(np.arange(0, C, 2, dtype=np.float32) * -(math.log(10000.0) / C))
    pe = np.zeros((T * V, C), dtype=np.float32)
    pe[:, 0::2] = np.sin(position * div_term)
    pe[:, 1::2] = np.cos(position * div_term)
    pe = pe.reshape(T, V, C).transpose(2, 0, 1)[None]                          # (1, C, T, V)
    return jnp.asarray(pe)


def _make_tcn_masks(T, V, ksize=KSIZE):
    """mask[k, 0, t*V+v] = 1 iff frame t+k-pad is inside [0, T)."""
    pad = (ksize - 1) // 2
    masks = np.zeros((ksize, 1, T * V), np.float32)
    t_idx = np.arange(T)
    for k in range(ksize):
        valid = ((t_idx + k - pad >= 0) & (t_idx + k - pad < T)).astype(np.float32)
        masks[k, 0, :] = np.repeat(valid, V)
    return jnp.asarray(masks)


def _pick_block_batch(N):
    """Largest per-step batch (<=8) that keeps >=2 grid steps (v7x has 2 TCs)."""
    for nb in (8, 4, 2):
        if N % nb == 0 and N // nb >= 2:
            return nb
    return 1


# ---------------------------------------------------------------------------
# Parameters
# ---------------------------------------------------------------------------
def init_params(key, C_in, C_out, V, T):
    IC = C_out // 4
    d = C_out // 2
    ks = iter(jax.random.split(key, 20))

    def conv_w(kk, co, ci, kh=1):                      # kaiming-normal-ish (fan_out)
        std = math.sqrt(2.0 / (co * kh))
        return std * jax.random.normal(kk, (co, ci, kh), dtype=F32)

    p = {}
    p['A'] = jax.random.uniform(next(ks), (3, V, V), dtype=F32)
    p['G_part'] = jax.random.uniform(next(ks), (V, V), dtype=F32)
    p['G_body'] = jax.random.uniform(next(ks), (V, V), dtype=F32)
    p['PA'] = jnp.full((3, V, V), 1e-6, dtype=F32)
    std_j = math.sqrt(2.0 / (C_out * C_in * 1 * 3))    # conv_branch_init
    p['Wj'] = std_j * jax.random.normal(next(ks), (3, C_out, C_in), dtype=F32)
    p['bj'] = jnp.zeros((3, C_out), dtype=F32)
    p['Wtheta'] = conv_w(next(ks), IC, C_in)[:, :, 0]
    p['btheta'] = jnp.zeros((IC,), F32)
    p['Wphi'] = conv_w(next(ks), IC, C_in)[:, :, 0]
    p['bphi'] = jnp.zeros((IC,), F32)
    p['Wnl'] = conv_w(next(ks), C_out, C_in)[:, :, 0]
    p['bnl'] = jnp.zeros((C_out,), F32)
    p['Wpart'] = conv_w(next(ks), C_out, C_in)[:, :, 0]
    p['bpart'] = jnp.zeros((C_out,), F32)
    p['Wbody'] = conv_w(next(ks), C_out, C_in)[:, :, 0]
    p['bbody'] = jnp.zeros((C_out,), F32)
    lim_fc = 1.0 / math.sqrt(C_out)
    p['fc_w'] = jax.random.uniform(next(ks), (d, C_out), dtype=F32, minval=-lim_fc, maxval=lim_fc)
    p['fc_b'] = jax.random.uniform(next(ks), (d,), dtype=F32, minval=-lim_fc, maxval=lim_fc)
    lim_fb = 1.0 / math.sqrt(d)
    p['fcb_w'] = jax.random.uniform(next(ks), (3, C_out, d), dtype=F32, minval=-lim_fb, maxval=lim_fb)
    p['fcb_b'] = jax.random.uniform(next(ks), (3, C_out), dtype=F32, minval=-lim_fb, maxval=lim_fb)
    p['Wdown'] = conv_w(next(ks), C_out, C_in)[:, :, 0]
    p['bdown'] = jnp.zeros((C_out,), F32)
    p['gcn_bn_gamma'] = jnp.full((C_out,), 1e-6, dtype=F32)        # bn_init(self.bn, 1e-6)
    p['gcn_bn_beta'] = jnp.zeros((C_out,), dtype=F32)
    p['Wtcn'] = conv_w(next(ks), C_out, C_out, kh=KSIZE)           # (O, O, 9)
    p['btcn'] = jnp.zeros((C_out,), F32)
    p['Wres'] = conv_w(next(ks), C_out, C_in)[:, :, 0]             # residual unit_tcn(k=1)
    p['bres'] = jnp.zeros((C_out,), F32)
    return p


# ---------------------------------------------------------------------------
# Forward (one fused pallas_call)
# ---------------------------------------------------------------------------
def tcn_gcn_unit_forward(x, params, *, block_batch=None):
    # TODO(synk): stride > 1 temporal downsampling not implemented (default stride=1).
    N, C, T, V = x.shape
    O = params['Wnl'].shape[0]
    IC = params['Wtheta'].shape[0]
    d = params['fc_w'].shape[0]
    TV = T * V
    s_bn = 1.0 / math.sqrt(1.0 + BN_EPS)     # eval-mode BN with running stats (0, 1)
    has_down = (C != O)
    NB = block_batch if block_batch is not None else _pick_block_batch(N)
    assert N % NB == 0, (N, NB)

    def norm(M):                             # A @ diag(1/(colsum + 1e-3))
        deg = jnp.sum(M, axis=0)
        return M * (1.0 / (deg + 0.001))[None, :]

    eye_t = jnp.eye(T, dtype=F32)

    def bdiag(M):                            # blockdiag_T(M): (T*V, T*V)
        return jnp.kron(eye_t, M)

    # block-diagonal graph operators (joint mixing never crosses frames), bf16 for MXU
    A_eff = params['A'] + params['PA']
    bd = jnp.stack([bdiag(norm(A_eff[0])), bdiag(norm(A_eff[1])), bdiag(norm(A_eff[2])),
                    bdiag(norm(params['G_part'])), bdiag(norm(params['G_body']))]
                   ).astype(BF16)                                                    # (5,TV,TV)
    bdm = jnp.asarray(np.kron(np.eye(T, dtype=np.float32),
                              np.ones((V, V), np.float32)))                          # (TV,TV)
    ptile_np = np.tile(np.eye(V, dtype=np.float32), (T, 1))                          # (TV, V)
    ptile = jnp.asarray(ptile_np)
    ptile_t = jnp.asarray(np.ascontiguousarray(ptile_np.T))                          # (V, TV)
    tcn_mask = _make_tcn_masks(T, V)                                                 # (9,1,TV)

    # stacked 1x1-conv weights (down & res only when needed; their BN folded in)
    blocks = [params['Wj'][0], params['Wj'][1], params['Wj'][2],
              params['Wpart'], params['Wbody'], params['Wnl']]
    if has_down:
        blocks += [s_bn * params['Wdown'], s_bn * params['Wres']]
        b_dn = s_bn * params['bdown']
        b_rs = s_bn * params['bres']
    else:
        b_dn = jnp.zeros((O,), F32)
        b_rs = jnp.zeros((O,), F32)
    w_cx = jnp.concatenate(blocks, axis=0)                                           # (S*O, C)
    b_joint = params['bj'][0] + params['bj'][1] + params['bj'][2]   # pre-folded joint bias
    b_cx = jnp.stack([b_joint, params['bpart'], params['bbody'], params['bnl'],
                      b_dn, b_rs]).reshape(6, O, 1)

    w_th = params['Wtheta']                                                          # (IC, C)
    b_th = params['btheta'].reshape(IC, 1)
    w_phi = params['Wphi']                                                           # (IC, C)
    b_phi = params['bphi'].reshape(IC, 1)

    fcw_t = params['fc_w'].T                                                         # (O, d)
    fcb_r = params['fc_b'].reshape(1, d)
    fbw = params['fcb_w']                                                            # (3, O, d)
    fbb = params['fcb_b'].reshape(3, O, 1)

    bn_g = (params['gcn_bn_gamma'] * s_bn).reshape(O, 1)
    bn_b = params['gcn_bn_beta'].reshape(O, 1)

    wt_taps = (s_bn * params['Wtcn']).transpose(2, 0, 1).astype(BF16)                # (9, O, O)
    bt = (s_bn * params['btcn']).reshape(O, 1)

    pe_cf = make_positional_encoding(C, T, V)[0].reshape(C, TV)                      # (C, TV)

    x_cf = x.reshape(N, C, TV)                         # channels-first, lane-dense

    kern = functools.partial(_tcn_gcn_kernel, O=O, T=T, V=V, NB=NB,
                             has_down=has_down, inv_att_scale=1.0 / float(IC * T))

    # advisory cost estimate for XLA's scheduler
    flops_per_sample = (
        2 * w_cx.shape[0] * C * TV                    # stacked 1x1 channel mix
        + 2 * 2 * IC * C * TV                         # theta / phi
        + 2 * IC * TV * TV                            # masked Gram matrix
        + 2 * (V * TV * TV + V * TV * V + V * V * TV)  # attention fold + expansion
        + 2 * 6 * O * TV * TV                         # 5 graph + 1 non-local right-mults
        + 2 * KSIZE * O * O * TV                      # temporal conv
    )
    const_bytes = (bd.size * 2 + bdm.size * 4 + ptile.size * 4 + ptile_t.size * 4
                   + tcn_mask.size * 4 + w_cx.size * 4 + wt_taps.size * 2)
    cost = pl.CostEstimate(
        flops=int(N * flops_per_sample),
        transcendentals=int(N * (V * V + 3 * O)),
        bytes_accessed=int(x.size * 4 + N * O * TV * 4 + const_bytes))

    out = pl.pallas_call(
        kern,
        out_shape=jax.ShapeDtypeStruct((N, O, TV), F32),
        grid=(N // NB,),
        in_specs=[
            pl.BlockSpec((NB, C, TV), lambda n: (n, 0, 0)),         # x channels-first
            pl.BlockSpec((C, TV), lambda n: (0, 0)),                # pe channels-first
            pl.BlockSpec((w_cx.shape[0], C), lambda n: (0, 0)),     # stacked conv weights
            pl.BlockSpec((6, O, 1), lambda n: (0, 0, 0)),           # stacked conv biases
            pl.BlockSpec((IC, C), lambda n: (0, 0)),                # Wtheta
            pl.BlockSpec((IC, 1), lambda n: (0, 0)),                # btheta
            pl.BlockSpec((IC, C), lambda n: (0, 0)),                # Wphi
            pl.BlockSpec((IC, 1), lambda n: (0, 0)),                # bphi
            pl.BlockSpec((5, TV, TV), lambda n: (0, 0, 0)),         # block-diag adjacencies
            pl.BlockSpec((TV, TV), lambda n: (0, 0)),               # same-frame mask
            pl.BlockSpec((TV, V), lambda n: (0, 0)),                # tiled identity
            pl.BlockSpec((V, TV), lambda n: (0, 0)),                # tiled identity^T
            pl.BlockSpec((O, d), lambda n: (0, 0)),                 # fc_w^T
            pl.BlockSpec((1, d), lambda n: (0, 0)),                 # fc_b
            pl.BlockSpec((3, O, d), lambda n: (0, 0, 0)),           # fc_branch weights
            pl.BlockSpec((3, O, 1), lambda n: (0, 0, 0)),           # fc_branch biases
            pl.BlockSpec((O, 1), lambda n: (0, 0)),                 # folded BN gamma
            pl.BlockSpec((O, 1), lambda n: (0, 0)),                 # BN beta
            pl.BlockSpec((KSIZE, O, O), lambda n: (0, 0, 0)),       # per-tap TCN weights
            pl.BlockSpec((O, 1), lambda n: (0, 0)),                 # TCN bias (BN folded)
            pl.BlockSpec((KSIZE, 1, TV), lambda n: (0, 0, 0)),      # per-tap boundary masks
        ],
        out_specs=pl.BlockSpec((NB, O, TV), lambda n: (n, 0, 0)),
        compiler_params=pltpu.CompilerParams(dimension_semantics=("parallel",)),
        cost_estimate=cost,
    )(x_cf, pe_cf, w_cx, b_cx, w_th, b_th, w_phi, b_phi,
      bd, bdm, ptile, ptile_t, fcw_t, fcb_r, fbw, fbb, bn_g, bn_b,
      wt_taps, bt, tcn_mask)

    return out.reshape(N, O, T, V)


# ---------------------------------------------------------------------------
# Plain-JAX reference (mirrors the PyTorch forward, eval-mode BN) for checking
# ---------------------------------------------------------------------------
def _reference_forward(x, params):
    N, C, T, V = x.shape
    O = params['Wnl'].shape[0]
    IC = params['Wtheta'].shape[0]
    s_bn = 1.0 / math.sqrt(1.0 + BN_EPS)

    def norm(M):
        deg = jnp.sum(M, axis=0)
        return M * (1.0 / (deg + 0.001))[None, :]

    def conv1x1(inp, W, bias):                  # inp (N,Ci,T,V), W (Co,Ci)
        return jnp.einsum('nctv,oc->notv', inp, W) + bias[None, :, None, None]

    x_ctv = x.reshape(N, C * T, V)
    A_eff = params['A'] + params['PA']
    xj = None
    for i in range(3):
        g = jnp.matmul(x_ctv, norm(A_eff[i])).reshape(N, C, T, V)
        t = conv1x1(g, params['Wj'][i], params['bj'][i])
        xj = t if xj is None else xj + t

    pe = make_positional_encoding(C, T, V)
    xpe = x + pe
    th = conv1x1(xpe, params['Wtheta'], params['btheta'])
    ph = conv1x1(xpe, params['Wphi'], params['bphi'])
    th_m = th.transpose(0, 3, 1, 2).reshape(N, V, IC * T)
    ph_m = ph.reshape(N, IC * T, V)
    att = jax.nn.softmax(jnp.matmul(th_m, ph_m) / (IC * T), axis=-2)
    xnl = conv1x1(jnp.matmul(x_ctv, att).reshape(N, C, T, V), params['Wnl'], params['bnl'])
    xp = conv1x1(jnp.matmul(x_ctv, norm(params['G_part'])).reshape(N, C, T, V),
                 params['Wpart'], params['bpart'])
    xb = conv1x1(jnp.matmul(x_ctv, norm(params['G_body'])).reshape(N, C, T, V),
                 params['Wbody'], params['bbody'])

    x_sum = xj + xp + xb
    glo = x_sum.mean(axis=(2, 3))
    fz = glo @ params['fc_w'].T + params['fc_b']
    logits = jnp.stack([fz @ params['fcb_w'][i].T + params['fcb_b'][i] for i in range(3)], axis=1)
    w = jax.nn.softmax(logits, axis=1)[..., None, None]
    y = w[:, 0] * xj + w[:, 1] * xp + w[:, 2] * xb + xnl
    y = (y * (params['gcn_bn_gamma'] * s_bn)[None, :, None, None]
         + params['gcn_bn_beta'][None, :, None, None])
    dwn = s_bn * conv1x1(x, params['Wdown'], params['bdown']) if C != O else x
    y = jax.nn.relu(y + dwn)

    pad = (KSIZE - 1) // 2
    ypad = jnp.pad(y, ((0, 0), (0, 0), (pad, pad), (0, 0)))
    tcn = jnp.zeros((N, O, T, V), F32)
    for k in range(KSIZE):
        tcn = tcn + jnp.einsum('nctv,oc->notv', ypad[:, :, k:k + T, :], params['Wtcn'][:, :, k])
    tcn = s_bn * (tcn + params['btcn'][None, :, None, None])
    res = s_bn * conv1x1(x, params['Wres'], params['bres']) if C != O else x
    return jax.nn.relu(tcn + res)


# ---------------------------------------------------------------------------
if __name__ == "__main__":
    N, C_in, C_out = 2, 4, 16
    T, V = 8, 16                      # num_frame, num_point  (T*V = 128 lanes)
    key = jax.random.PRNGKey(0)
    kx, kp = jax.random.split(key)
    x = jax.random.normal(kx, (N, C_in, T, V), dtype=F32)
    params = init_params(kp, C_in, C_out, V, T)

    fwd = jax.jit(lambda inp: tcn_gcn_unit_forward(inp, params))
    out = jax.block_until_ready(fwd(x))

    assert out.shape == (N, C_out, T, V), out.shape
    assert bool(jnp.all(jnp.isfinite(out)))
    assert bool(jnp.all(out >= 0.0))   # final ReLU

    ref = jax.block_until_ready(jax.jit(lambda inp: _reference_forward(inp, params))(x))
    np.testing.assert_allclose(np.asarray(out), np.asarray(ref), rtol=2e-2, atol=2e-2)

    print("KERNEL_OK")
</pallas_src>

<mosaic_0001>
module attributes {stable_mosaic.version = 11 : i64} {
  func.func @_tcn_gcn_kernel(%arg0: i32, %arg1: memref<1x4x128xf32, #tpu.memory_space<vmem>>, %arg2: memref<4x128xf32, #tpu.memory_space<vmem>>, %arg3: memref<128x4xf32, #tpu.memory_space<vmem>>, %arg4: memref<6x16x1xf32, #tpu.memory_space<vmem>>, %arg5: memref<4x4xf32, #tpu.memory_space<vmem>>, %arg6: memref<4x1xf32, #tpu.memory_space<vmem>>, %arg7: memref<4x4xf32, #tpu.memory_space<vmem>>, %arg8: memref<4x1xf32, #tpu.memory_space<vmem>>, %arg9: memref<5x128x128xbf16, #tpu.memory_space<vmem>>, %arg10: memref<128x128xf32, #tpu.memory_space<vmem>>, %arg11: memref<128x16xf32, #tpu.memory_space<vmem>>, %arg12: memref<16x128xf32, #tpu.memory_space<vmem>>, %arg13: memref<16x8xf32, #tpu.memory_space<vmem>>, %arg14: memref<1x8xf32, #tpu.memory_space<vmem>>, %arg15: memref<3x16x8xf32, #tpu.memory_space<vmem>>, %arg16: memref<3x16x1xf32, #tpu.memory_space<vmem>>, %arg17: memref<16x1xf32, #tpu.memory_space<vmem>>, %arg18: memref<16x1xf32, #tpu.memory_space<vmem>>, %arg19: memref<9x16x16xbf16, #tpu.memory_space<vmem>>, %arg20: memref<16x1xf32, #tpu.memory_space<vmem>>, %arg21: memref<9x1x128xf32, #tpu.memory_space<vmem>>, %arg22: memref<1x16x128xf32, #tpu.memory_space<vmem>>) attributes {dimension_semantics = [#tpu.dimension_semantics<parallel>], iteration_bounds = array<i64: 2>, scalar_prefetch = 0 : i64, scratch_operands = 0 : i64, tpu.core_type = #tpu.core_type<tc>, window_params = [{transform_indices = @transform_0, window_bounds = array<i64: 1, 4, 128>}, {pipeline_mode = #tpu.pipeline_mode<synchronous>, transform_indices = @transform_1, window_bounds = array<i64: 4, 128>}, {pipeline_mode = #tpu.pipeline_mode<synchronous>, transform_indices = @transform_2, window_bounds = array<i64: 128, 4>}, {pipeline_mode = #tpu.pipeline_mode<synchronous>, transform_indices = @transform_3, window_bounds = array<i64: 6, 16, 1>}, {pipeline_mode = #tpu.pipeline_mode<synchronous>, transform_indices = @transform_4, window_bounds = array<i64: 4, 4>}, {pipeline_mode = #tpu.pipeline_mode<synchronous>, transform_indices = @transform_5, window_bounds = array<i64: 4, 1>}, {pipeline_mode = #tpu.pipeline_mode<synchronous>, transform_indices = @transform_6, window_bounds = array<i64: 4, 4>}, {pipeline_mode = #tpu.pipeline_mode<synchronous>, transform_indices = @transform_7, window_bounds = array<i64: 4, 1>}, {pipeline_mode = #tpu.pipeline_mode<synchronous>, transform_indices = @transform_8, window_bounds = array<i64: 5, 128, 128>}, {pipeline_mode = #tpu.pipeline_mode<synchronous>, transform_indices = @transform_9, window_bounds = array<i64: 128, 128>}, {pipeline_mode = #tpu.pipeline_mode<synchronous>, transform_indices = @transform_10, window_bounds = array<i64: 128, 16>}, {pipeline_mode = #tpu.pipeline_mode<synchronous>, transform_indices = @transform_11, window_bounds = array<i64: 16, 128>}, {pipeline_mode = #tpu.pipeline_mode<synchronous>, transform_indices = @transform_12, window_bounds = array<i64: 16, 8>}, {pipeline_mode = #tpu.pipeline_mode<synchronous>, transform_indices = @transform_13, window_bounds = array<i64: 1, 8>}, {pipeline_mode = #tpu.pipeline_mode<synchronous>, transform_indices = @transform_14, window_bounds = array<i64: 3, 16, 8>}, {pipeline_mode = #tpu.pipeline_mode<synchronous>, transform_indices = @transform_15, window_bounds = array<i64: 3, 16, 1>}, {pipeline_mode = #tpu.pipeline_mode<synchronous>, transform_indices = @transform_16, window_bounds = array<i64: 16, 1>}, {pipeline_mode = #tpu.pipeline_mode<synchronous>, transform_indices = @transform_17, window_bounds = array<i64: 16, 1>}, {pipeline_mode = #tpu.pipeline_mode<synchronous>, transform_indices = @transform_18, window_bounds = array<i64: 9, 16, 16>}, {pipeline_mode = #tpu.pipeline_mode<synchronous>, transform_indices = @transform_19, window_bounds = array<i64: 16, 1>}, {pipeline_mode = #tpu.pipeline_mode<synchronous>, transform_indices = @transform_20, window_bounds = array<i64: 9, 1, 128>}, {transform_indices = @transform_21, window_bounds = array<i64: 1, 16, 128>}]} {
    %c0 = arith.constant 0 : index
    %c0_0 = arith.constant 0 : index
    %0 = vector.load %arg10[%c0, %c0_0] : memref<128x128xf32, #tpu.memory_space<vmem>>, vector<128x128xf32>
    %c0_1 = arith.constant 0 : index
    %c0_2 = arith.constant 0 : index
    %c0_3 = arith.constant 0 : index
    %1 = vector.load %arg1[%c0_1, %c0_2, %c0_3] : memref<1x4x128xf32, #tpu.memory_space<vmem>>, vector<1x4x128xf32>
    %2 = vector.shape_cast %1 : vector<1x4x128xf32> to vector<4x128xf32>
    %c0_4 = arith.constant 0 : index
    %c0_5 = arith.constant 0 : index
    %3 = vector.load %arg2[%c0_4, %c0_5] : memref<4x128xf32, #tpu.memory_space<vmem>>, vector<4x128xf32>
    %4 = arith.addf %2, %3 : vector<4x128xf32>
    %c0_6 = arith.constant 0 : index
    %c0_7 = arith.constant 0 : index
    %5 = vector.load %arg5[%c0_6, %c0_7] : memref<4x4xf32, #tpu.memory_space<vmem>>, vector<4x4xf32>
    %cst = arith.constant dense<0.000000e+00> : vector<4x128xf32>
    %6 = tpu.matmul %5, %4, %cst {dimension_numbers = #tpu.dot_dimension_numbers<[1], [0], [0], [1], [0, 0, 1, 1], [], []>} : vector<4x4xf32>, vector<4x128xf32>, vector<4x128xf32> -> vector<4x128xf32>
    %c0_8 = arith.constant 0 : index
    %c0_9 = arith.constant 0 : index
    %7 = vector.load %arg6[%c0_8, %c0_9] : memref<4x1xf32, #tpu.memory_space<vmem>>, vector<4x1xf32>
    %8 = vector.broadcast %7 : vector<4x1xf32> to vector<4x128xf32>
    %9 = arith.addf %6, %8 : vector<4x128xf32>
    %c0_10 = arith.constant 0 : index
    %c0_11 = arith.constant 0 : index
    %10 = vector.load %arg7[%c0_10, %c0_11] : memref<4x4xf32, #tpu.memory_space<vmem>>, vector<4x4xf32>
    %cst_12 = arith.constant dense<0.000000e+00> : vector<4x128xf32>
    %11 = tpu.matmul %10, %4, %cst_12 {dimension_numbers = #tpu.dot_dimension_numbers<[1], [0], [0], [1], [0, 0, 1, 1], [], []>} : vector<4x4xf32>, vector<4x128xf32>, vector<4x128xf32> -> vector<4x128xf32>
    %c0_13 = arith.constant 0 : index
    %c0_14 = arith.constant 0 : index
    %12 = vector.load %arg8[%c0_13, %c0_14] : memref<4x1xf32, #tpu.memory_space<vmem>>, vector<4x1xf32>
    %13 = vector.broadcast %12 : vector<4x1xf32> to vector<4x128xf32>
    %14 = arith.addf %11, %13 : vector<4x128xf32>
    %cst_15 = arith.constant dense<0.000000e+00> : vector<128x128xf32>
    %15 = tpu.matmul %9, %14, %cst_15 {dimension_numbers = #tpu.dot_dimension_numbers<[0], [0], [1], [1], [0, 1, 1, 1], [], []>} : vector<4x128xf32>, vector<4x128xf32>, vector<128x128xf32> -> vector<128x128xf32>
    %16 = arith.mulf %15, %0 : vector<128x128xf32>
    %c0_16 = arith.constant 0 : index
    %c0_17 = arith.constant 0 : index
    %17 = vector.load %arg12[%c0_16, %c0_17] : memref<16x128xf32, #tpu.memory_space<vmem>>, vector<16x128xf32>
    %cst_18 = arith.constant dense<0.000000e+00> : vector<16x128xf32>
    %18 = tpu.matmul %17, %16, %cst_18 {dimension_numbers = #tpu.dot_dimension_numbers<[1], [0], [0], [1], [0, 0, 1, 1], [], []>} : vector<16x128xf32>, vector<128x128xf32>, vector<16x128xf32> -> vector<16x128xf32>
    %c0_19 = arith.constant 0 : index
    %c0_20 = arith.constant 0 : index
    %19 = vector.load %arg11[%c0_19, %c0_20] : memref<128x16xf32, #tpu.memory_space<vmem>>, vector<128x16xf32>
    %cst_21 = arith.constant dense<0.000000e+00> : vector<16x16xf32>
    %20 = tpu.matmul %18, %19, %cst_21 {dimension_numbers = #tpu.dot_dimension_numbers<[1], [0], [0], [1], [0, 0, 1, 1], [], []>} : vector<16x128xf32>, vector<128x16xf32>, vector<16x16xf32> -> vector<16x16xf32>
    %cst_22 = arith.constant 3.125000e-02 : f32
    %21 = vector.broadcast %cst_22 : f32 to vector<16x16xf32>
    %22 = arith.mulf %20, %21 : vector<16x16xf32>
    %cst_23 = arith.constant dense<0xFF800000> : vector<16xf32>
    %23 = vector.multi_reduction <maximumf>, %22, %cst_23 [0] : vector<16x16xf32> to vector<16xf32>
    %24 = vector.shape_cast %23 : vector<16xf32> to vector<1x16xf32>
    %25 = vector.broadcast %24 : vector<1x16xf32> to vector<16x16xf32>
    %26 = arith.subf %22, %25 : vector<16x16xf32>
    %27 = math.exp %26 : vector<16x16xf32>
    %cst_24 = arith.constant dense<0.000000e+00> : vector<16xf32>
    %28 = vector.multi_reduction <add>, %27, %cst_24 [0] : vector<16x16xf32> to vector<16xf32>
    %29 = vector.shape_cast %28 : vector<16xf32> to vector<1x16xf32>
    %30 = tpu.reciprocal %29 {approx = true} : vector<1x16xf32> -> vector<1x16xf32>
    %31 = vector.broadcast %30 : vector<1x16xf32> to vector<16x16xf32>
    %32 = arith.mulf %27, %31 : vector<16x16xf32>
    %c0_25 = arith.constant 0 : index
    %c0_26 = arith.constant 0 : index
    %33 = vector.load %arg12[%c0_25, %c0_26] : memref<16x128xf32, #tpu.memory_space<vmem>>, vector<16x128xf32>
    %cst_27 = arith.constant dense<0.000000e+00> : vector<16x128xf32>
    %34 = tpu.matmul %32, %33, %cst_27 {dimension_numbers = #tpu.dot_dimension_numbers<[1], [0], [0], [1], [0, 0, 1, 1], [], []>} : vector<16x16xf32>, vector<16x128xf32>, vector<16x128xf32> -> vector<16x128xf32>
    %35 = tpu.concatenate %34, %34, %34, %34, %34, %34, %34, %34 in 0 : vector<16x128xf32>, vector<16x128xf32>, vector<16x128xf32>, vector<16x128xf32>, vector<16x128xf32>, vector<16x128xf32>, vector<16x128xf32>, vector<16x128xf32> -> vector<128x128xf32>
    %36 = arith.mulf %35, %0 : vector<128x128xf32>
    %37 = arith.truncf %36 : vector<128x128xf32> to vector<128x128xbf16>
    %c0_28 = arith.constant 0 : index
    %c0_29 = arith.constant 0 : index
    %38 = vector.load %arg3[%c0_28, %c0_29] : memref<128x4xf32, #tpu.memory_space<vmem>>, vector<128x4xf32>
    %cst_30 = arith.constant dense<0.000000e+00> : vector<128x128xf32>
    %39 = tpu.matmul %38, %2, %cst_30 {dimension_numbers = #tpu.dot_dimension_numbers<[1], [0], [0], [1], [0, 0, 1, 1], [], []>} : vector<128x4xf32>, vector<4x128xf32>, vector<128x128xf32> -> vector<128x128xf32>
    %40 = vector.extract_strided_slice %39 {offsets = [80, 0], sizes = [16, 128], strides = [1, 1]} : vector<128x128xf32> to vector<16x128xf32>
    %41 = arith.truncf %40 : vector<16x128xf32> to vector<16x128xbf16>
    %cst_31 = arith.constant dense<0.000000e+00> : vector<16x128xf32>
    %42 = tpu.matmul %41, %37, %cst_31 {dimension_numbers = #tpu.dot_dimension_numbers<[1], [0], [0], [1], [0, 0, 1, 1], [], []>} : vector<16x128xbf16>, vector<128x128xbf16>, vector<16x128xf32> -> vector<16x128xf32>
    %c3 = arith.constant 3 : index
    %c0_32 = arith.constant 0 : index
    %c0_33 = arith.constant 0 : index
    %43 = vector.load %arg4[%c3, %c0_32, %c0_33] : memref<6x16x1xf32, #tpu.memory_space<vmem>>, vector<1x16x1xf32>
    %44 = vector.shape_cast %43 : vector<1x16x1xf32> to vector<16x1xf32>
    %45 = vector.broadcast %44 : vector<16x1xf32> to vector<16x128xf32>
    %46 = arith.addf %42, %45 : vector<16x128xf32>
    %47 = vector.extract_strided_slice %39 {offsets = [0, 0], sizes = [16, 128], strides = [1, 1]} : vector<128x128xf32> to vector<16x128xf32>
    %48 = arith.truncf %47 : vector<16x128xf32> to vector<16x128xbf16>
    %c0_34 = arith.constant 0 : index
    %c0_35 = arith.constant 0 : index
    %c0_36 = arith.constant 0 : index
    %49 = vector.load %arg9[%c0_34, %c0_35, %c0_36] : memref<5x128x128xbf16, #tpu.memory_space<vmem>>, vector<1x128x128xbf16>
    %50 = vector.shape_cast %49 : vector<1x128x128xbf16> to vector<128x128xbf16>
    %cst_37 = arith.constant dense<0.000000e+00> : vector<16x128xf32>
    %51 = tpu.matmul %48, %50, %cst_37 {dimension_numbers = #tpu.dot_dimension_numbers<[1], [0], [0], [1], [0, 0, 1, 1], [], []>} : vector<16x128xbf16>, vector<128x128xbf16>, vector<16x128xf32> -> vector<16x128xf32>
    %52 = vector.extract_strided_slice %39 {offsets = [16, 0], sizes = [16, 128], strides = [1, 1]} : vector<128x128xf32> to vector<16x128xf32>
    %53 = arith.truncf %52 : vector<16x128xf32> to vector<16x128xbf16>
    %c1 = arith.constant 1 : index
    %c0_38 = arith.constant 0 : index
    %c0_39 = arith.constant 0 : index
    %54 = vector.load %arg9[%c1, %c0_38, %c0_39] : memref<5x128x128xbf16, #tpu.memory_space<vmem>>, vector<1x128x128xbf16>
    %55 = vector.shape_cast %54 : vector<1x128x128xbf16> to vector<128x128xbf16>
    %cst_40 = arith.constant dense<0.000000e+00> : vector<16x128xf32>
    %56 = tpu.matmul %53, %55, %cst_40 {dimension_numbers = #tpu.dot_dimension_numbers<[1], [0], [0], [1], [0, 0, 1, 1], [], []>} : vector<16x128xbf16>, vector<128x128xbf16>, vector<16x128xf32> -> vector<16x128xf32>
    %57 = arith.addf %51, %56 : vector<16x128xf32>
    %58 = vector.extract_strided_slice %39 {offsets = [32, 0], sizes = [16, 128], strides = [1, 1]} : vector<128x128xf32> to vector<16x128xf32>
    %59 = arith.truncf %58 : vector<16x128xf32> to vector<16x128xbf16>
    %c2 = arith.constant 2 : index
    %c0_41 = arith.constant 0 : index
    %c0_42 = arith.constant 0 : index
    %60 = vector.load %arg9[%c2, %c0_41, %c0_42] : memref<5x128x128xbf16, #tpu.memory_space<vmem>>, vector<1x128x128xbf16>
    %61 = vector.shape_cast %60 : vector<1x128x128xbf16> to vector<128x128xbf16>
    %cst_43 = arith.constant dense<0.000000e+00> : vector<16x128xf32>
    %62 = tpu.matmul %59, %61, %cst_43 {dimension_numbers = #tpu.dot_dimension_numbers<[1], [0], [0], [1], [0, 0, 1, 1], [], []>} : vector<16x128xbf16>, vector<128x128xbf16>, vector<16x128xf32> -> vector<16x128xf32>
    %63 = arith.addf %57, %62 : vector<16x128xf32>
    %c0_44 = arith.constant 0 : index
    %c0_45 = arith.constant 0 : index
    %c0_46 = arith.constant 0 : index
    %64 = vector.load %arg4[%c0_44, %c0_45, %c0_46] : memref<6x16x1xf32, #tpu.memory_space<vmem>>, vector<1x16x1xf32>
    %65 = vector.shape_cast %64 : vector<1x16x1xf32> to vector<16x1xf32>
    %66 = vector.broadcast %65 : vector<16x1xf32> to vector<16x128xf32>
    %67 = arith.addf %63, %66 : vector<16x128xf32>
    %68 = vector.extract_strided_slice %39 {offsets = [48, 0], sizes = [16, 128], strides = [1, 1]} : vector<128x128xf32> to vector<16x128xf32>
    %69 = arith.truncf %68 : vector<16x128xf32> to vector<16x128xbf16>
    %c3_47 = arith.constant 3 : index
    %c0_48 = arith.constant 0 : index
    %c0_49 = arith.constant 0 : index
    %70 = vector.load %arg9[%c3_47, %c0_48, %c0_49] : memref<5x128x128xbf16, #tpu.memory_space<vmem>>, vector<1x128x128xbf16>
    %71 = vector.shape_cast %70 : vector<1x128x128xbf16> to vector<128x128xbf16>
    %cst_50 = arith.constant dense<0.000000e+00> : vector<16x128xf32>
    %72 = tpu.matmul %69, %71, %cst_50 {dimension_numbers = #tpu.dot_dimension_numbers<[1], [0], [0], [1], [0, 0, 1, 1], [], []>} : vector<16x128xbf16>, vector<128x128xbf16>, vector<16x128xf32> -> vector<16x128xf32>
    %c1_51 = arith.constant 1 : index
    %c0_52 = arith.constant 0 : index
    %c0_53 = arith.constant 0 : index
    %73 = vector.load %arg4[%c1_51, %c0_52, %c0_53] : memref<6x16x1xf32, #tpu.memory_space<vmem>>, vector<1x16x1xf32>
    %74 = vector.shape_cast %73 : vector<1x16x1xf32> to vector<16x1xf32>
    %75 = vector.broadcast %74 : vector<16x1xf32> to vector<16x128xf32>
    %76 = arith.addf %72, %75 : vector<16x128xf32>
    %77 = vector.extract_strided_slice %39 {offsets = [64, 0], sizes = [16, 128], strides = [1, 1]} : vector<128x128xf32> to vector<16x128xf32>
    %78 = arith.truncf %77 : vector<16x128xf32> to vector<16x128xbf16>
    %c4 = arith.constant 4 : index
    %c0_54 = arith.constant 0 : index
    %c0_55 = arith.constant 0 : index
    %79 = vector.load %arg9[%c4, %c0_54, %c0_55] : memref<5x128x128xbf16, #tpu.memory_space<vmem>>, vector<1x128x128xbf16>
    %80 = vector.shape_cast %79 : vector<1x128x128xbf16> to vector<128x128xbf16>
    %cst_56 = arith.constant dense<0.000000e+00> : vector<16x128xf32>
    %81 = tpu.matmul %78, %80, %cst_56 {dimension_numbers = #tpu.dot_dimension_numbers<[1], [0], [0], [1], [0, 0, 1, 1], [], []>} : vector<16x128xbf16>, vector<128x128xbf16>, vector<16x128xf32> -> vector<16x128xf32>
    %c2_57 = arith.constant 2 : index
    %c0_58 = arith.constant 0 : index
    %c0_59 = arith.constant 0 : index
    %82 = vector.load %arg4[%c2_57, %c0_58, %c0_59] : memref<6x16x1xf32, #tpu.memory_space<vmem>>, vector<1x16x1xf32>
    %83 = vector.shape_cast %82 : vector<1x16x1xf32> to vector<16x1xf32>
    %84 = vector.broadcast %83 : vector<16x1xf32> to vector<16x128xf32>
    %85 = arith.addf %81, %84 : vector<16x128xf32>
    %86 = arith.addf %67, %76 : vector<16x128xf32>
    %87 = arith.addf %86, %85 : vector<16x128xf32>
    %cst_60 = arith.constant dense<0.000000e+00> : vector<16xf32>
    %88 = vector.multi_reduction <add>, %87, %cst_60 [1] : vector<16x128xf32> to vector<16xf32>
    %89 = vector.shape_cast %88 : vector<16xf32> to vector<16x1xf32>
    %cst_61 = arith.constant 7.812500e-03 : f32
    %90 = vector.broadcast %cst_61 : f32 to vector<16x1xf32>
    %91 = arith.mulf %89, %90 : vector<16x1xf32>
    %c0_62 = arith.constant 0 : index
    %c0_63 = arith.constant 0 : index
    %92 = vector.load %arg13[%c0_62, %c0_63] : memref<16x8xf32, #tpu.memory_space<vmem>>, vector<16x8xf32>
    %93 = vector.broadcast %91 : vector<16x1xf32> to vector<16x8xf32>
    %94 = arith.mulf %92, %93 : vector<16x8xf32>
    %cst_64 = arith.constant dense<0.000000e+00> : vector<8xf32>
    %95 = vector.multi_reduction <add>, %94, %cst_64 [0] : vector<16x8xf32> to vector<8xf32>
    %96 = vector.shape_cast %95 : vector<8xf32> to vector<1x8xf32>
    %c0_65 = arith.constant 0 : index
    %c0_66 = arith.constant 0 : index
    %97 = vector.load %arg14[%c0_65, %c0_66] : memref<1x8xf32, #tpu.memory_space<vmem>>, vector<1x8xf32>
    %98 = arith.addf %96, %97 : vector<1x8xf32>
    %c0_67 = arith.constant 0 : index
    %c0_68 = arith.constant 0 : index
    %c0_69 = arith.constant 0 : index
    %99 = vector.load %arg15[%c0_67, %c0_68, %c0_69] : memref<3x16x8xf32, #tpu.memory_space<vmem>>, vector<1x16x8xf32>
    %100 = vector.shape_cast %99 : vector<1x16x8xf32> to vector<16x8xf32>
    %101 = vector.broadcast %98 : vector<1x8xf32> to vector<16x8xf32>
    %102 = arith.mulf %100, %101 : vector<16x8xf32>
    %cst_70 = arith.constant dense<0.000000e+00> : vector<16xf32>
    %103 = vector.multi_reduction <add>, %102, %cst_70 [1] : vector<16x8xf32> to vector<16xf32>
    %104 = vector.shape_cast %103 : vector<16xf32> to vector<16x1xf32>
    %c0_71 = arith.constant 0 : index
    %c0_72 = arith.constant 0 : index
    %c0_73 = arith.constant 0 : index
    %105 = vector.load %arg16[%c0_71, %c0_72, %c0_73] : memref<3x16x1xf32, #tpu.memory_space<vmem>>, vector<1x16x1xf32>
    %106 = vector.shape_cast %105 : vector<1x16x1xf32> to vector<16x1xf32>
    %107 = arith.addf %104, %106 : vector<16x1xf32>
    %c1_74 = arith.constant 1 : index
    %c0_75 = arith.constant 0 : index
    %c0_76 = arith.constant 0 : index
    %108 = vector.load %arg15[%c1_74, %c0_75, %c0_76] : memref<3x16x8xf32, #tpu.memory_space<vmem>>, vector<1x16x8xf32>
    %109 = vector.shape_cast %108 : vector<1x16x8xf32> to vector<16x8xf32>
    %110 = vector.broadcast %98 : vector<1x8xf32> to vector<16x8xf32>
    %111 = arith.mulf %109, %110 : vector<16x8xf32>
    %cst_77 = arith.constant dense<0.000000e+00> : vector<16xf32>
    %112 = vector.multi_reduction <add>, %111, %cst_77 [1] : vector<16x8xf32> to vector<16xf32>
    %113 = vector.shape_cast %112 : vector<16xf32> to vector<16x1xf32>
    %c1_78 = arith.constant 1 : index
    %c0_79 = arith.constant 0 : index
    %c0_80 = arith.constant 0 : index
    %114 = vector.load %arg16[%c1_78, %c0_79, %c0_80] : memref<3x16x1xf32, #tpu.memory_space<vmem>>, vector<1x16x1xf32>
    %115 = vector.shape_cast %114 : vector<1x16x1xf32> to vector<16x1xf32>
    %116 = arith.addf %113, %115 : vector<16x1xf32>
    %c2_81 = arith.constant 2 : index
    %c0_82 = arith.constant 0 : index
    %c0_83 = arith.constant 0 : index
    %117 = vector.load %arg15[%c2_81, %c0_82, %c0_83] : memref<3x16x8xf32, #tpu.memory_space<vmem>>, vector<1x16x8xf32>
    %118 = vector.shape_cast %117 : vector<1x16x8xf32> to vector<16x8xf32>
    %119 = vector.broadcast %98 : vector<1x8xf32> to vector<16x8xf32>
    %120 = arith.mulf %118, %119 : vector<16x8xf32>
    %cst_84 = arith.constant dense<0.000000e+00> : vector<16xf32>
    %121 = vector.multi_reduction <add>, %120, %cst_84 [1] : vector<16x8xf32> to vector<16xf32>
    %122 = vector.shape_cast %121 : vector<16xf32> to vector<16x1xf32>
    %c2_85 = arith.constant 2 : index
    %c0_86 = arith.constant 0 : index
    %c0_87 = arith.constant 0 : index
    %123 = vector.load %arg16[%c2_85, %c0_86, %c0_87] : memref<3x16x1xf32, #tpu.memory_space<vmem>>, vector<1x16x1xf32>
    %124 = vector.shape_cast %123 : vector<1x16x1xf32> to vector<16x1xf32>
    %125 = arith.addf %122, %124 : vector<16x1xf32>
    %126 = arith.maximumf %107, %116 : vector<16x1xf32>
    %127 = arith.maximumf %126, %125 : vector<16x1xf32>
    %128 = arith.subf %107, %127 : vector<16x1xf32>
    %129 = math.exp %128 : vector<16x1xf32>
    %130 = arith.subf %116, %127 : vector<16x1xf32>
    %131 = math.exp %130 : vector<16x1xf32>
    %132 = arith.subf %125, %127 : vector<16x1xf32>
    %133 = math.exp %132 : vector<16x1xf32>
    %134 = arith.addf %129, %131 : vector<16x1xf32>
    %135 = arith.addf %134, %133 : vector<16x1xf32>
    %136 = tpu.reciprocal %135 {approx = true} : vector<16x1xf32> -> vector<16x1xf32>
    %137 = arith.mulf %129, %136 : vector<16x1xf32>
    %138 = vector.broadcast %137 : vector<16x1xf32> to vector<16x128xf32>
    %139 = arith.mulf %138, %67 : vector<16x128xf32>
    %140 = arith.mulf %131, %136 : vector<16x1xf32>
    %141 = vector.broadcast %140 : vector<16x1xf32> to vector<16x128xf32>
    %142 = arith.mulf %141, %76 : vector<16x128xf32>
    %143 = arith.addf %139, %142 : vector<16x128xf32>
    %144 = arith.mulf %133, %136 : vector<16x1xf32>
    %145 = vector.broadcast %144 : vector<16x1xf32> to vector<16x128xf32>
    %146 = arith.mulf %145, %85 : vector<16x128xf32>
    %147 = arith.addf %143, %146 : vector<16x128xf32>
    %148 = arith.addf %147, %46 : vector<16x128xf32>
    %c0_88 = arith.constant 0 : index
    %c0_89 = arith.constant 0 : index
    %149 = vector.load %arg17[%c0_88, %c0_89] : memref<16x1xf32, #tpu.memory_space<vmem>>, vector<16x1xf32>
    %150 = vector.broadcast %149 : vector<16x1xf32> to vector<16x128xf32>
    %151 = arith.mulf %148, %150 : vector<16x128xf32>
    %c0_90 = arith.constant 0 : index
    %c0_91 = arith.constant 0 : index
    %152 = vector.load %arg18[%c0_90, %c0_91] : memref<16x1xf32, #tpu.memory_space<vmem>>, vector<16x1xf32>
    %153 = vector.broadcast %152 : vector<16x1xf32> to vector<16x128xf32>
    %154 = arith.addf %151, %153 : vector<16x128xf32>
    %155 = vector.extract_strided_slice %39 {offsets = [96, 0], sizes = [16, 128], strides = [1, 1]} : vector<128x128xf32> to vector<16x128xf32>
    %c4_92 = arith.constant 4 : index
    %c0_93 = arith.constant 0 : index
    %c0_94 = arith.constant 0 : index
    %156 = vector.load %arg4[%c4_92, %c0_93, %c0_94] : memref<6x16x1xf32, #tpu.memory_space<vmem>>, vector<1x16x1xf32>
    %157 = vector.shape_cast %156 : vector<1x16x1xf32> to vector<16x1xf32>
    %158 = vector.broadcast %157 : vector<16x1xf32> to vector<16x128xf32>
    %159 = arith.addf %155, %158 : vector<16x128xf32>
    %160 = vector.extract_strided_slice %39 {offsets = [112, 0], sizes = [16, 128], strides = [1, 1]} : vector<128x128xf32> to vector<16x128xf32>
    %c5 = arith.constant 5 : index
    %c0_95 = arith.constant 0 : index
    %c0_96 = arith.constant 0 : index
    %161 = vector.load %arg4[%c5, %c0_95, %c0_96] : memref<6x16x1xf32, #tpu.memory_space<vmem>>, vector<1x16x1xf32>
    %162 = vector.shape_cast %161 : vector<1x16x1xf32> to vector<16x1xf32>
    %163 = vector.broadcast %162 : vector<16x1xf32> to vector<16x128xf32>
    %164 = arith.addf %160, %163 : vector<16x128xf32>
    %165 = arith.addf %154, %159 : vector<16x128xf32>
    %cst_97 = arith.constant 0.000000e+00 : f32
    %166 = vector.broadcast %cst_97 : f32 to vector<16x128xf32>
    %167 = arith.maximumf %165, %166 : vector<16x128xf32>
    %cst_98 = arith.constant 0.000000e+00 : f32
    %168 = vector.broadcast %cst_98 : f32 to vector<16x128xf32>
    %c64_i32 = arith.constant 64 : i32
    %169 = tpu.dynamic_rotate %167 by %c64_i32 dim 1 : vector<16x128xf32>, i32 -> vector<16x128xf32>
    %c0_99 = arith.constant 0 : index
    %c0_100 = arith.constant 0 : index
    %c0_101 = arith.constant 0 : index
    %170 = vector.load %arg21[%c0_99, %c0_100, %c0_101] : memref<9x1x128xf32, #tpu.memory_space<vmem>>, vector<1x1x128xf32>
    %171 = vector.shape_cast %170 : vector<1x1x128xf32> to vector<1x128xf32>
    %172 = vector.broadcast %171 : vector<1x128xf32> to vector<16x128xf32>
    %173 = arith.mulf %169, %172 : vector<16x128xf32>
    %c0_102 = arith.constant 0 : index
    %c0_103 = arith.constant 0 : index
    %c0_104 = arith.constant 0 : index
    %174 = vector.load %arg19[%c0_102, %c0_103, %c0_104] : memref<9x16x16xbf16, #tpu.memory_space<vmem>>, vector<1x16x16xbf16>
    %175 = vector.shape_cast %174 : vector<1x16x16xbf16> to vector<16x16xbf16>
    %176 = arith.truncf %173 : vector<16x128xf32> to vector<16x128xbf16>
    %cst_105 = arith.constant dense<0.000000e+00> : vector<16x128xf32>
    %177 = tpu.matmul %175, %176, %cst_105 {dimension_numbers = #tpu.dot_dimension_numbers<[1], [0], [0], [1], [0, 0, 1, 1], [], []>} : vector<16x16xbf16>, vector<16x128xbf16>, vector<16x128xf32> -> vector<16x128xf32>
    %178 = arith.addf %168, %177 : vector<16x128xf32>
    %c48_i32 = arith.constant 48 : i32
    %179 = tpu.dynamic_rotate %167 by %c48_i32 dim 1 : vector<16x128xf32>, i32 -> vector<16x128xf32>
    %c1_106 = arith.constant 1 : index
    %c0_107 = arith.constant 0 : index
    %c0_108 = arith.constant 0 : index
    %180 = vector.load %arg21[%c1_106, %c0_107, %c0_108] : memref<9x1x128xf32, #tpu.memory_space<vmem>>, vector<1x1x128xf32>
    %181 = vector.shape_cast %180 : vector<1x1x128xf32> to vector<1x128xf32>
    %182 = vector.broadcast %181 : vector<1x128xf32> to vector<16x128xf32>
    %183 = arith.mulf %179, %182 : vector<16x128xf32>
    %c1_109 = arith.constant 1 : index
    %c0_110 = arith.constant 0 : index
    %c0_111 = arith.constant 0 : index
    %184 = vector.load %arg19[%c1_109, %c0_110, %c0_111] : memref<9x16x16xbf16, #tpu.memory_space<vmem>>, vector<1x16x16xbf16>
    %185 = vector.shape_cast %184 : vector<1x16x16xbf16> to vector<16x16xbf16>
    %186 = arith.truncf %183 : vector<16x128xf32> to vector<16x128xbf16>
    %cst_112 = arith.constant dense<0.000000e+00> : vector<16x128xf32>
    %187 = tpu.matmul %185, %186, %cst_112 {dimension_numbers = #tpu.dot_dimension_numbers<[1], [0], [0], [1], [0, 0, 1, 1], [], []>} : vector<16x16xbf16>, vector<16x128xbf16>, vector<16x128xf32> -> vector<16x128xf32>
    %188 = arith.addf %178, %187 : vector<16x128xf32>
    %c32_i32 = arith.constant 32 : i32
    %189 = tpu.dynamic_rotate %167 by %c32_i32 dim 1 : vector<16x128xf32>, i32 -> vector<16x128xf32>
    %c2_113 = arith.constant 2 : index
    %c0_114 = arith.constant 0 : index
    %c0_115 = arith.constant 0 : index
    %190 = vector.load %arg21[%c2_113, %c0_114, %c0_115] : memref<9x1x128xf32, #tpu.memory_space<vmem>>, vector<1x1x128xf32>
    %191 = vector.shape_cast %190 : vector<1x1x128xf32> to vector<1x128xf32>
    %192 = vector.broadcast %191 : vector<1x128xf32> to vector<16x128xf32>
    %193 = arith.mulf %189, %192 : vector<16x128xf32>
    %c2_116 = arith.constant 2 : index
    %c0_117 = arith.constant 0 : index
    %c0_118 = arith.constant 0 : index
    %194 = vector.load %arg19[%c2_116, %c0_117, %c0_118] : memref<9x16x16xbf16, #tpu.memory_space<vmem>>, vector<1x16x16xbf16>
    %195 = vector.shape_cast %194 : vector<1x16x16xbf16> to vector<16x16xbf16>
    %196 = arith.truncf %193 : vector<16x128xf32> to vector<16x128xbf16>
    %cst_119 = arith.constant dense<0.000000e+00> : vector<16x128xf32>
    %197 = tpu.matmul %195, %196, %cst_119 {dimension_numbers = #tpu.dot_dimension_numbers<[1], [0], [0], [1], [0, 0, 1, 1], [], []>} : vector<16x16xbf16>, vector<16x128xbf16>, vector<16x128xf32> -> vector<16x128xf32>
    %198 = arith.addf %188, %197 : vector<16x128xf32>
    %c16_i32 = arith.constant 16 : i32
    %199 = tpu.dynamic_rotate %167 by %c16_i32 dim 1 : vector<16x128xf32>, i32 -> vector<16x128xf32>
    %c3_120 = arith.constant 3 : index
    %c0_121 = arith.constant 0 : index
    %c0_122 = arith.constant 0 : index
    %200 = vector.load %arg21[%c3_120, %c0_121, %c0_122] : memref<9x1x128xf32, #tpu.memory_space<vmem>>, vector<1x1x128xf32>
    %201 = vector.shape_cast %200 : vector<1x1x128xf32> to vector<1x128xf32>
    %202 = vector.broadcast %201 : vector<1x128xf32> to vector<16x128xf32>
    %203 = arith.mulf %199, %202 : vector<16x128xf32>
    %c3_123 = arith.constant 3 : index
    %c0_124 = arith.constant 0 : index
    %c0_125 = arith.constant 0 : index
    %204 = vector.load %arg19[%c3_123, %c0_124, %c0_125] : memref<9x16x16xbf16, #tpu.memory_space<vmem>>, vector<1x16x16xbf16>
    %205 = vector.shape_cast %204 : vector<1x16x16xbf16> to vector<16x16xbf16>
    %206 = arith.truncf %203 : vector<16x128xf32> to vector<16x128xbf16>
    %cst_126 = arith.constant dense<0.000000e+00> : vector<16x128xf32>
    %207 = tpu.matmul %205, %206, %cst_126 {dimension_numbers = #tpu.dot_dimension_numbers<[1], [0], [0], [1], [0, 0, 1, 1], [], []>} : vector<16x16xbf16>, vector<16x128xbf16>, vector<16x128xf32> -> vector<16x128xf32>
    %208 = arith.addf %198, %207 : vector<16x128xf32>
    %c4_127 = arith.constant 4 : index
    %c0_128 = arith.constant 0 : index
    %c0_129 = arith.constant 0 : index
    %209 = vector.load %arg19[%c4_127, %c0_128, %c0_129] : memref<9x16x16xbf16, #tpu.memory_space<vmem>>, vector<1x16x16xbf16>
    %210 = vector.shape_cast %209 : vector<1x16x16xbf16> to vector<16x16xbf16>
    %211 = arith.truncf %167 : vector<16x128xf32> to vector<16x128xbf16>
    %cst_130 = arith.constant dense<0.000000e+00> : vector<16x128xf32>
    %212 = tpu.matmul %210, %211, %cst_130 {dimension_numbers = #tpu.dot_dimension_numbers<[1], [0], [0], [1], [0, 0, 1, 1], [], []>} : vector<16x16xbf16>, vector<16x128xbf16>, vector<16x128xf32> -> vector<16x128xf32>
    %213 = arith.addf %208, %212 : vector<16x128xf32>
    %c112_i32 = arith.constant 112 : i32
    %214 = tpu.dynamic_rotate %167 by %c112_i32 dim 1 : vector<16x128xf32>, i32 -> vector<16x128xf32>
    %c5_131 = arith.constant 5 : index
    %c0_132 = arith.constant 0 : index
    %c0_133 = arith.constant 0 : index
    %215 = vector.load %arg21[%c5_131, %c0_132, %c0_133] : memref<9x1x128xf32, #tpu.memory_space<vmem>>, vector<1x1x128xf32>
    %216 = vector.shape_cast %215 : vector<1x1x128xf32> to vector<1x128xf32>
    %217 = vector.broadcast %216 : vector<1x128xf32> to vector<16x128xf32>
    %218 = arith.mulf %214, %217 : vector<16x128xf32>
    %c5_134 = arith.constant 5 : index
    %c0_135 = arith.constant 0 : index
    %c0_136 = arith.constant 0 : index
    %219 = vector.load %arg19[%c5_134, %c0_135, %c0_136] : memref<9x16x16xbf16, #tpu.memory_space<vmem>>, vector<1x16x16xbf16>
    %220 = vector.shape_cast %219 : vector<1x16x16xbf16> to vector<16x16xbf16>
    %221 = arith.truncf %218 : vector<16x128xf32> to vector<16x128xbf16>
    %cst_137 = arith.constant dense<0.000000e+00> : vector<16x128xf32>
    %222 = tpu.matmul %220, %221, %cst_137 {dimension_numbers = #tpu.dot_dimension_numbers<[1], [0], [0], [1], [0, 0, 1, 1], [], []>} : vector<16x16xbf16>, vector<16x128xbf16>, vector<16x128xf32> -> vector<16x128xf32>
    %223 = arith.addf %213, %222 : vector<16x128xf32>
    %c96_i32 = arith.constant 96 : i32
    %224 = tpu.dynamic_rotate %167 by %c96_i32 dim 1 : vector<16x128xf32>, i32 -> vector<16x128xf32>
    %c6 = arith.constant 6 : index
    %c0_138 = arith.constant 0 : index
    %c0_139 = arith.constant 0 : index
    %225 = vector.load %arg21[%c6, %c0_138, %c0_139] : memref<9x1x128xf32, #tpu.memory_space<vmem>>, vector<1x1x128xf32>
    %226 = vector.shape_cast %225 : vector<1x1x128xf32> to vector<1x128xf32>
    %227 = vector.broadcast %226 : vector<1x128xf32> to vector<16x128xf32>
    %228 = arith.mulf %224, %227 : vector<16x128xf32>
    %c6_140 = arith.constant 6 : index
    %c0_141 = arith.constant 0 : index
    %c0_142 = arith.constant 0 : index
    %229 = vector.load %arg19[%c6_140, %c0_141, %c0_142] : memref<9x16x16xbf16, #tpu.memory_space<vmem>>, vector<1x16x16xbf16>
    %230 = vector.shape_cast %229 : vector<1x16x16xbf16> to vector<16x16xbf16>
    %231 = arith.truncf %228 : vector<16x128xf32> to vector<16x128xbf16>
    %cst_143 = arith.constant dense<0.000000e+00> : vector<16x128xf32>
    %232 = tpu.matmul %230, %231, %cst_143 {dimension_numbers = #tpu.dot_dimension_numbers<[1], [0], [0], [1], [0, 0, 1, 1], [], []>} : vector<16x16xbf16>, vector<16x128xbf16>, vector<16x128xf32> -> vector<16x128xf32>
    %233 = arith.addf %223, %232 : vector<16x128xf32>
    %c80_i32 = arith.constant 80 : i32
    %234 = tpu.dynamic_rotate %167 by %c80_i32 dim 1 : vector<16x128xf32>, i32 -> vector<16x128xf32>
    %c7 = arith.constant 7 : index
    %c0_144 = arith.constant 0 : index
    %c0_145 = arith.constant 0 : index
    %235 = vector.load %arg21[%c7, %c0_144, %c0_145] : memref<9x1x128xf32, #tpu.memory_space<vmem>>, vector<1x1x128xf32>
    %236 = vector.shape_cast %235 : vector<1x1x128xf32> to vector<1x128xf32>
    %237 = vector.broadcast %236 : vector<1x128xf32> to vector<16x128xf32>
    %238 = arith.mulf %234, %237 : vector<16x128xf32>
    %c7_146 = arith.constant 7 : index
    %c0_147 = arith.constant 0 : index
    %c0_148 = arith.constant 0 : index
    %239 = vector.load %arg19[%c7_146, %c0_147, %c0_148] : memref<9x16x16xbf16, #tpu.memory_space<vmem>>, vector<1x16x16xbf16>
    %240 = vector.shape_cast %239 : vector<1x16x16xbf16> to vector<16x16xbf16>
    %241 = arith.truncf %238 : vector<16x128xf32> to vector<16x128xbf16>
    %cst_149 = arith.constant dense<0.000000e+00> : vector<16x128xf32>
    %242 = tpu.matmul %240, %241, %cst_149 {dimension_numbers = #tpu.dot_dimension_numbers<[1], [0], [0], [1], [0, 0, 1, 1], [], []>} : vector<16x16xbf16>, vector<16x128xbf16>, vector<16x128xf32> -> vector<16x128xf32>
    %243 = arith.addf %233, %242 : vector<16x128xf32>
    %c64_i32_150 = arith.constant 64 : i32
    %244 = tpu.dynamic_rotate %167 by %c64_i32_150 dim 1 : vector<16x128xf32>, i32 -> vector<16x128xf32>
    %c8 = arith.constant 8 : index
    %c0_151 = arith.constant 0 : index
    %c0_152 = arith.constant 0 : index
    %245 = vector.load %arg21[%c8, %c0_151, %c0_152] : memref<9x1x128xf32, #tpu.memory_space<vmem>>, vector<1x1x128xf32>
    %246 = vector.shape_cast %245 : vector<1x1x128xf32> to vector<1x128xf32>
    %247 = vector.broadcast %246 : vector<1x128xf32> to vector<16x128xf32>
    %248 = arith.mulf %244, %247 : vector<16x128xf32>
    %c8_153 = arith.constant 8 : index
    %c0_154 = arith.constant 0 : index
    %c0_155 = arith.constant 0 : index
    %249 = vector.load %arg19[%c8_153, %c0_154, %c0_155] : memref<9x16x16xbf16, #tpu.memory_space<vmem>>, vector<1x16x16xbf16>
    %250 = vector.shape_cast %249 : vector<1x16x16xbf16> to vector<16x16xbf16>
    %251 = arith.truncf %248 : vector<16x128xf32> to vector<16x128xbf16>
    %cst_156 = arith.constant dense<0.000000e+00> : vector<16x128xf32>
    %252 = tpu.matmul %250, %251, %cst_156 {dimension_numbers = #tpu.dot_dimension_numbers<[1], [0], [0], [1], [0, 0, 1, 1], [], []>} : vector<16x16xbf16>, vector<16x128xbf16>, vector<16x128xf32> -> vector<16x128xf32>
    %253 = arith.addf %243, %252 : vector<16x128xf32>
    %c0_157 = arith.constant 0 : index
    %c0_158 = arith.constant 0 : index
    %254 = vector.load %arg20[%c0_157, %c0_158] : memref<16x1xf32, #tpu.memory_space<vmem>>, vector<16x1xf32>
    %255 = vector.broadcast %254 : vector<16x1xf32> to vector<16x128xf32>
    %256 = arith.addf %253, %255 : vector<16x128xf32>
    %257 = arith.addf %256, %164 : vector<16x128xf32>
    %cst_159 = arith.constant 0.000000e+00 : f32
    %258 = vector.broadcast %cst_159 : f32 to vector<16x128xf32>
    %259 = arith.maximumf %257, %258 : vector<16x128xf32>
    %c0_160 = arith.constant 0 : index
    %c0_161 = arith.constant 0 : index
    %c0_162 = arith.constant 0 : index
    %260 = vector.load %arg22[%c0_160, %c0_161, %c0_162] : memref<1x16x128xf32, #tpu.memory_space<vmem>>, vector<1x16x128xf32>
    %261 = vector.shape_cast %260 : vector<1x16x128xf32> to vector<16x128xf32>
    %262 = vector.shape_cast %259 : vector<16x128xf32> to vector<1x16x128xf32>
    tpu.vector_store %arg22[%c0_160, %c0_161, %c0_162], %262 {strides = array<i32>} : memref<1x16x128xf32, #tpu.memory_space<vmem>>, vector<1x16x128xf32>,
    return
  }
  func.func @transform_0(%arg0: i32) -> (i32, i32, i32) {
    %c0_i32 = arith.constant 0 : i32
    %c0_i32_0 = arith.constant 0 : i32
    %c0_i32_1 = arith.constant 0 : i32
    return %arg0, %c0_i32, %c0_i32_0 : i32, i32, i32
  }
  func.func @transform_1(%arg0: i32) -> (i32, i32) {
    %c0_i32 = arith.constant 0 : i32
    %c0_i32_0 = arith.constant 0 : i32
    %c0_i32_1 = arith.constant 0 : i32
    return %c0_i32, %c0_i32_0 : i32, i32
  }
  func.func @transform_2(%arg0: i32) -> (i32, i32) {
    %c0_i32 = arith.constant 0 : i32
    %c0_i32_0 = arith.constant 0 : i32
    %c0_i32_1 = arith.constant 0 : i32
    return %c0_i32, %c0_i32_0 : i32, i32
  }
  func.func @transform_3(%arg0: i32) -> (i32, i32, i32) {
    %c0_i32 = arith.constant 0 : i32
    %c0_i32_0 = arith.constant 0 : i32
    %c0_i32_1 = arith.constant 0 : i32
    %c0_i32_2 = arith.constant 0 : i32
    return %c0_i32, %c0_i32_0, %c0_i32_1 : i32, i32, i32
  }
  func.func @transform_4(%arg0: i32) -> (i32, i32) {
    %c0_i32 = arith.constant 0 : i32
    %c0_i32_0 = arith.constant 0 : i32
    %c0_i32_1 = arith.constant 0 : i32
    return %c0_i32, %c0_i32_0 : i32, i32
  }
  func.func @transform_5(%arg0: i32) -> (i32, i32) {
    %c0_i32 = arith.constant 0 : i32
    %c0_i32_0 = arith.constant 0 : i32
    %c0_i32_1 = arith.constant 0 : i32
    return %c0_i32, %c0_i32_0 : i32, i32
  }
  func.func @transform_6(%arg0: i32) -> (i32, i32) {
    %c0_i32 = arith.constant 0 : i32
    %c0_i32_0 = arith.constant 0 : i32
    %c0_i32_1 = arith.constant 0 : i32
    return %c0_i32, %c0_i32_0 : i32, i32
  }
  func.func @transform_7(%arg0: i32) -> (i32, i32) {
    %c0_i32 = arith.constant 0 : i32
    %c0_i32_0 = arith.constant 0 : i32
    %c0_i32_1 = arith.constant 0 : i32
    return %c0_i32, %c0_i32_0 : i32, i32
  }
  func.func @transform_8(%arg0: i32) -> (i32, i32, i32) {
    %c0_i32 = arith.constant 0 : i32
    %c0_i32_0 = arith.constant 0 : i32
    %c0_i32_1 = arith.constant 0 : i32
    %c0_i32_2 = arith.constant 0 : i32
    return %c0_i32, %c0_i32_0, %c0_i32_1 : i32, i32, i32
  }
  func.func @transform_9(%arg0: i32) -> (i32, i32) {
    %c0_i32 = arith.constant 0 : i32
    %c0_i32_0 = arith.constant 0 : i32
    %c0_i32_1 = arith.constant 0 : i32
    return %c0_i32, %c0_i32_0 : i32, i32
  }
  func.func @transform_10(%arg0: i32) -> (i32, i32) {
    %c0_i32 = arith.constant 0 : i32
    %c0_i32_0 = arith.constant 0 : i32
    %c0_i32_1 = arith.constant 0 : i32
    return %c0_i32, %c0_i32_0 : i32, i32
  }
  func.func @transform_11(%arg0: i32) -> (i32, i32) {
    %c0_i32 = arith.constant 0 : i32
    %c0_i32_0 = arith.constant 0 : i32
    %c0_i32_1 = arith.constant 0 : i32
    return %c0_i32, %c0_i32_0 : i32, i32
  }
  func.func @transform_12(%arg0: i32) -> (i32, i32) {
    %c0_i32 = arith.constant 0 : i32
    %c0_i32_0 = arith.constant 0 : i32
    %c0_i32_1 = arith.constant 0 : i32
    return %c0_i32, %c0_i32_0 : i32, i32
  }
  func.func @transform_13(%arg0: i32) -> (i32, i32) {
    %c0_i32 = arith.constant 0 : i32
    %c0_i32_0 = arith.constant 0 : i32
    %c0_i32_1 = arith.constant 0 : i32
    return %c0_i32, %c0_i32_0 : i32, i32
  }
  func.func @transform_14(%arg0: i32) -> (i32, i32, i32) {
    %c0_i32 = arith.constant 0 : i32
    %c0_i32_0 = arith.constant 0 : i32
    %c0_i32_1 = arith.constant 0 : i32
    %c0_i32_2 = arith.constant 0 : i32
    return %c0_i32, %c0_i32_0, %c0_i32_1 : i32, i32, i32
  }
  func.func @transform_15(%arg0: i32) -> (i32, i32, i32) {
    %c0_i32 = arith.constant 0 : i32
    %c0_i32_0 = arith.constant 0 : i32
    %c0_i32_1 = arith.constant 0 : i32
    %c0_i32_2 = arith.constant 0 : i32
    return %c0_i32, %c0_i32_0, %c0_i32_1 : i32, i32, i32
  }
  func.func @transform_16(%arg0: i32) -> (i32, i32) {
    %c0_i32 = arith.constant 0 : i32
    %c0_i32_0 = arith.constant 0 : i32
    %c0_i32_1 = arith.constant 0 : i32
    return %c0_i32, %c0_i32_0 : i32, i32
  }
  func.func @transform_17(%arg0: i32) -> (i32, i32) {
    %c0_i32 = arith.constant 0 : i32
    %c0_i32_0 = arith.constant 0 : i32
    %c0_i32_1 = arith.constant 0 : i32
    return %c0_i32, %c0_i32_0 : i32, i32
  }
  func.func @transform_18(%arg0: i32) -> (i32, i32, i32) {
    %c0_i32 = arith.constant 0 : i32
    %c0_i32_0 = arith.constant 0 : i32
    %c0_i32_1 = arith.constant 0 : i32
    %c0_i32_2 = arith.constant 0 : i32
    return %c0_i32, %c0_i32_0, %c0_i32_1 : i32, i32, i32
  }
  func.func @transform_19(%arg0: i32) -> (i32, i32) {
    %c0_i32 = arith.constant 0 : i32
    %c0_i32_0 = arith.constant 0 : i32
    %c0_i32_1 = arith.constant 0 : i32
    return %c0_i32, %c0_i32_0 : i32, i32
  }
  func.func @transform_20(%arg0: i32) -> (i32, i32, i32) {
    %c0_i32 = arith.constant 0 : i32
    %c0_i32_0 = arith.constant 0 : i32
    %c0_i32_1 = arith.constant 0 : i32
    %c0_i32_2 = arith.constant 0 : i32
    return %c0_i32, %c0_i32_0, %c0_i32_1 : i32, i32, i32
  }
  func.func @transform_21(%arg0: i32) -> (i32, i32, i32) {
    %c0_i32 = arith.constant 0 : i32
    %c0_i32_0 = arith.constant 0 : i32
    %c0_i32_1 = arith.constant 0 : i32
    return %arg0, %c0_i32, %c0_i32_0 : i32, i32, i32
  }
}

</mosaic_0001>

<llo_original>
// kernel: _lambda_.1
$region0: #{_lambda_.1}
  #allocation0 [shape = 'u32[]', space=smem, size = 0x4, offset = 0x4, fixed_abs, tag = 'smem constant byte address 0x4 - core index']
  #allocation1 [shape = 'u32[144,128]{1,0:T(1,128)}', space=vmem, size = 0x12000, scoped, tag = 'internal scratch']
  %s0 = inlined_call_operand.vmem [shape: f32[2,4,128], index: 0, kind: input, shape index: {}]
  %s1 = inlined_call_operand.vmem [shape: f32[4,128], index: 1, kind: input, shape index: {}]
  %s2 = inlined_call_operand.vmem [shape: f32[128,4], index: 2, kind: input, shape index: {}]
  %s3 = inlined_call_operand.vmem [shape: f32[6,16,1], index: 3, kind: input, shape index: {}]
  %s4 = inlined_call_operand.vmem [shape: f32[4,4], index: 4, kind: input, shape index: {}]
  %s5 = inlined_call_operand.vmem [shape: f32[4,1], index: 5, kind: input, shape index: {}, may-alias: {5,7}]
  %s6 = inlined_call_operand.vmem [shape: f32[4,4], index: 6, kind: input, shape index: {}]
  %s7 = inlined_call_operand.vmem [shape: f32[4,1], index: 7, kind: input, shape index: {}, may-alias: {5,7}]
  %s8 = inlined_call_operand.vmem [shape: bf16[5,128,128], index: 8, kind: input, shape index: {}]
  %s9 = inlined_call_operand.vmem [shape: f32[128,128], index: 9, kind: input, shape index: {}]
  %s10 = inlined_call_operand.vmem [shape: f32[128,16], index: 10, kind: input, shape index: {}]
  %s11 = inlined_call_operand.vmem [shape: f32[16,128], index: 11, kind: input, shape index: {}]
  %s12 = inlined_call_operand.vmem [shape: f32[16,8], index: 12, kind: input, shape index: {}]
  %s13 = inlined_call_operand.vmem [shape: f32[1,8], index: 13, kind: input, shape index: {}]
  %s14 = inlined_call_operand.vmem [shape: f32[3,16,8], index: 14, kind: input, shape index: {}]
  %s15 = inlined_call_operand.vmem [shape: f32[3,16,1], index: 15, kind: input, shape index: {}]
  %s16 = inlined_call_operand.vmem [shape: f32[16,1], index: 16, kind: input, shape index: {}]
  %s17 = inlined_call_operand.vmem [shape: f32[16,1], index: 17, kind: input, shape index: {}, may-alias: {17,19}]
  %s18 = inlined_call_operand.vmem [shape: bf16[9,16,16], index: 18, kind: input, shape index: {}]
  %s19 = inlined_call_operand.vmem [shape: f32[16,1], index: 19, kind: input, shape index: {}, may-alias: {17,19}]
  %s20 = inlined_call_operand.vmem [shape: f32[9,1,128], index: 20, kind: input, shape index: {}]
  %s21 = inlined_call_operand.vmem [shape: f32[2,16,128], index: 21, kind: output, shape index: {}]
  %s22 = sld [smem:[#allocation0]]
  $region117: #{_lambda_.1} parent=0
    _
  %s24 = ssub.s32 1, %s22
  %s25 = scalar_select 0, %s24, %s22
  loop: start=0, step=1, limit=4
  $region2: #{_lambda_.1} parent=0 // loop_pre_header
    _
  $region3: #{_lambda_.1} parent=0 // loop_header
    %s27 = sphi 0, %s31
    %p28 = scmp.ge.s32.totalorder %s27, 4
    %s37 = sphi 0, %s39
    %s40 = sphi 0, %s37
    %s41 = sphi 0, %s40
    %s57 = sphi 0, %s41
    %s61 = sphi 0, %s61
    %s63 = sphi 0, %s61
    %s64 = sphi 0, %s63
    %s78 = sphi 0, %s64
    %s82 = sphi 0, %s82
    %s84 = sphi 0, %s82
    %s85 = sphi 0, %s84
    %s99 = sphi 0, %s85
    %s103 = sphi 0, %s103
    %s105 = sphi 0, %s103
    %s106 = sphi 0, %s105
    %s120 = sphi 0, %s106
    %s124 = sphi 0, %s124
    %s126 = sphi 0, %s124
    %s127 = sphi 0, %s126
    %s141 = sphi 0, %s127
    %s145 = sphi 0, %s145
    %s147 = sphi 0, %s145
    %s148 = sphi 0, %s147
    %s162 = sphi 0, %s148
    %s166 = sphi 0, %s166
    %s168 = sphi 0, %s166
    %s169 = sphi 0, %s168
    %s183 = sphi 0, %s169
    %s187 = sphi 0, %s187
    %s189 = sphi 0, %s187
    %s190 = sphi 0, %s189
    %s204 = sphi 0, %s190
    %s208 = sphi 0, %s208
    %s210 = sphi 0, %s208
    %s211 = sphi 0, %s210
    %s225 = sphi 0, %s211
    %s229 = sphi 0, %s229
    %s231 = sphi 0, %s229
    %s232 = sphi 0, %s231
    %s246 = sphi 0, %s232
    %s250 = sphi 0, %s250
    %s252 = sphi 0, %s250
    %s253 = sphi 0, %s252
    %s267 = sphi 0, %s253
    %s271 = sphi 0, %s271
    %s273 = sphi 0, %s271
    %s274 = sphi 0, %s273
    %s288 = sphi 0, %s274
    %s292 = sphi 0, %s292
    %s294 = sphi 0, %s292
    %s295 = sphi 0, %s294
    %s309 = sphi 0, %s295
    %s313 = sphi 0, %s313
    %s315 = sphi 0, %s313
    %s316 = sphi 0, %s315
    %s330 = sphi 0, %s316
    %s334 = sphi 0, %s334
    %s336 = sphi 0, %s334
    %s337 = sphi 0, %s336
    %s351 = sphi 0, %s337
    %s355 = sphi 0, %s355
    %s357 = sphi 0, %s355
    %s358 = sphi 0, %s357
    %s372 = sphi 0, %s358
    %s376 = sphi 0, %s376
    %s378 = sphi 0, %s376
    %s379 = sphi 0, %s378
    %s393 = sphi 0, %s379
    %s397 = sphi 0, %s397
    %s399 = sphi 0, %s397
    %s400 = sphi 0, %s399
    %s414 = sphi 0, %s400
    %s418 = sphi 0, %s418
    %s420 = sphi 0, %s418
    %s421 = sphi 0, %s420
    %s435 = sphi 0, %s421
    %s439 = sphi 0, %s439
    %s441 = sphi 0, %s439
    %s442 = sphi 0, %s441
    %s456 = sphi 0, %s442
    %s460 = sphi 0, %s460
    %s462 = sphi 0, %s460
    %s463 = sphi 0, %s462
    %s477 = sphi 0, %s463
    %s483 = sphi 0, %s485
    %s486 = sphi 0, %s483
    %s487 = sphi 0, %s486
    %s503 = sphi 0, %s487
  $region4: #{_lambda_.1} parent=0 // loop_header_branch
    %30 = sbr.rel (%p28) target = $region8
  $region5: #{_lambda_.1} parent=0 // loop_body
    %s32 = ssub.s32 %s27, 1
    %s33 = ssub.s32 %s27, 2
    %s34 = sadd.s32 %s27, 1
    %s35 = ssub.s32 %s27, %s34
    %p36 = scmp.eq.s32.totalorder %s35, 0
    %s38 = sadd.s32 %s37, 1
    %s39 = scalar_select %p36, %s37, %s38
    %p42 = pneg %p36
    %p43 = scmp.eq.s32.totalorder %s27, 1
    %p44 = por %p42, %p43
    %p45 = scmp.ne.s32.totalorder %s37, %s40
    %p46 = scmp.eq.s32.totalorder %s27, 0
    %p47 = por %p45, %p46
    %p48 = scmp.ne.s32.totalorder %s37, %s40
    %p49 = scmp.eq.s32.totalorder %s32, 1
    %p50 = por %p48, %p49
    %p51 = scmp.ne.s32.totalorder %s40, %s41
    %p52 = scmp.eq.s32.totalorder %s32, 0
    %p53 = por %p51, %p52
    %p54 = scmp.ne.s32.totalorder %s40, %s41
    %p55 = scmp.eq.s32.totalorder %s33, 1
    %p56 = por %p54, %p55
    %p58 = scmp.ne.s32.totalorder %s41, %s57
    %p59 = scmp.eq.s32.totalorder %s33, 0
    %p60 = por %p58, %p59
    %s62 = sadd.s32 %s61, 1
    %p65 = scmp.eq.s32.totalorder %s27, 1
    %p66 = scmp.ne.s32.totalorder %s61, %s63
    %p67 = scmp.eq.s32.totalorder %s27, 0
    %p68 = por %p66, %p67
    %p69 = scmp.ne.s32.totalorder %s61, %s63
    %p70 = scmp.eq.s32.totalorder %s32, 1
    %p71 = por %p69, %p70
    %p72 = scmp.ne.s32.totalorder %s63, %s64
    %p73 = scmp.eq.s32.totalorder %s32, 0
    %p74 = por %p72, %p73
    %p75 = scmp.ne.s32.totalorder %s63, %s64
    %p76 = scmp.eq.s32.totalorder %s33, 1
    %p77 = por %p75, %p76
    %p79 = scmp.ne.s32.totalorder %s64, %s78
    %p80 = scmp.eq.s32.totalorder %s33, 0
    %p81 = por %p79, %p80
    %s83 = sadd.s32 %s82, 1
    %p86 = scmp.eq.s32.totalorder %s27, 1
    %p87 = scmp.ne.s32.totalorder %s82, %s84
    %p88 = scmp.eq.s32.totalorder %s27, 0
    %p89 = por %p87, %p88
    %p90 = scmp.ne.s32.totalorder %s82, %s84
    %p91 = scmp.eq.s32.totalorder %s32, 1
    %p92 = por %p90, %p91
    %p93 = scmp.ne.s32.totalorder %s84, %s85
    %p94 = scmp.eq.s32.totalorder %s32, 0
    %p95 = por %p93, %p94
    %p96 = scmp.ne.s32.totalorder %s84, %s85
    %p97 = scmp.eq.s32.totalorder %s33, 1
    %p98 = por %p96, %p97
    %p100 = scmp.ne.s32.totalorder %s85, %s99
    %p101 = scmp.eq.s32.totalorder %s33, 0
    %p102 = por %p100, %p101
    %s104 = sadd.s32 %s103, 1
    %p107 = scmp.eq.s32.totalorder %s27, 1
    %p108 = scmp.ne.s32.totalorder %s103, %s105
    %p109 = scmp.eq.s32.totalorder %s27, 0
    %p110 = por %p108, %p109
    %p111 = scmp.ne.s32.totalorder %s103, %s105
    %p112 = scmp.eq.s32.totalorder %s32, 1
    %p113 = por %p111, %p112
    %p114 = scmp.ne.s32.totalorder %s105, %s106
    %p115 = scmp.eq.s32.totalorder %s32, 0
    %p116 = por %p114, %p115
    %p117 = scmp.ne.s32.totalorder %s105, %s106
    %p118 = scmp.eq.s32.totalorder %s33, 1
    %p119 = por %p117, %p118
    %p121 = scmp.ne.s32.totalorder %s106, %s120
    %p122 = scmp.eq.s32.totalorder %s33, 0
    %p123 = por %p121, %p122
    %s125 = sadd.s32 %s124, 1
    %p128 = scmp.eq.s32.totalorder %s27, 1
    %p129 = scmp.ne.s32.totalorder %s124, %s126
    %p130 = scmp.eq.s32.totalorder %s27, 0
    %p131 = por %p129, %p130
    %p132 = scmp.ne.s32.totalorder %s124, %s126
    %p133 = scmp.eq.s32.totalorder %s32, 1
    %p134 = por %p132, %p133
    %p135 = scmp.ne.s32.totalorder %s126, %s127
    %p136 = scmp.eq.s32.totalorder %s32, 0
    %p137 = por %p135, %p136
    %p138 = scmp.ne.s32.totalorder %s126, %s127
    %p139 = scmp.eq.s32.totalorder %s33, 1
    %p140 = por %p138, %p139
    %p142 = scmp.ne.s32.totalorder %s127, %s141
    %p143 = scmp.eq.s32.totalorder %s33, 0
    %p144 = por %p142, %p143
    %s146 = sadd.s32 %s145, 1
    %p149 = scmp.eq.s32.totalorder %s27, 1
    %p150 = scmp.ne.s32.totalorder %s145, %s147
    %p151 = scmp.eq.s32.totalorder %s27, 0
    %p152 = por %p150, %p151
    %p153 = scmp.ne.s32.totalorder %s145, %s147
    %p154 = scmp.eq.s32.totalorder %s32, 1
    %p155 = por %p153, %p154
    %p156 = scmp.ne.s32.totalorder %s147, %s148
    %p157 = scmp.eq.s32.totalorder %s32, 0
    %p158 = por %p156, %p157
    %p159 = scmp.ne.s32.totalorder %s147, %s148
    %p160 = scmp.eq.s32.totalorder %s33, 1
    %p161 = por %p159, %p160
    %p163 = scmp.ne.s32.totalorder %s148, %s162
    %p164 = scmp.eq.s32.totalorder %s33, 0
    %p165 = por %p163, %p164
    %s167 = sadd.s32 %s166, 1
    %p170 = scmp.eq.s32.totalorder %s27, 1
    %p171 = scmp.ne.s32.totalorder %s166, %s168
    %p172 = scmp.eq.s32.totalorder %s27, 0
    %p173 = por %p171, %p172
    %p174 = scmp.ne.s32.totalorder %s166, %s168
    %p175 = scmp.eq.s32.totalorder %s32, 1
    %p176 = por %p174, %p175
    %p177 = scmp.ne.s32.totalorder %s168, %s169
    %p178 = scmp.eq.s32.totalorder %s32, 0
    %p179 = por %p177, %p178
    %p180 = scmp.ne.s32.totalorder %s168, %s169
    %p181 = scmp.eq.s32.totalorder %s33, 1
    %p182 = por %p180, %p181
    %p184 = scmp.ne.s32.totalorder %s169, %s183
    %p185 = scmp.eq.s32.totalorder %s33, 0
    %p186 = por %p184, %p185
    %s188 = sadd.s32 %s187, 1
    %p191 = scmp.eq.s32.totalorder %s27, 1
    %p192 = scmp.ne.s32.totalorder %s187, %s189
    %p193 = scmp.eq.s32.totalorder %s27, 0
    %p194 = por %p192, %p193
    %p195 = scmp.ne.s32.totalorder %s187, %s189
    %p196 = scmp.eq.s32.totalorder %s32, 1
    %p197 = por %p195, %p196
    %p198 = scmp.ne.s32.totalorder %s189, %s190
    %p199 = scmp.eq.s32.totalorder %s32, 0
    %p200 = por %p198, %p199
    %p201 = scmp.ne.s32.totalorder %s189, %s190
    %p202 = scmp.eq.s32.totalorder %s33, 1
    %p203 = por %p201, %p202
    %p205 = scmp.ne.s32.totalorder %s190, %s204
    %p206 = scmp.eq.s32.totalorder %s33, 0
    %p207 = por %p205, %p206
    %s209 = sadd.s32 %s208, 1
    %p212 = scmp.eq.s32.totalorder %s27, 1
    %p213 = scmp.ne.s32.totalorder %s208, %s210
    %p214 = scmp.eq.s32.totalorder %s27, 0
    %p215 = por %p213, %p214
    %p216 = scmp.ne.s32.totalorder %s208, %s210
    %p217 = scmp.eq.s32.totalorder %s32, 1
    %p218 = por %p216, %p217
    %p219 = scmp.ne.s32.totalorder %s210, %s211
    %p220 = scmp.eq.s32.totalorder %s32, 0
    %p221 = por %p219, %p220
    %p222 = scmp.ne.s32.totalorder %s210, %s211
    %p223 = scmp.eq.s32.totalorder %s33, 1
    %p224 = por %p222, %p223
    %p226 = scmp.ne.s32.totalorder %s211, %s225
    %p227 = scmp.eq.s32.totalorder %s33, 0
    %p228 = por %p226, %p227
    %s230 = sadd.s32 %s229, 1
    %p233 = scmp.eq.s32.totalorder %s27, 1
    %p234 = scmp.ne.s32.totalorder %s229, %s231
    %p235 = scmp.eq.s32.totalorder %s27, 0
    %p236 = por %p234, %p235
    %p237 = scmp.ne.s32.totalorder %s229, %s231
    %p238 = scmp.eq.s32.totalorder %s32, 1
    %p239 = por %p237, %p238
    %p240 = scmp.ne.s32.totalorder %s231, %s232
    %p241 = scmp.eq.s32.totalorder %s32, 0
    %p242 = por %p240, %p241
    %p243 = scmp.ne.s32.totalorder %s231, %s232
    %p244 = scmp.eq.s32.totalorder %s33, 1
    %p245 = por %p243, %p244
    %p247 = scmp.ne.s32.totalorder %s232, %s246
    %p248 = scmp.eq.s32.totalorder %s33, 0
    %p249 = por %p247, %p248
    %s251 = sadd.s32 %s250, 1
    %p254 = scmp.eq.s32.totalorder %s27, 1
    %p255 = scmp.ne.s32.totalorder %s250, %s252
    %p256 = scmp.eq.s32.totalorder %s27, 0
    %p257 = por %p255, %p256
    %p258 = scmp.ne.s32.totalorder %s250, %s252
    %p259 = scmp.eq.s32.totalorder %s32, 1
    %p260 = por %p258, %p259
    %p261 = scmp.ne.s32.totalorder %s252, %s253
    %p262 = scmp.eq.s32.totalorder %s32, 0
    %p263 = por %p261, %p262
    %p264 = scmp.ne.s32.totalorder %s252, %s253
    %p265 = scmp.eq.s32.totalorder %s33, 1
    %p266 = por %p264, %p265
    %p268 = scmp.ne.s32.totalorder %s253, %s267
    %p269 = scmp.eq.s32.totalorder %s33, 0
    %p270 = por %p268, %p269
    %s272 = sadd.s32 %s271, 1
    %p275 = scmp.eq.s32.totalorder %s27, 1
    %p276 = scmp.ne.s32.totalorder %s271, %s273
    %p277 = scmp.eq.s32.totalorder %s27, 0
    %p278 = por %p276, %p277
    %p279 = scmp.ne.s32.totalorder %s271, %s273
    %p280 = scmp.eq.s32.totalorder %s32, 1
    %p281 = por %p279, %p280
    %p282 = scmp.ne.s32.totalorder %s273, %s274
    %p283 = scmp.eq.s32.totalorder %s32, 0
    %p284 = por %p282, %p283
    %p285 = scmp.ne.s32.totalorder %s273, %s274
    %p286 = scmp.eq.s32.totalorder %s33, 1
    %p287 = por %p285, %p286
    %p289 = scmp.ne.s32.totalorder %s274, %s288
    %p290 = scmp.eq.s32.totalorder %s33, 0
    %p291 = por %p289, %p290
    %s293 = sadd.s32 %s292, 1
    %p296 = scmp.eq.s32.totalorder %s27, 1
    %p297 = scmp.ne.s32.totalorder %s292, %s294
    %p298 = scmp.eq.s32.totalorder %s27, 0
    %p299 = por %p297, %p298
    %p300 = scmp.ne.s32.totalorder %s292, %s294
    %p301 = scmp.eq.s32.totalorder %s32, 1
    %p302 = por %p300, %p301
    %p303 = scmp.ne.s32.totalorder %s294, %s295
    %p304 = scmp.eq.s32.totalorder %s32, 0
    %p305 = por %p303, %p304
    %p306 = scmp.ne.s32.totalorder %s294, %s295
    %p307 = scmp.eq.s32.totalorder %s33, 1
    %p308 = por %p306, %p307
    %p310 = scmp.ne.s32.totalorder %s295, %s309
    %p311 = scmp.eq.s32.totalorder %s33, 0
    %p312 = por %p310, %p311
    %s314 = sadd.s32 %s313, 1
    %p317 = scmp.eq.s32.totalorder %s27, 1
    %p318 = scmp.ne.s32.totalorder %s313, %s315
    %p319 = scmp.eq.s32.totalorder %s27, 0
    %p320 = por %p318, %p319
    %p321 = scmp.ne.s32.totalorder %s313, %s315
    %p322 = scmp.eq.s32.totalorder %s32, 1
    %p323 = por %p321, %p322
    %p324 = scmp.ne.s32.totalorder %s315, %s316
    %p325 = scmp.eq.s32.totalorder %s32, 0
    %p326 = por %p324, %p325
    %p327 = scmp.ne.s32.totalorder %s315, %s316
    %p328 = scmp.eq.s32.totalorder %s33, 1
    %p329 = por %p327, %p328
    %p331 = scmp.ne.s32.totalorder %s316, %s330
    %p332 = scmp.eq.s32.totalorder %s33, 0
    %p333 = por %p331, %p332
    %s335 = sadd.s32 %s334, 1
    %p338 = scmp.eq.s32.totalorder %s27, 1
    %p339 = scmp.ne.s32.totalorder %s334, %s336
    %p340 = scmp.eq.s32.totalorder %s27, 0
    %p341 = por %p339, %p340
    %p342 = scmp.ne.s32.totalorder %s334, %s336
    %p343 = scmp.eq.s32.totalorder %s32, 1
    %p344 = por %p342, %p343
    %p345 = scmp.ne.s32.totalorder %s336, %s337
    %p346 = scmp.eq.s32.totalorder %s32, 0
    %p347 = por %p345, %p346
    %p348 = scmp.ne.s32.totalorder %s336, %s337
    %p349 = scmp.eq.s32.totalorder %s33, 1
    %p350 = por %p348, %p349
    %p352 = scmp.ne.s32.totalorder %s337, %s351
    %p353 = scmp.eq.s32.totalorder %s33, 0
    %p354 = por %p352, %p353
    %s356 = sadd.s32 %s355, 1
    %p359 = scmp.eq.s32.totalorder %s27, 1
    %p360 = scmp.ne.s32.totalorder %s355, %s357
    %p361 = scmp.eq.s32.totalorder %s27, 0
    %p362 = por %p360, %p361
    %p363 = scmp.ne.s32.totalorder %s355, %s357
    %p364 = scmp.eq.s32.totalorder %s32, 1
    %p365 = por %p363, %p364
    %p366 = scmp.ne.s32.totalorder %s357, %s358
    %p367 = scmp.eq.s32.totalorder %s32, 0
    %p368 = por %p366, %p367
    %p369 = scmp.ne.s32.totalorder %s357, %s358
    %p370 = scmp.eq.s32.totalorder %s33, 1
    %p371 = por %p369, %p370
    %p373 = scmp.ne.s32.totalorder %s358, %s372
    %p374 = scmp.eq.s32.totalorder %s33, 0
    %p375 = por %p373, %p374
    %s377 = sadd.s32 %s376, 1
    %p380 = scmp.eq.s32.totalorder %s27, 1
    %p381 = scmp.ne.s32.totalorder %s376, %s378
    %p382 = scmp.eq.s32.totalorder %s27, 0
    %p383 = por %p381, %p382
    %p384 = scmp.ne.s32.totalorder %s376, %s378
    %p385 = scmp.eq.s32.totalorder %s32, 1
    %p386 = por %p384, %p385
    %p387 = scmp.ne.s32.totalorder %s378, %s379
    %p388 = scmp.eq.s32.totalorder %s32, 0
    %p389 = por %p387, %p388
    %p390 = scmp.ne.s32.totalorder %s378, %s379
    %p391 = scmp.eq.s32.totalorder %s33, 1
    %p392 = por %p390, %p391
    %p394 = scmp.ne.s32.totalorder %s379, %s393
    %p395 = scmp.eq.s32.totalorder %s33, 0
    %p396 = por %p394, %p395
    %s398 = sadd.s32 %s397, 1
    %p401 = scmp.eq.s32.totalorder %s27, 1
    %p402 = scmp.ne.s32.totalorder %s397, %s399
    %p403 = scmp.eq.s32.totalorder %s27, 0
    %p404 = por %p402, %p403
    %p405 = scmp.ne.s32.totalorder %s397, %s399
    %p406 = scmp.eq.s32.totalorder %s32, 1
    %p407 = por %p405, %p406
    %p408 = scmp.ne.s32.totalorder %s399, %s400
    %p409 = scmp.eq.s32.totalorder %s32, 0
    %p410 = por %p408, %p409
    %p411 = scmp.ne.s32.totalorder %s399, %s400
    %p412 = scmp.eq.s32.totalorder %s33, 1
    %p413 = por %p411, %p412
    %p415 = scmp.ne.s32.totalorder %s400, %s414
    %p416 = scmp.eq.s32.totalorder %s33, 0
    %p417 = por %p415, %p416
    %s419 = sadd.s32 %s418, 1
    %p422 = scmp.eq.s32.totalorder %s27, 1
    %p423 = scmp.ne.s32.totalorder %s418, %s420
    %p424 = scmp.eq.s32.totalorder %s27, 0
    %p425 = por %p423, %p424
    %p426 = scmp.ne.s32.totalorder %s418, %s420
    %p427 = scmp.eq.s32.totalorder %s32, 1
    %p428 = por %p426, %p427
    %p429 = scmp.ne.s32.totalorder %s420, %s421
    %p430 = scmp.eq.s32.totalorder %s32, 0
    %p431 = por %p429, %p430
    %p432 = scmp.ne.s32.totalorder %s420, %s421
    %p433 = scmp.eq.s32.totalorder %s33, 1
    %p434 = por %p432, %p433
    %p436 = scmp.ne.s32.totalorder %s421, %s435
    %p437 = scmp.eq.s32.totalorder %s33, 0
    %p438 = por %p436, %p437
    %s440 = sadd.s32 %s439, 1
    %p443 = scmp.eq.s32.totalorder %s27, 1
    %p444 = scmp.ne.s32.totalorder %s439, %s441
    %p445 = scmp.eq.s32.totalorder %s27, 0
    %p446 = por %p444, %p445
    %p447 = scmp.ne.s32.totalorder %s439, %s441
    %p448 = scmp.eq.s32.totalorder %s32, 1
    %p449 = por %p447, %p448
    %p450 = scmp.ne.s32.totalorder %s441, %s442
    %p451 = scmp.eq.s32.totalorder %s32, 0
    %p452 = por %p450, %p451
    %p453 = scmp.ne.s32.totalorder %s441, %s442
    %p454 = scmp.eq.s32.totalorder %s33, 1
    %p455 = por %p453, %p454
    %p457 = scmp.ne.s32.totalorder %s442, %s456
    %p458 = scmp.eq.s32.totalorder %s33, 0
    %p459 = por %p457, %p458
    %s461 = sadd.s32 %s460, 1
    %p464 = scmp.eq.s32.totalorder %s27, 1
    %p465 = scmp.ne.s32.totalorder %s460, %s462
    %p466 = scmp.eq.s32.totalorder %s27, 0
    %p467 = por %p465, %p466
    %p468 = scmp.ne.s32.totalorder %s460, %s462
    %p469 = scmp.eq.s32.totalorder %s32, 1
    %p470 = por %p468, %p469
    %p471 = scmp.ne.s32.totalorder %s462, %s463
    %p472 = scmp.eq.s32.totalorder %s32, 0
    %p473 = por %p471, %p472
    %p474 = scmp.ne.s32.totalorder %s462, %s463
    %p475 = scmp.eq.s32.totalorder %s33, 1
    %p476 = por %p474, %p475
    %p478 = scmp.ne.s32.totalorder %s463, %s477
    %p479 = scmp.eq.s32.totalorder %s33, 0
    %p480 = por %p478, %p479
    %s481 = ssub.s32 %s27, %s34
    %p482 = scmp.eq.s32.totalorder %s481, 0
    %s484 = sadd.s32 %s483, 1
    %s485 = scalar_select %p482, %s483, %s484
    %p488 = pneg %p482
    %p489 = scmp.eq.s32.totalorder %s27, 1
    %p490 = por %p488, %p489
    %p491 = scmp.ne.s32.totalorder %s483, %s486
    %p492 = scmp.eq.s32.totalorder %s27, 0
    %p493 = por %p491, %p492
    %p494 = scmp.ne.s32.totalorder %s483, %s486
    %p495 = scmp.eq.s32.totalorder %s32, 1
    %p496 = por %p494, %p495
    %p497 = scmp.ne.s32.totalorder %s486, %s487
    %p498 = scmp.eq.s32.totalorder %s32, 0
    %p499 = por %p497, %p498
    %p500 = scmp.ne.s32.totalorder %s486, %s487
    %p501 = scmp.eq.s32.totalorder %s33, 1
    %p502 = por %p500, %p501
    %p504 = scmp.ne.s32.totalorder %s487, %s503
    %p505 = scmp.eq.s32.totalorder %s33, 0
    %p506 = por %p504, %p505
    %p507 = scmp.le.s32.totalorder 1, %s27
    %p508 = scmp.lt.s32.totalorder %s27, 3
    %p509 = pnand %p507, %p508
    %p510 = pneg %p509
    // Predicated region
    $region9: #{_lambda_.1} parent=5 // pred_check
      _
    $region10: #{_lambda_.1} parent=5 // pred_check_branch
      %512 = sbr.rel (%p509) target = $region12
    $region11: #{_lambda_.1} parent=5 // pred_region
      %s513 = ssub.s32 %s27, 1
      // Predicated region
      $region13: #{_lambda_.1} parent=11 // pred_check
        %p514 = pneg %p74
      $region14: #{_lambda_.1} parent=11 // pred_check_branch
        %516 = sbr.rel (%p514) target = $region16
      $region15: #{_lambda_.1} parent=11 // pred_region
        _
      $region16: #{_lambda_.1} parent=11 // pred_fallthru
        _
      // Predicated region
      $region17: #{_lambda_.1} parent=11 // pred_check
        %p517 = pneg %p95
      $region18: #{_lambda_.1} parent=11 // pred_check_branch
        %519 = sbr.rel (%p517) target = $region20
      $region19: #{_lambda_.1} parent=11 // pred_region
        _
      $region20: #{_lambda_.1} parent=11 // pred_fallthru
        _
      // Predicated region
      $region21: #{_lambda_.1} parent=11 // pred_check
        %p520 = pneg %p116
      $region22: #{_lambda_.1} parent=11 // pred_check_branch
        %522 = sbr.rel (%p520) target = $region24
      $region23: #{_lambda_.1} parent=11 // pred_region
        _
      $region24: #{_lambda_.1} parent=11 // pred_fallthru
        _
      // Predicated region
      $region25: #{_lambda_.1} parent=11 // pred_check
        %p523 = pneg %p137
      $region26: #{_lambda_.1} parent=11 // pred_check_branch
        %525 = sbr.rel (%p523) target = $region28
      $region27: #{_lambda_.1} parent=11 // pred_region
        _
      $region28: #{_lambda_.1} parent=11 // pred_fallthru
        _
      // Predicated region
      $region29: #{_lambda_.1} parent=11 // pred_check
        %p526 = pneg %p158
      $region30: #{_lambda_.1} parent=11 // pred_check_branch
        %528 = sbr.rel (%p526) target = $region32
      $region31: #{_lambda_.1} parent=11 // pred_region
        _
      $region32: #{_lambda_.1} parent=11 // pred_fallthru
        _
      // Predicated region
      $region33: #{_lambda_.1} parent=11 // pred_check
        %p529 = pneg %p179
      $region34: #{_lambda_.1} parent=11 // pred_check_branch
        %531 = sbr.rel (%p529) target = $region36
      $region35: #{_lambda_.1} parent=11 // pred_region
        _
      $region36: #{_lambda_.1} parent=11 // pred_fallthru
        _
      // Predicated region
      $region37: #{_lambda_.1} parent=11 // pred_check
        %p532 = pneg %p200
      $region38: #{_lambda_.1} parent=11 // pred_check_branch
        %534 = sbr.rel (%p532) target = $region40
      $region39: #{_lambda_.1} parent=11 // pred_region
        _
      $region40: #{_lambda_.1} parent=11 // pred_fallthru
        _
      // Predicated region
      $region41: #{_lambda_.1} parent=11 // pred_check
        %p535 = pneg %p221
      $region42: #{_lambda_.1} parent=11 // pred_check_branch
        %537 = sbr.rel (%p535) target = $region44
      $region43: #{_lambda_.1} parent=11 // pred_region
        _
      $region44: #{_lambda_.1} parent=11 // pred_fallthru
        _
      // Predicated region
      $region45: #{_lambda_.1} parent=11 // pred_check
        %p538 = pneg %p242
      $region46: #{_lambda_.1} parent=11 // pred_check_branch
        %540 = sbr.rel (%p538) target = $region48
      $region47: #{_lambda_.1} parent=11 // pred_region
        _
      $region48: #{_lambda_.1} parent=11 // pred_fallthru
        _
      // Predicated region
      $region49: #{_lambda_.1} parent=11 // pred_check
        %p541 = pneg %p263
      $region50: #{_lambda_.1} parent=11 // pred_check_branch
        %543 = sbr.rel (%p541) target = $region52
      $region51: #{_lambda_.1} parent=11 // pred_region
        _
      $region52: #{_lambda_.1} parent=11 // pred_fallthru
        _
      // Predicated region
      $region53: #{_lambda_.1} parent=11 // pred_check
        %p544 = pneg %p284
      $region54: #{_lambda_.1} parent=11 // pred_check_branch
        %546 = sbr.rel (%p544) target = $region56
      $region55: #{_lambda_.1} parent=11 // pred_region
        _
      $region56: #{_lambda_.1} parent=11 // pred_fallthru
        _
      // Predicated region
      $region57: #{_lambda_.1} parent=11 // pred_check
        %p547 = pneg %p305
      $region58: #{_lambda_.1} parent=11 // pred_check_branch
        %549 = sbr.rel (%p547) target = $region60
      $region59: #{_lambda_.1} parent=11 // pred_region
        _
      $region60: #{_lambda_.1} parent=11 // pred_fallthru
        _
      // Predicated region
      $region61: #{_lambda_.1} parent=11 // pred_check
        %p550 = pneg %p326
      $region62: #{_lambda_.1} parent=11 // pred_check_branch
        %552 = sbr.rel (%p550) target = $region64
      $region63: #{_lambda_.1} parent=11 // pred_region
        _
      $region64: #{_lambda_.1} parent=11 // pred_fallthru
        _
      // Predicated region
      $region65: #{_lambda_.1} parent=11 // pred_check
        %p553 = pneg %p347
      $region66: #{_lambda_.1} parent=11 // pred_check_branch
        %555 = sbr.rel (%p553) target = $region68
      $region67: #{_lambda_.1} parent=11 // pred_region
        _
      $region68: #{_lambda_.1} parent=11 // pred_fallthru
        _
      // Predicated region
      $region69: #{_lambda_.1} parent=11 // pred_check
        %p556 = pneg %p368
      $region70: #{_lambda_.1} parent=11 // pred_check_branch
        %558 = sbr.rel (%p556) target = $region72
      $region71: #{_lambda_.1} parent=11 // pred_region
        _
      $region72: #{_lambda_.1} parent=11 // pred_fallthru
        _
      // Predicated region
      $region73: #{_lambda_.1} parent=11 // pred_check
        %p559 = pneg %p389
      $region74: #{_lambda_.1} parent=11 // pred_check_branch
        %561 = sbr.rel (%p559) target = $region76
      $region75: #{_lambda_.1} parent=11 // pred_region
        _
      $region76: #{_lambda_.1} parent=11 // pred_fallthru
        _
      // Predicated region
      $region77: #{_lambda_.1} parent=11 // pred_check
        %p562 = pneg %p410
      $region78: #{_lambda_.1} parent=11 // pred_check_branch
        %564 = sbr.rel (%p562) target = $region80
      $region79: #{_lambda_.1} parent=11 // pred_region
        _
      $region80: #{_lambda_.1} parent=11 // pred_fallthru
        _
      // Predicated region
      $region81: #{_lambda_.1} parent=11 // pred_check
        %p565 = pneg %p431
      $region82: #{_lambda_.1} parent=11 // pred_check_branch
        %567 = sbr.rel (%p565) target = $region84
      $region83: #{_lambda_.1} parent=11 // pred_region
        _
      $region84: #{_lambda_.1} parent=11 // pred_fallthru
        _
      // Predicated region
      $region85: #{_lambda_.1} parent=11 // pred_check
        %p568 = pneg %p452
      $region86: #{_lambda_.1} parent=11 // pred_check_branch
        %570 = sbr.rel (%p568) target = $region88
      $region87: #{_lambda_.1} parent=11 // pred_region
        _
      $region88: #{_lambda_.1} parent=11 // pred_fallthru
        _
      // Predicated region
      $region89: #{_lambda_.1} parent=11 // pred_check
        %p571 = pneg %p473
      $region90: #{_lambda_.1} parent=11 // pred_check_branch
        %573 = sbr.rel (%p571) target = $region92
      $region91: #{_lambda_.1} parent=11 // pred_region
        _
      $region92: #{_lambda_.1} parent=11 // pred_fallthru
        _
    $region12: #{_lambda_.1} parent=5 // pred_fallthru
      _
    %p574 = scmp.lt.s32.totalorder %s27, 2
    // Predicated region
    $region93: #{_lambda_.1} parent=5 // pred_check
      %p575 = pneg %p574
    $region94: #{_lambda_.1} parent=5 // pred_check_branch
      %577 = sbr.rel (%p575) target = $region96
    $region95: #{_lambda_.1} parent=5 // pred_region
      // Predicated region
      $region97: #{_lambda_.1} parent=95 // pred_check
        %p578 = pneg %p47
      $region98: #{_lambda_.1} parent=95 // pred_check_branch
        %580 = sbr.rel (%p578) target = $region100
      $region99: #{_lambda_.1} parent=95 // pred_region
        %p581 = scmp.lt.s32.totalorder %s27, 1
        %s582 = scalar_select %p581, %s27, 1
        %s583 = smul.addr %s582, 4
        %s584 = scalar_lea.vmem %s0, %s583
      $region100: #{_lambda_.1} parent=95 // pred_fallthru
        _
    $region96: #{_lambda_.1} parent=5 // pred_fallthru
      _
    %p585 = scmp.le.s32.totalorder 1, %s27
    %p586 = scmp.lt.s32.totalorder %s27, 3
    %p587 = pnand %p585, %p586
    %p588 = pneg %p587
    // Predicated region
    $region101: #{_lambda_.1} parent=5 // pred_check
      _
    $region102: #{_lambda_.1} parent=5 // pred_check_branch
      %590 = sbr.rel (%p587) target = $region104
    $region103: #{_lambda_.1} parent=5 // pred_region
      %s591 = ssub.s32 %s27, 1
      %p592 = scmp.lt.s32.totalorder %s32, 1
      %s593 = scalar_select %p592, %s32, 1
      %s594 = smul.addr %s593, 4
      %s595 = scalar_lea.vmem %s0, %s594
      %p596 = pneg %p53
      %p597 = pneg %p50
      %p598 = pneg %p74
      %p599 = pneg %p71
      %p600 = pneg %p95
      %p601 = pneg %p92
      %p602 = pneg %p116
      %p603 = pneg %p113
      %p604 = pneg %p137
      %p605 = pneg %p134
      %p606 = pneg %p158
      %p607 = pneg %p155
      %p608 = pneg %p179
      %p609 = pneg %p176
      %p610 = pneg %p200
      %p611 = pneg %p197
      %p612 = pneg %p221
      %p613 = pneg %p218
      %p614 = pneg %p242
      %p615 = pneg %p239
      %p616 = pneg %p263
      %p617 = pneg %p260
      %p618 = pneg %p284
      %p619 = pneg %p281
      %p620 = pneg %p305
      %p621 = pneg %p302
      %p622 = pneg %p326
      %p623 = pneg %p323
      %p624 = pneg %p347
      %p625 = pneg %p344
      %p626 = pneg %p368
      %p627 = pneg %p365
      %p628 = pneg %p389
      %p629 = pneg %p386
      %p630 = pneg %p410
      %p631 = pneg %p407
      %p632 = pneg %p431
      %p633 = pneg %p428
      %p634 = pneg %p452
      %p635 = pneg %p449
      %p636 = pneg %p473
      %p637 = pneg %p470
      %p638 = pneg %p499
      %p639 = pneg %p496
      %p640 = scmp.lt.s32.totalorder %s32, 1
      %s641 = scalar_select %p640, %s32, 1
      %s642 = smul.addr %s641, 2
      %s643 = smul.addr %s642, 8
      %s644 = scalar_lea.vmem %s21, %s643
      %p645 = scmp.lt.s32.totalorder %s32, 1
      %s646 = scalar_select %p645, %s32, 1
      %s647 = smul.addr %s646, 4
      %s648 = scalar_lea.vmem %s0, %s647
      %p649 = scmp.lt.s32.totalorder %s32, 1
      %s650 = scalar_select %p649, %s32, 1
      %s651 = smul.addr %s650, 2
      %s652 = smul.addr %s651, 8
      %s653 = scalar_lea.vmem %s21, %s652
      %v655 = vld [vmem:[%s9] sm:$0xff]
      %v656 = vld [vmem:[%s9 + $0x8] sm:$0xff]
      %v657 = vld [vmem:[%s9 + $0x10] sm:$0xff]
      %v658 = vld [vmem:[%s9 + $0x18] sm:$0xff]
      %v659 = vld [vmem:[%s9 + $0x20] sm:$0xff]
      %v660 = vld [vmem:[%s9 + $0x28] sm:$0xff]
      %v661 = vld [vmem:[%s9 + $0x30] sm:$0xff]
      %v662 = vld [vmem:[%s9 + $0x38] sm:$0xff]
      %v663 = vld [vmem:[%s9 + $0x40] sm:$0xff]
      %v664 = vld [vmem:[%s9 + $0x48] sm:$0xff]
      %v665 = vld [vmem:[%s9 + $0x50] sm:$0xff]
      %v666 = vld [vmem:[%s9 + $0x58] sm:$0xff]
      %v667 = vld [vmem:[%s9 + $0x60] sm:$0xff]
      %v668 = vld [vmem:[%s9 + $0x68] sm:$0xff]
      %v669 = vld [vmem:[%s9 + $0x70] sm:$0xff]
      %v670 = vld [vmem:[%s9 + $0x78] sm:$0xff]
      %v671 = vld [vmem:[%s648] sm:$0xf]
      %v672 = vld [vmem:[%s1] sm:$0xf]
      %v673 = vadd.f32 %v671, %v672
      %v674 = vld [vmem:[%s4] sm:$0xf]
      %v675 = vld [vmem:[%s5] sm:$0xf]
      %677 = vset.pattern.permute.xlu0 0
      %678 = vperm.xlu0 %677, %v675
      %v679 = vpop.permute.xlu0 %678
      %vm681 = vcmask 31744
      %v683 = vsel %vm681, %v674, 0
      %vm685 = vcmask 1043456
      %v687 = vsel %vm685, %v673, 0
      %689 = vmatprep.subr.mxu0 0.0
      %690 = vmatpush1.msra.mxu0 0.0
      %691 = vmatprep.subr.mxu0 0.0
      %692 = vmatpush1.msra.mxu0 0.0
      %693 = vmatprep.subr.mxu0 0.0
      %694 = vmatpush1.msra.mxu0 0.0
      %695 = vmatprep.subr.mxu0 0.0
      %696 = vmatpush1.msra.mxu0 0.0
      %697 = vmatprep.subr.mxu0 0.0
      %698 = vmatpush1.msra.mxu0 0.0
      %699 = vmatprep.subr.mxu0 0.0
      %700 = vmatpush1.msra.mxu0 0.0
      %701 = vmatprep.subr.mxu0 0.0
      %702 = vmatpush1.msra.mxu0 0.0
      %703 = vmatprep.subr.mxu0 0.0
      %704 = vmatpush1.msra.mxu0 0.0
      %705 = vmatprep.subr.mxu0 0.0
      %706 = vmatpush1.msra.mxu0 0.0
      %707 = vmatprep.subr.mxu0 0.0
      %708 = vmatpush1.msra.mxu0 0.0
      %709 = vmatprep.subr.mxu0 0.0
      %710 = vmatpush1.msra.mxu0 0.0
      %711 = vmatprep.subr.mxu0 0.0
      %712 = vmatpush1.msra.mxu0 0.0
      %713 = vmatprep.subr.mxu0 0.0
      %714 = vmatpush1.msra.mxu0 0.0
      %715 = vmatprep.subr.mxu0 0.0
      %716 = vmatpush1.msra.mxu0 0.0
      %717 = vmatprep.subr.mxu0 0.0
      %718 = vmatpush1.msra.mxu0 0.0
      %719 = vmatprep.subr.mxu0 0.0
      %720 = vmatpush1.msra.mxu0 %v687
      %721 = vmatprep.subr.mxu0 0.0
      %722 = vmatpush2.msra.mxu0 0.0
      %723 = vmatprep.subr.mxu0 0.0
      %724 = vmatpush2.msra.mxu0 0.0
      %725 = vmatprep.subr.mxu0 0.0
      %726 = vmatpush2.msra.mxu0 0.0
      %727 = vmatprep.subr.mxu0 0.0
      %728 = vmatpush2.msra.mxu0 0.0
      %729 = vmatprep.subr.mxu0 0.0
      %730 = vmatpush2.msra.mxu0 0.0
      %731 = vmatprep.subr.mxu0 0.0
      %732 = vmatpush2.msra.mxu0 0.0
      %733 = vmatprep.subr.mxu0 0.0
      %734 = vmatpush2.msra.mxu0 0.0
      %735 = vmatprep.subr.mxu0 0.0
      %736 = vmatpush2.msra.mxu0 0.0
      %737 = vmatprep.subr.mxu0 0.0
      %738 = vmatpush2.msra.mxu0 0.0
      %739 = vmatprep.subr.mxu0 0.0
      %740 = vmatpush2.msra.mxu0 0.0
      %741 = vmatprep.subr.mxu0 0.0
      %742 = vmatpush2.msra.mxu0 0.0
      %743 = vmatprep.subr.mxu0 0.0
      %744 = vmatpush2.msra.mxu0 0.0
      %745 = vmatprep.subr.mxu0 0.0
      %746 = vmatpush2.msra.mxu0 0.0
      %747 = vmatprep.subr.mxu0 0.0
      %748 = vmatpush2.msra.mxu0 0.0
      %749 = vmatprep.subr.mxu0 0.0
      %750 = vmatpush2.msra.mxu0 0.0
      %751 = vmatprep.subr.mxu0 0.0
      %752 = vmatpush2.msra.mxu0 0.0
      %753 = vmatprep.mubr.f32.mxu0 0.0
      %754 = vmatmul.mubr.f32.gmra.mxu0 %v683
      %v755 = vpop.f32.mrf.mxu0
      %v756 = vadd.f32 %v679, %v755
      %v757 = vpop.f32.mrf.mxu0
      %758 = vdwg.mxu0
      %v759 = vld [vmem:[%s6] sm:$0xf]
      %v760 = vld [vmem:[%s7] sm:$0xf]
      %762 = vset.pattern.permute.xlu0 0
      %763 = vperm.xlu0 %762, %v760
      %v764 = vpop.permute.xlu0 %763
      %v767 = vsel %vm681, %v759, 0
      %769 = vmatprep.subr.mxu0 0.0
      %770 = vmatpush1.msra.mxu0 0.0
      %771 = vmatprep.subr.mxu0 0.0
      %772 = vmatpush1.msra.mxu0 0.0
      %773 = vmatprep.subr.mxu0 0.0
      %774 = vmatpush1.msra.mxu0 0.0
      %775 = vmatprep.subr.mxu0 0.0
      %776 = vmatpush1.msra.mxu0 0.0
      %777 = vmatprep.subr.mxu0 0.0
      %778 = vmatpush1.msra.mxu0 0.0
      %779 = vmatprep.subr.mxu0 0.0
      %780 = vmatpush1.msra.mxu0 0.0
      %781 = vmatprep.subr.mxu0 0.0
      %782 = vmatpush1.msra.mxu0 0.0
      %783 = vmatprep.subr.mxu0 0.0
      %784 = vmatpush1.msra.mxu0 0.0
      %785 = vmatprep.subr.mxu0 0.0
      %786 = vmatpush1.msra.mxu0 0.0
      %787 = vmatprep.subr.mxu0 0.0
      %788 = vmatpush1.msra.mxu0 0.0
      %789 = vmatprep.subr.mxu0 0.0
      %790 = vmatpush1.msra.mxu0 0.0
      %791 = vmatprep.subr.mxu0 0.0
      %792 = vmatpush1.msra.mxu0 0.0
      %793 = vmatprep.subr.mxu0 0.0
      %794 = vmatpush1.msra.mxu0 0.0
      %795 = vmatprep.subr.mxu0 0.0
      %796 = vmatpush1.msra.mxu0 0.0
      %797 = vmatprep.subr.mxu0 0.0
      %798 = vmatpush1.msra.mxu0 0.0
      %799 = vmatprep.subr.mxu0 0.0
      %800 = vmatpush1.msra.mxu0 %v687
      %801 = vmatprep.subr.mxu0 0.0
      %802 = vmatpush2.msra.mxu0 0.0
      %803 = vmatprep.subr.mxu0 0.0
      %804 = vmatpush2.msra.mxu0 0.0
      %805 = vmatprep.subr.mxu0 0.0
      %806 = vmatpush2.msra.mxu0 0.0
      %807 = vmatprep.subr.mxu0 0.0
      %808 = vmatpush2.msra.mxu0 0.0
      %809 = vmatprep.subr.mxu0 0.0
      %810 = vmatpush2.msra.mxu0 0.0
      %811 = vmatprep.subr.mxu0 0.0
      %812 = vmatpush2.msra.mxu0 0.0
      %813 = vmatprep.subr.mxu0 0.0
      %814 = vmatpush2.msra.mxu0 0.0
      %815 = vmatprep.subr.mxu0 0.0
      %816 = vmatpush2.msra.mxu0 0.0
      %817 = vmatprep.subr.mxu0 0.0
      %818 = vmatpush2.msra.mxu0 0.0
      %819 = vmatprep.subr.mxu0 0.0
      %820 = vmatpush2.msra.mxu0 0.0
      %821 = vmatprep.subr.mxu0 0.0
      %822 = vmatpush2.msra.mxu0 0.0
      %823 = vmatprep.subr.mxu0 0.0
      %824 = vmatpush2.msra.mxu0 0.0
      %825 = vmatprep.subr.mxu0 0.0
      %826 = vmatpush2.msra.mxu0 0.0
      %827 = vmatprep.subr.mxu0 0.0
      %828 = vmatpush2.msra.mxu0 0.0
      %829 = vmatprep.subr.mxu0 0.0
      %830 = vmatpush2.msra.mxu0 0.0
      %831 = vmatprep.subr.mxu0 0.0
      %832 = vmatpush2.msra.mxu0 0.0
      %833 = vmatprep.mubr.f32.mxu0 0.0
      %834 = vmatmul.mubr.f32.gmra.mxu0 %v767
      %v835 = vpop.f32.mrf.mxu0
      %v836 = vadd.f32 %v764, %v835
      %v837 = vpop.f32.mrf.mxu0
      %838 = vdwg.mxu0
      %839 = vxpose.xlu0.b32.start [1/16] %v756, 128
      %840 = vxpose.xlu0.b32.cont [2/16] 0.0, 128
      %841 = vxpose.xlu0.b32.cont [3/16] 0.0, 128
      %842 = vxpose.xlu0.b32.cont [4/16] 0.0, 128
      %843 = vxpose.xlu0.b32.cont [5/16] 0.0, 128
      %844 = vxpose.xlu0.b32.cont [6/16] 0.0, 128
      %845 = vxpose.xlu0.b32.cont [7/16] 0.0, 128
      %846 = vxpose.xlu0.b32.cont [8/16] 0.0, 128
      %847 = vxpose.xlu0.b32.cont [9/16] 0.0, 128
      %848 = vxpose.xlu0.b32.cont [10/16] 0.0, 128
      %849 = vxpose.xlu0.b32.cont [11/16] 0.0, 128
      %850 = vxpose.xlu0.b32.cont [12/16] 0.0, 128
      %851 = vxpose.xlu0.b32.cont [13/16] 0.0, 128
      %852 = vxpose.xlu0.b32.cont [14/16] 0.0, 128
      %853 = vxpose.xlu0.b32.cont [15/16] 0.0, 128
      %854 = vxpose.xlu0.b32.end [16/16] 0.0, 128
      %v855 = vpop.trf.xlu0
      %v856 = vpop.trf.xlu0
      %v857 = vpop.trf.xlu0
      %v858 = vpop.trf.xlu0
      %v859 = vpop.trf.xlu0
      %v860 = vpop.trf.xlu0
      %v861 = vpop.trf.xlu0
      %v862 = vpop.trf.xlu0
      %v863 = vpop.trf.xlu0
      %v864 = vpop.trf.xlu0
      %v865 = vpop.trf.xlu0
      %v866 = vpop.trf.xlu0
      %v867 = vpop.trf.xlu0
      %v868 = vpop.trf.xlu0
      %v869 = vpop.trf.xlu0
      %v870 = vpop.trf.xlu0
      %v872 = vsel %vm681, %v855, 0
      %v875 = vsel %vm681, %v856, 0
      %v878 = vsel %vm681, %v857, 0
      %v881 = vsel %vm681, %v858, 0
      %v884 = vsel %vm681, %v859, 0
      %v887 = vsel %vm681, %v860, 0
      %v890 = vsel %vm681, %v861, 0
      %v893 = vsel %vm681, %v862, 0
      %v896 = vsel %vm681, %v863, 0
      %v899 = vsel %vm681, %v864, 0
      %v902 = vsel %vm681, %v865, 0
      %v905 = vsel %vm681, %v866, 0
      %v908 = vsel %vm681, %v867, 0
      %v911 = vsel %vm681, %v868, 0
      %v914 = vsel %vm681, %v869, 0
      %v917 = vsel %vm681, %v870, 0
      %v920 = vsel %vm685, %v836, 0
      %922 = vmatprep.subr.mxu0 0.0
      %923 = vmatpush1.msra.mxu0 0.0
      %924 = vmatprep.subr.mxu0 0.0
      %925 = vmatpush1.msra.mxu0 0.0
      %926 = vmatprep.subr.mxu0 0.0
      %927 = vmatpush1.msra.mxu0 0.0
      %928 = vmatprep.subr.mxu0 0.0
      %929 = vmatpush1.msra.mxu0 0.0
      %930 = vmatprep.subr.mxu0 0.0
      %931 = vmatpush1.msra.mxu0 0.0
      %932 = vmatprep.subr.mxu0 0.0
      %933 = vmatpush1.msra.mxu0 0.0
      %934 = vmatprep.subr.mxu0 0.0
      %935 = vmatpush1.msra.mxu0 0.0
      %936 = vmatprep.subr.mxu0 0.0
      %937 = vmatpush1.msra.mxu0 0.0
      %938 = vmatprep.subr.mxu0 0.0
      %939 = vmatpush1.msra.mxu0 0.0
      %940 = vmatprep.subr.mxu0 0.0
      %941 = vmatpush1.msra.mxu0 0.0
      %942 = vmatprep.subr.mxu0 0.0
      %943 = vmatpush1.msra.mxu0 0.0
      %944 = vmatprep.subr.mxu0 0.0
      %945 = vmatpush1.msra.mxu0 0.0
      %946 = vmatprep.subr.mxu0 0.0
      %947 = vmatpush1.msra.mxu0 0.0
      %948 = vmatprep.subr.mxu0 0.0
      %949 = vmatpush1.msra.mxu0 0.0
      %950 = vmatprep.subr.mxu0 0.0
      %951 = vmatpush1.msra.mxu0 0.0
      %952 = vmatprep.subr.mxu0 0.0
      %953 = vmatpush1.msra.mxu0 %v920
      %954 = vmatprep.subr.mxu0 0.0
      %955 = vmatpush2.msra.mxu0 0.0
      %956 = vmatprep.subr.mxu0 0.0
      %957 = vmatpush2.msra.mxu0 0.0
      %958 = vmatprep.subr.mxu0 0.0
      %959 = vmatpush2.msra.mxu0 0.0
      %960 = vmatprep.subr.mxu0 0.0
      %961 = vmatpush2.msra.mxu0 0.0
      %962 = vmatprep.subr.mxu0 0.0
      %963 = vmatpush2.msra.mxu0 0.0
      %964 = vmatprep.subr.mxu0 0.0
      %965 = vmatpush2.msra.mxu0 0.0
      %966 = vmatprep.subr.mxu0 0.0
      %967 = vmatpush2.msra.mxu0 0.0
      %968 = vmatprep.subr.mxu0 0.0
      %969 = vmatpush2.msra.mxu0 0.0
      %970 = vmatprep.subr.mxu0 0.0
      %971 = vmatpush2.msra.mxu0 0.0
      %972 = vmatprep.subr.mxu0 0.0
      %973 = vmatpush2.msra.mxu0 0.0
      %974 = vmatprep.subr.mxu0 0.0
      %975 = vmatpush2.msra.mxu0 0.0
      %976 = vmatprep.subr.mxu0 0.0
      %977 = vmatpush2.msra.mxu0 0.0
      %978 = vmatprep.subr.mxu0 0.0
      %979 = vmatpush2.msra.mxu0 0.0
      %980 = vmatprep.subr.mxu0 0.0
      %981 = vmatpush2.msra.mxu0 0.0
      %982 = vmatprep.subr.mxu0 0.0
      %983 = vmatpush2.msra.mxu0 0.0
      %984 = vmatprep.subr.mxu0 0.0
      %985 = vmatpush2.msra.mxu0 0.0
      %986 = vmatprep.mubr.f32.mxu0 0.0
      %987 = vmatmul.mubr.f32.gmra.mxu0 %v872
      %v988 = vpop.f32.mrf.mxu0
      %v989 = vadd.f32 0.0, %v988
      %v990 = vpop.f32.mrf.mxu0
      %991 = vmatprep.mubr.f32.mxu0 0.0
      %992 = vmatmul.mubr.f32.gmra.mxu0 %v875
      %v993 = vpop.f32.mrf.mxu0
      %v994 = vadd.f32 0.0, %v993
      %v995 = vpop.f32.mrf.mxu0
      %996 = vmatprep.mubr.f32.mxu0 0.0
      %997 = vmatmul.mubr.f32.gmra.mxu0 %v878
      %v998 = vpop.f32.mrf.mxu0
      %v999 = vadd.f32 0.0, %v998
      %v1000 = vpop.f32.mrf.mxu0
      %1001 = vmatprep.mubr.f32.mxu0 0.0
      %1002 = vmatmul.mubr.f32.gmra.mxu0 %v881
      %v1003 = vpop.f32.mrf.mxu0
      %v1004 = vadd.f32 0.0, %v1003
      %v1005 = vpop.f32.mrf.mxu0
      %1006 = vmatprep.mubr.f32.mxu0 0.0
      %1007 = vmatmul.mubr.f32.gmra.mxu0 %v884
      %v1008 = vpop.f32.mrf.mxu0
      %v1009 = vadd.f32 0.0, %v1008
      %v1010 = vpop.f32.mrf.mxu0
      %1011 = vmatprep.mubr.f32.mxu0 0.0
      %1012 = vmatmul.mubr.f32.gmra.mxu0 %v887
      %v1013 = vpop.f32.mrf.mxu0
      %v1014 = vadd.f32 0.0, %v1013
      %v1015 = vpop.f32.mrf.mxu0
      %1016 = vmatprep.mubr.f32.mxu0 0.0
      %1017 = vmatmul.mubr.f32.gmra.mxu0 %v890
      %v1018 = vpop.f32.mrf.mxu0
      %v1019 = vadd.f32 0.0, %v1018
      %v1020 = vpop.f32.mrf.mxu0
      %1021 = vmatprep.mubr.f32.mxu0 0.0
      %1022 = vmatmul.mubr.f32.gmra.mxu0 %v893
      %v1023 = vpop.f32.mrf.mxu0
      %v1024 = vadd.f32 0.0, %v1023
      %v1025 = vpop.f32.mrf.mxu0
      %1026 = vmatprep.mubr.f32.mxu0 0.0
      %1027 = vmatmul.mubr.f32.gmra.mxu0 %v896
      %v1028 = vpop.f32.mrf.mxu0
      %v1029 = vadd.f32 0.0, %v1028
      %v1030 = vpop.f32.mrf.mxu0
      %1031 = vmatprep.mubr.f32.mxu0 0.0
      %1032 = vmatmul.mubr.f32.gmra.mxu0 %v899
      %v1033 = vpop.f32.mrf.mxu0
      %v1034 = vadd.f32 0.0, %v1033
      %v1035 = vpop.f32.mrf.mxu0
      %1036 = vmatprep.mubr.f32.mxu0 0.0
      %1037 = vmatmul.mubr.f32.gmra.mxu0 %v902
      %v1038 = vpop.f32.mrf.mxu0
      %v1039 = vadd.f32 0.0, %v1038
      %v1040 = vpop.f32.mrf.mxu0
      %1041 = vmatprep.mubr.f32.mxu0 0.0
      %1042 = vmatmul.mubr.f32.gmra.mxu0 %v905
      %v1043 = vpop.f32.mrf.mxu0
      %v1044 = vadd.f32 0.0, %v1043
      %v1045 = vpop.f32.mrf.mxu0
      %1046 = vmatprep.mubr.f32.mxu0 0.0
      %1047 = vmatmul.mubr.f32.gmra.mxu0 %v908
      %v1048 = vpop.f32.mrf.mxu0
      %v1049 = vadd.f32 0.0, %v1048
      %v1050 = vpop.f32.mrf.mxu0
      %1051 = vmatprep.mubr.f32.mxu0 0.0
      %1052 = vmatmul.mubr.f32.gmra.mxu0 %v911
      %v1053 = vpop.f32.mrf.mxu0
      %v1054 = vadd.f32 0.0, %v1053
      %v1055 = vpop.f32.mrf.mxu0
      %1056 = vmatprep.mubr.f32.mxu0 0.0
      %1057 = vmatmul.mubr.f32.gmra.mxu0 %v914
      %v1058 = vpop.f32.mrf.mxu0
      %v1059 = vadd.f32 0.0, %v1058
      %v1060 = vpop.f32.mrf.mxu0
      %1061 = vmatprep.mubr.f32.mxu0 0.0
      %1062 = vmatmul.mubr.f32.gmra.mxu0 %v917
      %v1063 = vpop.f32.mrf.mxu0
      %v1064 = vadd.f32 0.0, %v1063
      %v1065 = vpop.f32.mrf.mxu0
      %1066 = vdwg.mxu0
      %v1067 = vmul.f32 %v989, %v655
      %v1068 = vmul.f32 %v994, %v656
      %v1069 = vmul.f32 %v999, %v657
      %v1070 = vmul.f32 %v1004, %v658
      %v1071 = vmul.f32 %v1009, %v659
      %v1072 = vmul.f32 %v1014, %v660
      %v1073 = vmul.f32 %v1019, %v661
      %v1074 = vmul.f32 %v1024, %v662
      %v1075 = vmul.f32 %v1029, %v663
      %v1076 = vmul.f32 %v1034, %v664
      %v1077 = vmul.f32 %v1039, %v665
      %v1078 = vmul.f32 %v1044, %v666
      %v1079 = vmul.f32 %v1049, %v667
      %v1080 = vmul.f32 %v1054, %v668
      %v1081 = vmul.f32 %v1059, %v669
      %v1082 = vmul.f32 %v1064, %v670
      %v1083 = vld [vmem:[%s11] sm:$0xff]
      %v1084 = vld [vmem:[%s11 + $0x8] sm:$0xff]
      %1085 = vmatprep.subr.mxu0 0.0
      %1086 = vmatpush1.msra.mxu0 %v1082
      %1087 = vmatprep.subr.mxu0 0.0
      %1088 = vmatpush1.msra.mxu0 %v1081
      %1089 = vmatprep.subr.mxu0 0.0
      %1090 = vmatpush1.msra.mxu0 %v1080
      %1091 = vmatprep.subr.mxu0 0.0
      %1092 = vmatpush1.msra.mxu0 %v1079
      %1093 = vmatprep.subr.mxu0 0.0
      %1094 = vmatpush1.msra.mxu0 %v1078
      %1095 = vmatprep.subr.mxu0 0.0
      %1096 = vmatpush1.msra.mxu0 %v1077
      %1097 = vmatprep.subr.mxu0 0.0
      %1098 = vmatpush1.msra.mxu0 %v1076
      %1099 = vmatprep.subr.mxu0 0.0
      %1100 = vmatpush1.msra.mxu0 %v1075
      %1101 = vmatprep.subr.mxu0 0.0
      %1102 = vmatpush1.msra.mxu0 %v1074
      %1103 = vmatprep.subr.mxu0 0.0
      %1104 = vmatpush1.msra.mxu0 %v1073
      %1105 = vmatprep.subr.mxu0 0.0
      %1106 = vmatpush1.msra.mxu0 %v1072
      %1107 = vmatprep.subr.mxu0 0.0
      %1108 = vmatpush1.msra.mxu0 %v1071
      %1109 = vmatprep.subr.mxu0 0.0
      %1110 = vmatpush1.msra.mxu0 %v1070
      %1111 = vmatprep.subr.mxu0 0.0
      %1112 = vmatpush1.msra.mxu0 %v1069
      %1113 = vmatprep.subr.mxu0 0.0
      %1114 = vmatpush1.msra.mxu0 %v1068
      %1115 = vmatprep.subr.mxu0 0.0
      %1116 = vmatpush1.msra.mxu0 %v1067
      %1117 = vmatprep.subr.mxu0 0.0
      %1118 = vmatpush2.msra.mxu0 0.0
      %1119 = vmatprep.subr.mxu0 0.0
      %1120 = vmatpush2.msra.mxu0 0.0
      %1121 = vmatprep.subr.mxu0 0.0
      %1122 = vmatpush2.msra.mxu0 0.0
      %1123 = vmatprep.subr.mxu0 0.0
      %1124 = vmatpush2.msra.mxu0 0.0
      %1125 = vmatprep.subr.mxu0 0.0
      %1126 = vmatpush2.msra.mxu0 0.0
      %1127 = vmatprep.subr.mxu0 0.0
      %1128 = vmatpush2.msra.mxu0 0.0
      %1129 = vmatprep.subr.mxu0 0.0
      %1130 = vmatpush2.msra.mxu0 0.0
      %1131 = vmatprep.subr.mxu0 0.0
      %1132 = vmatpush2.msra.mxu0 0.0
      %1133 = vmatprep.subr.mxu0 0.0
      %1134 = vmatpush2.msra.mxu0 0.0
      %1135 = vmatprep.subr.mxu0 0.0
      %1136 = vmatpush2.msra.mxu0 0.0
      %1137 = vmatprep.subr.mxu0 0.0
      %1138 = vmatpush2.msra.mxu0 0.0
      %1139 = vmatprep.subr.mxu0 0.0
      %1140 = vmatpush2.msra.mxu0 0.0
      %1141 = vmatprep.subr.mxu0 0.0
      %1142 = vmatpush2.msra.mxu0 0.0
      %1143 = vmatprep.subr.mxu0 0.0
      %1144 = vmatpush2.msra.mxu0 0.0
      %1145 = vmatprep.subr.mxu0 0.0
      %1146 = vmatpush2.msra.mxu0 0.0
      %1147 = vmatprep.subr.mxu0 0.0
      %1148 = vmatpush2.msra.mxu0 0.0
      %1149 = vmatprep.mubr.f32.mxu0 0.0
      %1150 = vmatmul.mubr.f32.gmra.mxu0 %v1083
      %v1151 = vpop.f32.mrf.mxu0
      %v1152 = vadd.f32 0.0, %v1151
      %v1153 = vpop.f32.mrf.mxu0
      %1154 = vmatprep.mubr.f32.mxu0 0.0
      %1155 = vmatmul.mubr.f32.gmra.mxu0 %v1084
      %v1156 = vpop.f32.mrf.mxu0
      %v1157 = vadd.f32 0.0, %v1156
      %v1158 = vpop.f32.mrf.mxu0
      %1159 = vdwg.mxu0
      %v1160 = vld [vmem:[%s10] sm:$0xff]
      %v1161 = vld [vmem:[%s10 + $0x8] sm:$0xff]
      %v1162 = vld [vmem:[%s10 + $0x10] sm:$0xff]
      %v1163 = vld [vmem:[%s10 + $0x18] sm:$0xff]
      %v1164 = vld [vmem:[%s10 + $0x20] sm:$0xff]
      %v1165 = vld [vmem:[%s10 + $0x28] sm:$0xff]
      %v1166 = vld [vmem:[%s10 + $0x30] sm:$0xff]
      %v1167 = vld [vmem:[%s10 + $0x38] sm:$0xff]
      %v1168 = vld [vmem:[%s10 + $0x40] sm:$0xff]
      %v1169 = vld [vmem:[%s10 + $0x48] sm:$0xff]
      %v1170 = vld [vmem:[%s10 + $0x50] sm:$0xff]
      %v1171 = vld [vmem:[%s10 + $0x58] sm:$0xff]
      %v1172 = vld [vmem:[%s10 + $0x60] sm:$0xff]
      %v1173 = vld [vmem:[%s10 + $0x68] sm:$0xff]
      %v1174 = vld [vmem:[%s10 + $0x70] sm:$0xff]
      %v1175 = vld [vmem:[%s10 + $0x78] sm:$0xff]
      %1176 = vmatprep.subr.mxu0 0.0
      %1177 = vmatpush1.msra.mxu0 %v1175
      %1178 = vmatprep.subr.mxu0 0.0
      %1179 = vmatpush1.msra.mxu0 %v1174
      %1180 = vmatprep.subr.mxu0 0.0
      %1181 = vmatpush1.msra.mxu0 %v1173
      %1182 = vmatprep.subr.mxu0 0.0
      %1183 = vmatpush1.msra.mxu0 %v1172
      %1184 = vmatprep.subr.mxu0 0.0
      %1185 = vmatpush1.msra.mxu0 %v1171
      %1186 = vmatprep.subr.mxu0 0.0
      %1187 = vmatpush1.msra.mxu0 %v1170
      %1188 = vmatprep.subr.mxu0 0.0
      %1189 = vmatpush1.msra.mxu0 %v1169
      %1190 = vmatprep.subr.mxu0 0.0
      %1191 = vmatpush1.msra.mxu0 %v1168
      %1192 = vmatprep.subr.mxu0 0.0
      %1193 = vmatpush1.msra.mxu0 %v1167
      %1194 = vmatprep.subr.mxu0 0.0
      %1195 = vmatpush1.msra.mxu0 %v1166
      %1196 = vmatprep.subr.mxu0 0.0
      %1197 = vmatpush1.msra.mxu0 %v1165
      %1198 = vmatprep.subr.mxu0 0.0
      %1199 = vmatpush1.msra.mxu0 %v1164
      %1200 = vmatprep.subr.mxu0 0.0
      %1201 = vmatpush1.msra.mxu0 %v1163
      %1202 = vmatprep.subr.mxu0 0.0
      %1203 = vmatpush1.msra.mxu0 %v1162
      %1204 = vmatprep.subr.mxu0 0.0
      %1205 = vmatpush1.msra.mxu0 %v1161
      %1206 = vmatprep.subr.mxu0 0.0
      %1207 = vmatpush1.msra.mxu0 %v1160
      %1208 = vmatprep.subr.mxu0 0.0
      %1209 = vmatpush2.msra.mxu0 0.0
      %1210 = vmatprep.subr.mxu0 0.0
      %1211 = vmatpush2.msra.mxu0 0.0
      %1212 = vmatprep.subr.mxu0 0.0
      %1213 = vmatpush2.msra.mxu0 0.0
      %1214 = vmatprep.subr.mxu0 0.0
      %1215 = vmatpush2.msra.mxu0 0.0
      %1216 = vmatprep.subr.mxu0 0.0
      %1217 = vmatpush2.msra.mxu0 0.0
      %1218 = vmatprep.subr.mxu0 0.0
      %1219 = vmatpush2.msra.mxu0 0.0
      %1220 = vmatprep.subr.mxu0 0.0
      %1221 = vmatpush2.msra.mxu0 0.0
      %1222 = vmatprep.subr.mxu0 0.0
      %1223 = vmatpush2.msra.mxu0 0.0
      %1224 = vmatprep.subr.mxu0 0.0
      %1225 = vmatpush2.msra.mxu0 0.0
      %1226 = vmatprep.subr.mxu0 0.0
      %1227 = vmatpush2.msra.mxu0 0.0
      %1228 = vmatprep.subr.mxu0 0.0
      %1229 = vmatpush2.msra.mxu0 0.0
      %1230 = vmatprep.subr.mxu0 0.0
      %1231 = vmatpush2.msra.mxu0 0.0
      %1232 = vmatprep.subr.mxu0 0.0
      %1233 = vmatpush2.msra.mxu0 0.0
      %1234 = vmatprep.subr.mxu0 0.0
      %1235 = vmatpush2.msra.mxu0 0.0
      %1236 = vmatprep.subr.mxu0 0.0
      %1237 = vmatpush2.msra.mxu0 0.0
      %1238 = vmatprep.subr.mxu0 0.0
      %1239 = vmatpush2.msra.mxu0 0.0
      %1240 = vmatprep.mubr.f32.mxu0 0.0
      %1241 = vmatmul.mubr.f32.gmra.mxu0 %v1152
      %v1242 = vpop.f32.mrf.mxu0
      %v1243 = vadd.f32 0.0, %v1242
      %v1244 = vpop.f32.mrf.mxu0
      %1245 = vmatprep.mubr.f32.mxu0 0.0
      %1246 = vmatmul.mubr.f32.gmra.mxu0 %v1157
      %v1247 = vpop.f32.mrf.mxu0
      %v1248 = vadd.f32 0.0, %v1247
      %v1249 = vpop.f32.mrf.mxu0
      %1250 = vdwg.mxu0
      %v1251 = vmul.f32 %v1243, 0.03125
      %v1252 = vmul.f32 %v1248, 0.03125
      %vm1253 = vcmask 130048
      %v1254 = vsel %vm1253, %v1251, -inf
      %v1255 = vsel %vm1253, %v1252, -inf
      %v1256 = vmax.f32 %v1254, %v1255
      %v1257 = vrot.slane %v1256, 4
      %v1258 = vmax.f32 %v1256, %v1257
      %v1259 = vrot.slane %v1258, 2
      %v1260 = vmax.f32 %v1258, %v1259
      %v1261 = vrot.slane %v1260, 1
      %v1262 = vmax.f32 %v1260, %v1261
      %v1263 = vsub.f32 %v1251, %v1262
      %v1264 = vsub.f32 %v1252, %v1262
      %v1265 = vmul.f32 %v1263, 1.442695
      %v1266 = vpow.pop %v1265
      %v1267 = vmul.f32 %v1264, 1.442695
      %v1268 = vpow.pop %v1267
      %v1269 = vsel %vm1253, %v1266, 0.0
      %v1270 = vsel %vm1253, %v1268, 0.0
      %v1271 = vadd.f32 %v1269, %v1270
      %v1272 = vrot.slane %v1271, 4
      %v1273 = vadd.f32 %v1271, %v1272
      %v1274 = vrot.slane %v1273, 2
      %v1275 = vadd.f32 %v1273, %v1274
      %v1276 = vrot.slane %v1275, 1
      %v1277 = vadd.f32 %v1275, %v1276
      %v1278 = vrcp.pop %v1277
      %v1279 = vmul.f32 %v1266, %v1278
      %v1280 = vmul.f32 %v1268, %v1278
      %v1282 = vsel %vm1253, %v1279, 0
      %v1285 = vsel %vm1253, %v1280, 0
      %1287 = vmatprep.subr.mxu0 0.0
      %1288 = vmatpush1.msra.mxu0 0.0
      %1289 = vmatprep.subr.mxu0 0.0
      %1290 = vmatpush1.msra.mxu0 0.0
      %1291 = vmatprep.subr.mxu0 0.0
      %1292 = vmatpush1.msra.mxu0 0.0
      %1293 = vmatprep.subr.mxu0 0.0
      %1294 = vmatpush1.msra.mxu0 0.0
      %1295 = vmatprep.subr.mxu0 0.0
      %1296 = vmatpush1.msra.mxu0 0.0
      %1297 = vmatprep.subr.mxu0 0.0
      %1298 = vmatpush1.msra.mxu0 0.0
      %1299 = vmatprep.subr.mxu0 0.0
      %1300 = vmatpush1.msra.mxu0 0.0
      %1301 = vmatprep.subr.mxu0 0.0
      %1302 = vmatpush1.msra.mxu0 0.0
      %1303 = vmatprep.subr.mxu0 0.0
      %1304 = vmatpush1.msra.mxu0 0.0
      %1305 = vmatprep.subr.mxu0 0.0
      %1306 = vmatpush1.msra.mxu0 0.0
      %1307 = vmatprep.subr.mxu0 0.0
      %1308 = vmatpush1.msra.mxu0 0.0
      %1309 = vmatprep.subr.mxu0 0.0
      %1310 = vmatpush1.msra.mxu0 0.0
      %1311 = vmatprep.subr.mxu0 0.0
      %1312 = vmatpush1.msra.mxu0 0.0
      %1313 = vmatprep.subr.mxu0 0.0
      %1314 = vmatpush1.msra.mxu0 0.0
      %1315 = vmatprep.subr.mxu0 0.0
      %1316 = vmatpush1.msra.mxu0 %v1084
      %1317 = vmatprep.subr.mxu0 0.0
      %1318 = vmatpush1.msra.mxu0 %v1083
      %1319 = vmatprep.subr.mxu0 0.0
      %1320 = vmatpush2.msra.mxu0 0.0
      %1321 = vmatprep.subr.mxu0 0.0
      %1322 = vmatpush2.msra.mxu0 0.0
      %1323 = vmatprep.subr.mxu0 0.0
      %1324 = vmatpush2.msra.mxu0 0.0
      %1325 = vmatprep.subr.mxu0 0.0
      %1326 = vmatpush2.msra.mxu0 0.0
      %1327 = vmatprep.subr.mxu0 0.0
      %1328 = vmatpush2.msra.mxu0 0.0
      %1329 = vmatprep.subr.mxu0 0.0
      %1330 = vmatpush2.msra.mxu0 0.0
      %1331 = vmatprep.subr.mxu0 0.0
      %1332 = vmatpush2.msra.mxu0 0.0
      %1333 = vmatprep.subr.mxu0 0.0
      %1334 = vmatpush2.msra.mxu0 0.0
      %1335 = vmatprep.subr.mxu0 0.0
      %1336 = vmatpush2.msra.mxu0 0.0
      %1337 = vmatprep.subr.mxu0 0.0
      %1338 = vmatpush2.msra.mxu0 0.0
      %1339 = vmatprep.subr.mxu0 0.0
      %1340 = vmatpush2.msra.mxu0 0.0
      %1341 = vmatprep.subr.mxu0 0.0
      %1342 = vmatpush2.msra.mxu0 0.0
      %1343 = vmatprep.subr.mxu0 0.0
      %1344 = vmatpush2.msra.mxu0 0.0
      %1345 = vmatprep.subr.mxu0 0.0
      %1346 = vmatpush2.msra.mxu0 0.0
      %1347 = vmatprep.subr.mxu0 0.0
      %1348 = vmatpush2.msra.mxu0 0.0
      %1349 = vmatprep.subr.mxu0 0.0
      %1350 = vmatpush2.msra.mxu0 0.0
      %1351 = vmatprep.mubr.f32.mxu0 0.0
      %1352 = vmatmul.mubr.f32.gmra.mxu0 %v1282
      %v1353 = vpop.f32.mrf.mxu0
      %v1354 = vadd.f32 0.0, %v1353
      %v1355 = vpop.f32.mrf.mxu0
      %1356 = vmatprep.mubr.f32.mxu0 0.0
      %1357 = vmatmul.mubr.f32.gmra.mxu0 %v1285
      %v1358 = vpop.f32.mrf.mxu0
      %v1359 = vadd.f32 0.0, %v1358
      %v1360 = vpop.f32.mrf.mxu0
      %1361 = vdwg.mxu0
      %v1362 = vmul.f32 %v1354, %v655
      %v1363 = vmul.f32 %v1359, %v656
      %v1364 = vmul.f32 %v1354, %v657
      %v1365 = vmul.f32 %v1359, %v658
      %v1366 = vmul.f32 %v1354, %v659
      %v1367 = vmul.f32 %v1359, %v660
      %v1368 = vmul.f32 %v1354, %v661
      %v1369 = vmul.f32 %v1359, %v662
      %v1370 = vmul.f32 %v1354, %v663
      %v1371 = vmul.f32 %v1359, %v664
      %v1372 = vmul.f32 %v1354, %v665
      %v1373 = vmul.f32 %v1359, %v666
      %v1374 = vmul.f32 %v1354, %v667
      %v1375 = vmul.f32 %v1359, %v668
      %v1376 = vmul.f32 %v1354, %v669
      %v1377 = vmul.f32 %v1359, %v670
      %v1378 = vpack.c.bf16 %v1363, %v1362
      %v1379 = vpack.c.bf16 %v1365, %v1364
      %v1380 = vpack.c.bf16 %v1367, %v1366
      %v1381 = vpack.c.bf16 %v1369, %v1368
      %v1382 = vpack.c.bf16 %v1371, %v1370
      %v1383 = vpack.c.bf16 %v1373, %v1372
      %v1384 = vpack.c.bf16 %v1375, %v1374
      %v1385 = vpack.c.bf16 %v1377, %v1376
      %v1386 = vld [vmem:[%s2] sm:$0xff]
      %v1387 = vld [vmem:[%s2 + $0x8] sm:$0xff]
      %v1388 = vld [vmem:[%s2 + $0x10] sm:$0xff]
      %v1389 = vld [vmem:[%s2 + $0x18] sm:$0xff]
      %v1390 = vld [vmem:[%s2 + $0x20] sm:$0xff]
      %v1391 = vld [vmem:[%s2 + $0x28] sm:$0xff]
      %v1392 = vld [vmem:[%s2 + $0x30] sm:$0xff]
      %v1393 = vld [vmem:[%s2 + $0x38] sm:$0xff]
      %v1394 = vld [vmem:[%s2 + $0x40] sm:$0xff]
      %v1395 = vld [vmem:[%s2 + $0x48] sm:$0xff]
      %v1396 = vld [vmem:[%s2 + $0x50] sm:$0xff]
      %v1397 = vld [vmem:[%s2 + $0x58] sm:$0xff]
      %v1398 = vld [vmem:[%s2 + $0x60] sm:$0xff]
      %v1399 = vld [vmem:[%s2 + $0x68] sm:$0xff]
      %v1400 = vld [vmem:[%s2 + $0x70] sm:$0xff]
      %v1401 = vld [vmem:[%s2 + $0x78] sm:$0xff]
      %v1403 = vsel %vm681, %v1386, 0
      %v1406 = vsel %vm681, %v1387, 0
      %v1409 = vsel %vm681, %v1388, 0
      %v1412 = vsel %vm681, %v1389, 0
      %v1415 = vsel %vm681, %v1390, 0
      %v1418 = vsel %vm681, %v1391, 0
      %v1421 = vsel %vm681, %v1392, 0
      %v1424 = vsel %vm681, %v1393, 0
      %v1427 = vsel %vm681, %v1394, 0
      %v1430 = vsel %vm681, %v1395, 0
      %v1433 = vsel %vm681, %v1396, 0
      %v1436 = vsel %vm681, %v1397, 0
      %v1439 = vsel %vm681, %v1398, 0
      %v1442 = vsel %vm681, %v1399, 0
      %v1445 = vsel %vm681, %v1400, 0
      %v1448 = vsel %vm681, %v1401, 0
      %v1451 = vsel %vm685, %v671, 0
      %1453 = vmatprep.subr.mxu0 0.0
      %1454 = vmatpush1.msra.mxu0 0.0
      %1455 = vmatprep.subr.mxu0 0.0
      %1456 = vmatpush1.msra.mxu0 0.0
      %1457 = vmatprep.subr.mxu0 0.0
      %1458 = vmatpush1.msra.mxu0 0.0
      %1459 = vmatprep.subr.mxu0 0.0
      %1460 = vmatpush1.msra.mxu0 0.0
      %1461 = vmatprep.subr.mxu0 0.0
      %1462 = vmatpush1.msra.mxu0 0.0
      %1463 = vmatprep.subr.mxu0 0.0
      %1464 = vmatpush1.msra.mxu0 0.0
      %1465 = vmatprep.subr.mxu0 0.0
      %1466 = vmatpush1.msra.mxu0 0.0
      %1467 = vmatprep.subr.mxu0 0.0
      %1468 = vmatpush1.msra.mxu0 0.0
      %1469 = vmatprep.subr.mxu0 0.0
      %1470 = vmatpush1.msra.mxu0 0.0
      %1471 = vmatprep.subr.mxu0 0.0
      %1472 = vmatpush1.msra.mxu0 0.0
      %1473 = vmatprep.subr.mxu0 0.0
      %1474 = vmatpush1.msra.mxu0 0.0
      %1475 = vmatprep.subr.mxu0 0.0
      %1476 = vmatpush1.msra.mxu0 0.0
      %1477 = vmatprep.subr.mxu0 0.0
      %1478 = vmatpush1.msra.mxu0 0.0
      %1479 = vmatprep.subr.mxu0 0.0
      %1480 = vmatpush1.msra.mxu0 0.0
      %1481 = vmatprep.subr.mxu0 0.0
      %1482 = vmatpush1.msra.mxu0 0.0
      %1483 = vmatprep.subr.mxu0 0.0
      %1484 = vmatpush1.msra.mxu0 %v1451
      %1485 = vmatprep.subr.mxu0 0.0
      %1486 = vmatpush2.msra.mxu0 0.0
      %1487 = vmatprep.subr.mxu0 0.0
      %1488 = vmatpush2.msra.mxu0 0.0
      %1489 = vmatprep.subr.mxu0 0.0
      %1490 = vmatpush2.msra.mxu0 0.0
      %1491 = vmatprep.subr.mxu0 0.0
      %1492 = vmatpush2.msra.mxu0 0.0
      %1493 = vmatprep.subr.mxu0 0.0
      %1494 = vmatpush2.msra.mxu0 0.0
      %1495 = vmatprep.subr.mxu0 0.0
      %1496 = vmatpush2.msra.mxu0 0.0
      %1497 = vmatprep.subr.mxu0 0.0
      %1498 = vmatpush2.msra.mxu0 0.0
      %1499 = vmatprep.subr.mxu0 0.0
      %1500 = vmatpush2.msra.mxu0 0.0
      %1501 = vmatprep.subr.mxu0 0.0
      %1502 = vmatpush2.msra.mxu0 0.0
      %1503 = vmatprep.subr.mxu0 0.0
      %1504 = vmatpush2.msra.mxu0 0.0
      %1505 = vmatprep.subr.mxu0 0.0
      %1506 = vmatpush2.msra.mxu0 0.0
      %1507 = vmatprep.subr.mxu0 0.0
      %1508 = vmatpush2.msra.mxu0 0.0
      %1509 = vmatprep.subr.mxu0 0.0
      %1510 = vmatpush2.msra.mxu0 0.0
      %1511 = vmatprep.subr.mxu0 0.0
      %1512 = vmatpush2.msra.mxu0 0.0
      %1513 = vmatprep.subr.mxu0 0.0
      %1514 = vmatpush2.msra.mxu0 0.0
      %1515 = vmatprep.subr.mxu0 0.0
      %1516 = vmatpush2.msra.mxu0 0.0
      %1517 = vmatprep.mubr.f32.mxu0 0.0
      %1518 = vmatmul.mubr.f32.gmra.mxu0 %v1403
      %v1519 = vpop.f32.mrf.mxu0
      %v1520 = vadd.f32 0.0, %v1519
      %v1521 = vpop.f32.mrf.mxu0
      %1522 = vmatprep.mubr.f32.mxu0 0.0
      %1523 = vmatmul.mubr.f32.gmra.mxu0 %v1406
      %v1524 = vpop.f32.mrf.mxu0
      %v1525 = vadd.f32 0.0, %v1524
      %v1526 = vpop.f32.mrf.mxu0
      %1527 = vmatprep.mubr.f32.mxu0 0.0
      %1528 = vmatmul.mubr.f32.gmra.mxu0 %v1409
      %v1529 = vpop.f32.mrf.mxu0
      %v1530 = vadd.f32 0.0, %v1529
      %v1531 = vpop.f32.mrf.mxu0
      %1532 = vmatprep.mubr.f32.mxu0 0.0
      %1533 = vmatmul.mubr.f32.gmra.mxu0 %v1412
      %v1534 = vpop.f32.mrf.mxu0
      %v1535 = vadd.f32 0.0, %v1534
      %v1536 = vpop.f32.mrf.mxu0
      %1537 = vmatprep.mubr.f32.mxu0 0.0
      %1538 = vmatmul.mubr.f32.gmra.mxu0 %v1415
      %v1539 = vpop.f32.mrf.mxu0
      %v1540 = vadd.f32 0.0, %v1539
      %v1541 = vpop.f32.mrf.mxu0
      %1542 = vmatprep.mubr.f32.mxu0 0.0
      %1543 = vmatmul.mubr.f32.gmra.mxu0 %v1418
      %v1544 = vpop.f32.mrf.mxu0
      %v1545 = vadd.f32 0.0, %v1544
      %v1546 = vpop.f32.mrf.mxu0
      %1547 = vmatprep.mubr.f32.mxu0 0.0
      %1548 = vmatmul.mubr.f32.gmra.mxu0 %v1421
      %v1549 = vpop.f32.mrf.mxu0
      %v1550 = vadd.f32 0.0, %v1549
      %v1551 = vpop.f32.mrf.mxu0
      %1552 = vmatprep.mubr.f32.mxu0 0.0
      %1553 = vmatmul.mubr.f32.gmra.mxu0 %v1424
      %v1554 = vpop.f32.mrf.mxu0
      %v1555 = vadd.f32 0.0, %v1554
      %v1556 = vpop.f32.mrf.mxu0
      %1557 = vmatprep.mubr.f32.mxu0 0.0
      %1558 = vmatmul.mubr.f32.gmra.mxu0 %v1427
      %v1559 = vpop.f32.mrf.mxu0
      %v1560 = vadd.f32 0.0, %v1559
      %v1561 = vpop.f32.mrf.mxu0
      %1562 = vmatprep.mubr.f32.mxu0 0.0
      %1563 = vmatmul.mubr.f32.gmra.mxu0 %v1430
      %v1564 = vpop.f32.mrf.mxu0
      %v1565 = vadd.f32 0.0, %v1564
      %v1566 = vpop.f32.mrf.mxu0
      %1567 = vmatprep.mubr.f32.mxu0 0.0
      %1568 = vmatmul.mubr.f32.gmra.mxu0 %v1433
      %v1569 = vpop.f32.mrf.mxu0
      %v1570 = vadd.f32 0.0, %v1569
      %v1571 = vpop.f32.mrf.mxu0
      %1572 = vmatprep.mubr.f32.mxu0 0.0
      %1573 = vmatmul.mubr.f32.gmra.mxu0 %v1436
      %v1574 = vpop.f32.mrf.mxu0
      %v1575 = vadd.f32 0.0, %v1574
      %v1576 = vpop.f32.mrf.mxu0
      %1577 = vmatprep.mubr.f32.mxu0 0.0
      %1578 = vmatmul.mubr.f32.gmra.mxu0 %v1439
      %v1579 = vpop.f32.mrf.mxu0
      %v1580 = vadd.f32 0.0, %v1579
      %v1581 = vpop.f32.mrf.mxu0
      %1582 = vmatprep.mubr.f32.mxu0 0.0
      %1583 = vmatmul.mubr.f32.gmra.mxu0 %v1442
      %v1584 = vpop.f32.mrf.mxu0
      %v1585 = vadd.f32 0.0, %v1584
      %v1586 = vpop.f32.mrf.mxu0
      %1587 = vmatprep.mubr.f32.mxu0 0.0
      %1588 = vmatmul.mubr.f32.gmra.mxu0 %v1445
      %v1589 = vpop.f32.mrf.mxu0
      %v1590 = vadd.f32 0.0, %v1589
      %v1591 = vpop.f32.mrf.mxu0
      %1592 = vmatprep.mubr.f32.mxu0 0.0
      %1593 = vmatmul.mubr.f32.gmra.mxu0 %v1448
      %v1594 = vpop.f32.mrf.mxu0
      %v1595 = vadd.f32 0.0, %v1594
      %v1596 = vpop.f32.mrf.mxu0
      %1597 = vdwg.mxu0
      %v1598 = vpack.c.bf16 %v1575, %v1570
      %s1599 = scalar_lea.vmem %s3, 48
      %v1600 = vld [vmem:[%s1599] sm:$0xff]
      %v1601 = vld [vmem:[%s1599 + $0x8] sm:$0xff]
      %1603 = vset.pattern.permute.xlu0 0
      %1604 = vperm.xlu0 %1603, %v1600
      %v1605 = vpop.permute.xlu0 %1604
      %1608 = vset.pattern.permute.xlu0 0
      %1609 = vperm.xlu0 %1608, %v1601
      %v1610 = vpop.permute.xlu0 %1609
      %1612 = vmatprep.subr.bf16.mxu0 0
      %1613 = vmatpush1.bf16.msra.mxu0 %v1385
      %1614 = vmatprep.subr.bf16.mxu0 0
      %1615 = vmatpush1.bf16.msra.mxu0 %v1384
      %1616 = vmatprep.subr.bf16.mxu0 0
      %1617 = vmatpush1.bf16.msra.mxu0 %v1383
      %1618 = vmatprep.subr.bf16.mxu0 0
      %1619 = vmatpush1.bf16.msra.mxu0 %v1382
      %1620 = vmatprep.subr.bf16.mxu0 0
      %1621 = vmatpush1.bf16.msra.mxu0 %v1381
      %1622 = vmatprep.subr.bf16.mxu0 0
      %1623 = vmatpush1.bf16.msra.mxu0 %v1380
      %1624 = vmatprep.subr.bf16.mxu0 0
      %1625 = vmatpush1.bf16.msra.mxu0 %v1379
      %1626 = vmatprep.subr.bf16.mxu0 0
      %1627 = vmatpush1.bf16.msra.mxu0 %v1378
      %1628 = vmatprep.subr.bf16.mxu0 0
      %1629 = vmatpush2.bf16.msra.mxu0 0
      %1630 = vmatprep.subr.bf16.mxu0 0
      %1631 = vmatpush2.bf16.msra.mxu0 0
      %1632 = vmatprep.subr.bf16.mxu0 0
      %1633 = vmatpush2.bf16.msra.mxu0 0
      %1634 = vmatprep.subr.bf16.mxu0 0
      %1635 = vmatpush2.bf16.msra.mxu0 0
      %1636 = vmatprep.subr.bf16.mxu0 0
      %1637 = vmatpush2.bf16.msra.mxu0 0
      %1638 = vmatprep.subr.bf16.mxu0 0
      %1639 = vmatpush2.bf16.msra.mxu0 0
      %1640 = vmatprep.subr.bf16.mxu0 0
      %1641 = vmatpush2.bf16.msra.mxu0 0
      %1642 = vmatprep.subr.bf16.mxu0 0
      %1643 = vmatpush2.bf16.msra.mxu0 0
      %1644 = vmatprep.mubr.bf16.mxu0 0
      %1645 = vmatmul.mubr.bf16.gmra.mxu0 %v1598
      %v1646 = vpop.f32.mrf.mxu0
      %v1647 = vadd.f32 %v1605, %v1646
      %v1648 = vpop.f32.mrf.mxu0
      %v1649 = vpop.f32.mrf.mxu0
      %v1650 = vadd.f32 %v1610, %v1649
      %v1651 = vpop.f32.mrf.mxu0
      %1652 = vdwg.mxu0
      %v1653 = vpack.c.bf16 %v1525, %v1520
      %v1654 = vld [vmem:[%s8] sm:$0xf]
      %v1655 = vld [vmem:[%s8 + $0x4] sm:$0xf]
      %v1656 = vld [vmem:[%s8 + $0x8] sm:$0xf]
      %v1657 = vld [vmem:[%s8 + $0xc] sm:$0xf]
      %v1658 = vld [vmem:[%s8 + $0x10] sm:$0xf]
      %v1659 = vld [vmem:[%s8 + $0x14] sm:$0xf]
      %v1660 = vld [vmem:[%s8 + $0x18] sm:$0xf]
      %v1661 = vld [vmem:[%s8 + $0x1c] sm:$0xf]
      %v1662 = vld [vmem:[%s8 + $0x20] sm:$0xf]
      %v1663 = vld [vmem:[%s8 + $0x24] sm:$0xf]
      %v1664 = vld [vmem:[%s8 + $0x28] sm:$0xf]
      %v1665 = vld [vmem:[%s8 + $0x2c] sm:$0xf]
      %v1666 = vld [vmem:[%s8 + $0x30] sm:$0xf]
      %v1667 = vld [vmem:[%s8 + $0x34] sm:$0xf]
      %v1668 = vld [vmem:[%s8 + $0x38] sm:$0xf]
      %v1669 = vld [vmem:[%s8 + $0x3c] sm:$0xf]
      %v1670 = vpack.c.bf16 %v1535, %v1530
      %s1671 = scalar_lea.vmem %s8, 64
      %v1672 = vld [vmem:[%s1671] sm:$0xf]
      %v1673 = vld [vmem:[%s1671 + $0x4] sm:$0xf]
      %v1674 = vld [vmem:[%s1671 + $0x8] sm:$0xf]
      %v1675 = vld [vmem:[%s1671 + $0xc] sm:$0xf]
      %v1676 = vld [vmem:[%s1671 + $0x10] sm:$0xf]
      %v1677 = vld [vmem:[%s1671 + $0x14] sm:$0xf]
      %v1678 = vld [vmem:[%s1671 + $0x18] sm:$0xf]
      %v1679 = vld [vmem:[%s1671 + $0x1c] sm:$0xf]
      %v1680 = vld [vmem:[%s1671 + $0x20] sm:$0xf]
      %v1681 = vld [vmem:[%s1671 + $0x24] sm:$0xf]
      %v1682 = vld [vmem:[%s1671 + $0x28] sm:$0xf]
      %v1683 = vld [vmem:[%s1671 + $0x2c] sm:$0xf]
      %v1684 = vld [vmem:[%s1671 + $0x30] sm:$0xf]
      %v1685 = vld [vmem:[%s1671 + $0x34] sm:$0xf]
      %v1686 = vld [vmem:[%s1671 + $0x38] sm:$0xf]
      %v1687 = vld [vmem:[%s1671 + $0x3c] sm:$0xf]
      %v1704 = vunpack.c.l.b16 %v1672
      %v1705 = vunpack.c.l.b16 %v1673
      %v1706 = vunpack.c.l.b16 %v1674
      %v1707 = vunpack.c.l.b16 %v1675
      %v1708 = vunpack.c.l.b16 %v1676
      %v1709 = vunpack.c.l.b16 %v1677
      %v1710 = vunpack.c.l.b16 %v1678
      %v1711 = vunpack.c.l.b16 %v1679
      %v1712 = vunpack.c.l.b16 %v1680
      %v1713 = vunpack.c.l.b16 %v1681
      %v1714 = vunpack.c.l.b16 %v1682
      %v1715 = vunpack.c.l.b16 %v1683
      %v1716 = vunpack.c.l.b16 %v1684
      %v1717 = vunpack.c.l.b16 %v1685
      %v1718 = vunpack.c.l.b16 %v1686
      %v1719 = vunpack.c.l.b16 %v1687
      %v1720 = vpack.c.b16 %v1705, %v1704
      %v1721 = vpack.c.b16 %v1707, %v1706
      %v1722 = vpack.c.b16 %v1709, %v1708
      %v1723 = vpack.c.b16 %v1711, %v1710
      %v1724 = vpack.c.b16 %v1713, %v1712
      %v1725 = vpack.c.b16 %v1715, %v1714
      %v1726 = vpack.c.b16 %v1717, %v1716
      %v1727 = vpack.c.b16 %v1719, %v1718
      %1736 = vmatprep.subr.bf16.mxu0 0
      %1737 = vmatpush1.bf16.msra.mxu0 %v1727
      %1738 = vmatprep.subr.bf16.mxu0 0
      %1739 = vmatpush1.bf16.msra.mxu0 %v1726
      %1740 = vmatprep.subr.bf16.mxu0 0
      %1741 = vmatpush1.bf16.msra.mxu0 %v1725
      %1742 = vmatprep.subr.bf16.mxu0 0
      %1743 = vmatpush1.bf16.msra.mxu0 %v1724
      %1744 = vmatprep.subr.bf16.mxu0 0
      %1745 = vmatpush1.bf16.msra.mxu0 %v1723
      %1746 = vmatprep.subr.bf16.mxu0 0
      %1747 = vmatpush1.bf16.msra.mxu0 %v1722
      %1748 = vmatprep.subr.bf16.mxu0 0
      %1749 = vmatpush1.bf16.msra.mxu0 %v1721
      %1750 = vmatprep.subr.bf16.mxu0 0
      %1751 = vmatpush1.bf16.msra.mxu0 %v1720
      %1752 = vmatprep.subr.bf16.mxu0 0
      %1753 = vmatpush2.bf16.msra.mxu0 0
      %1754 = vmatprep.subr.bf16.mxu0 0
      %1755 = vmatpush2.bf16.msra.mxu0 0
      %1756 = vmatprep.subr.bf16.mxu0 0
      %1757 = vmatpush2.bf16.msra.mxu0 0
      %1758 = vmatprep.subr.bf16.mxu0 0
      %1759 = vmatpush2.bf16.msra.mxu0 0
      %1760 = vmatprep.subr.bf16.mxu0 0
      %1761 = vmatpush2.bf16.msra.mxu0 0
      %1762 = vmatprep.subr.bf16.mxu0 0
      %1763 = vmatpush2.bf16.msra.mxu0 0
      %1764 = vmatprep.subr.bf16.mxu0 0
      %1765 = vmatpush2.bf16.msra.mxu0 0
      %1766 = vmatprep.subr.bf16.mxu0 0
      %1767 = vmatpush2.bf16.msra.mxu0 0
      %1768 = vmatprep.mubr.bf16.mxu0 0
      %1769 = vmatmul.mubr.bf16.gmra.mxu0 %v1670
      %v1770 = vpop.f32.mrf.mxu0
      %v1771 = vadd.f32 0.0, %v1770
      %v1772 = vpop.f32.mrf.mxu0
      %v1773 = vpop.f32.mrf.mxu0
      %v1774 = vadd.f32 0.0, %v1773
      %v1775 = vpop.f32.mrf.mxu0
      %1776 = vdwg.mxu0
      %v1793 = vunpack.c.l.b16 %v1654
      %v1794 = vunpack.c.l.b16 %v1655
      %v1795 = vunpack.c.l.b16 %v1656
      %v1796 = vunpack.c.l.b16 %v1657
      %v1797 = vunpack.c.l.b16 %v1658
      %v1798 = vunpack.c.l.b16 %v1659
      %v1799 = vunpack.c.l.b16 %v1660
      %v1800 = vunpack.c.l.b16 %v1661
      %v1801 = vunpack.c.l.b16 %v1662
      %v1802 = vunpack.c.l.b16 %v1663
      %v1803 = vunpack.c.l.b16 %v1664
      %v1804 = vunpack.c.l.b16 %v1665
      %v1805 = vunpack.c.l.b16 %v1666
      %v1806 = vunpack.c.l.b16 %v1667
      %v1807 = vunpack.c.l.b16 %v1668
      %v1808 = vunpack.c.l.b16 %v1669
      %v1809 = vpack.c.b16 %v1794, %v1793
      %v1810 = vpack.c.b16 %v1796, %v1795
      %v1811 = vpack.c.b16 %v1798, %v1797
      %v1812 = vpack.c.b16 %v1800, %v1799
      %v1813 = vpack.c.b16 %v1802, %v1801
      %v1814 = vpack.c.b16 %v1804, %v1803
      %v1815 = vpack.c.b16 %v1806, %v1805
      %v1816 = vpack.c.b16 %v1808, %v1807
      %1825 = vmatprep.subr.bf16.mxu0 0
      %1826 = vmatpush1.bf16.msra.mxu0 %v1816
      %1827 = vmatprep.subr.bf16.mxu0 0
      %1828 = vmatpush1.bf16.msra.mxu0 %v1815
      %1829 = vmatprep.subr.bf16.mxu0 0
      %1830 = vmatpush1.bf16.msra.mxu0 %v1814
      %1831 = vmatprep.subr.bf16.mxu0 0
      %1832 = vmatpush1.bf16.msra.mxu0 %v1813
      %1833 = vmatprep.subr.bf16.mxu0 0
      %1834 = vmatpush1.bf16.msra.mxu0 %v1812
      %1835 = vmatprep.subr.bf16.mxu0 0
      %1836 = vmatpush1.bf16.msra.mxu0 %v1811
      %1837 = vmatprep.subr.bf16.mxu0 0
      %1838 = vmatpush1.bf16.msra.mxu0 %v1810
      %1839 = vmatprep.subr.bf16.mxu0 0
      %1840 = vmatpush1.bf16.msra.mxu0 %v1809
      %1841 = vmatprep.subr.bf16.mxu0 0
      %1842 = vmatpush2.bf16.msra.mxu0 0
      %1843 = vmatprep.subr.bf16.mxu0 0
      %1844 = vmatpush2.bf16.msra.mxu0 0
      %1845 = vmatprep.subr.bf16.mxu0 0
      %1846 = vmatpush2.bf16.msra.mxu0 0
      %1847 = vmatprep.subr.bf16.mxu0 0
      %1848 = vmatpush2.bf16.msra.mxu0 0
      %1849 = vmatprep.subr.bf16.mxu0 0
      %1850 = vmatpush2.bf16.msra.mxu0 0
      %1851 = vmatprep.subr.bf16.mxu0 0
      %1852 = vmatpush2.bf16.msra.mxu0 0
      %1853 = vmatprep.subr.bf16.mxu0 0
      %1854 = vmatpush2.bf16.msra.mxu0 0
      %1855 = vmatprep.subr.bf16.mxu0 0
      %1856 = vmatpush2.bf16.msra.mxu0 0
      %1857 = vmatprep.mubr.bf16.mxu0 0
      %1858 = vmatmul.mubr.bf16.gmra.mxu0 %v1653
      %v1859 = vpop.f32.mrf.mxu0
      %v1860 = vadd.f32 %v1771, %v1859
      %v1861 = vpop.f32.mrf.mxu0
      %v1862 = vpop.f32.mrf.mxu0
      %v1863 = vadd.f32 %v1774, %v1862
      %v1864 = vpop.f32.mrf.mxu0
      %1865 = vdwg.mxu0
      %v1866 = vpack.c.bf16 %v1545, %v1540
      %s1867 = scalar_lea.vmem %s8, 128
      %v1868 = vld [vmem:[%s1867] sm:$0xf]
      %v1869 = vld [vmem:[%s1867 + $0x4] sm:$0xf]
      %v1870 = vld [vmem:[%s1867 + $0x8] sm:$0xf]
      %v1871 = vld [vmem:[%s1867 + $0xc] sm:$0xf]
      %v1872 = vld [vmem:[%s1867 + $0x10] sm:$0xf]
      %v1873 = vld [vmem:[%s1867 + $0x14] sm:$0xf]
      %v1874 = vld [vmem:[%s1867 + $0x18] sm:$0xf]
      %v1875 = vld [vmem:[%s1867 + $0x1c] sm:$0xf]
      %v1876 = vld [vmem:[%s1867 + $0x20] sm:$0xf]
      %v1877 = vld [vmem:[%s1867 + $0x24] sm:$0xf]
      %v1878 = vld [vmem:[%s1867 + $0x28] sm:$0xf]
      %v1879 = vld [vmem:[%s1867 + $0x2c] sm:$0xf]
      %v1880 = vld [vmem:[%s1867 + $0x30] sm:$0xf]
      %v1881 = vld [vmem:[%s1867 + $0x34] sm:$0xf]
      %v1882 = vld [vmem:[%s1867 + $0x38] sm:$0xf]
      %v1883 = vld [vmem:[%s1867 + $0x3c] sm:$0xf]
      %v1900 = vunpack.c.l.b16 %v1868
      %v1901 = vunpack.c.l.b16 %v1869
      %v1902 = vunpack.c.l.b16 %v1870
      %v1903 = vunpack.c.l.b16 %v1871
      %v1904 = vunpack.c.l.b16 %v1872
      %v1905 = vunpack.c.l.b16 %v1873
      %v1906 = vunpack.c.l.b16 %v1874
      %v1907 = vunpack.c.l.b16 %v1875
      %v1908 = vunpack.c.l.b16 %v1876
      %v1909 = vunpack.c.l.b16 %v1877
      %v1910 = vunpack.c.l.b16 %v1878
      %v1911 = vunpack.c.l.b16 %v1879
      %v1912 = vunpack.c.l.b16 %v1880
      %v1913 = vunpack.c.l.b16 %v1881
      %v1914 = vunpack.c.l.b16 %v1882
      %v1915 = vunpack.c.l.b16 %v1883
      %v1916 = vpack.c.b16 %v1901, %v1900
      %v1917 = vpack.c.b16 %v1903, %v1902
      %v1918 = vpack.c.b16 %v1905, %v1904
      %v1919 = vpack.c.b16 %v1907, %v1906
      %v1920 = vpack.c.b16 %v1909, %v1908
      %v1921 = vpack.c.b16 %v1911, %v1910
      %v1922 = vpack.c.b16 %v1913, %v1912
      %v1923 = vpack.c.b16 %v1915, %v1914
      %1932 = vmatprep.subr.bf16.mxu0 0
      %1933 = vmatpush1.bf16.msra.mxu0 %v1923
      %1934 = vmatprep.subr.bf16.mxu0 0
      %1935 = vmatpush1.bf16.msra.mxu0 %v1922
      %1936 = vmatprep.subr.bf16.mxu0 0
      %1937 = vmatpush1.bf16.msra.mxu0 %v1921
      %1938 = vmatprep.subr.bf16.mxu0 0
      %1939 = vmatpush1.bf16.msra.mxu0 %v1920
      %1940 = vmatprep.subr.bf16.mxu0 0
      %1941 = vmatpush1.bf16.msra.mxu0 %v1919
      %1942 = vmatprep.subr.bf16.mxu0 0
      %1943 = vmatpush1.bf16.msra.mxu0 %v1918
      %1944 = vmatprep.subr.bf16.mxu0 0
      %1945 = vmatpush1.bf16.msra.mxu0 %v1917
      %1946 = vmatprep.subr.bf16.mxu0 0
      %1947 = vmatpush1.bf16.msra.mxu0 %v1916
      %1948 = vmatprep.subr.bf16.mxu0 0
      %1949 = vmatpush2.bf16.msra.mxu0 0
      %1950 = vmatprep.subr.bf16.mxu0 0
      %1951 = vmatpush2.bf16.msra.mxu0 0
      %1952 = vmatprep.subr.bf16.mxu0 0
      %1953 = vmatpush2.bf16.msra.mxu0 0
      %1954 = vmatprep.subr.bf16.mxu0 0
      %1955 = vmatpush2.bf16.msra.mxu0 0
      %1956 = vmatprep.subr.bf16.mxu0 0
      %1957 = vmatpush2.bf16.msra.mxu0 0
      %1958 = vmatprep.subr.bf16.mxu0 0
      %1959 = vmatpush2.bf16.msra.mxu0 0
      %1960 = vmatprep.subr.bf16.mxu0 0
      %1961 = vmatpush2.bf16.msra.mxu0 0
      %1962 = vmatprep.subr.bf16.mxu0 0
      %1963 = vmatpush2.bf16.msra.mxu0 0
      %1964 = vmatprep.mubr.bf16.mxu0 0
      %1965 = vmatmul.mubr.bf16.gmra.mxu0 %v1866
      %v1966 = vpop.f32.mrf.mxu0
      %v1967 = vadd.f32 0.0, %v1966
      %v1968 = vpop.f32.mrf.mxu0
      %v1969 = vpop.f32.mrf.mxu0
      %v1970 = vadd.f32 0.0, %v1969
      %v1971 = vpop.f32.mrf.mxu0
      %1972 = vdwg.mxu0
      %v1973 = vadd.f32 %v1860, %v1967
      %v1974 = vadd.f32 %v1863, %v1970
      %v1975 = vld [vmem:[%s3] sm:$0xff]
      %v1976 = vld [vmem:[%s3 + $0x8] sm:$0xff]
      %1978 = vset.pattern.permute.xlu0 0
      %1979 = vperm.xlu0 %1978, %v1975
      %v1980 = vpop.permute.xlu0 %1979
      %1983 = vset.pattern.permute.xlu0 0
      %1984 = vperm.xlu0 %1983, %v1976
      %v1985 = vpop.permute.xlu0 %1984
      %v1987 = vadd.f32 %v1973, %v1980
      %v1988 = vadd.f32 %v1974, %v1985
      %v1989 = vpack.c.bf16 %v1555, %v1550
      %s1990 = scalar_lea.vmem %s8, 192
      %v1991 = vld [vmem:[%s1990] sm:$0xf]
      %v1992 = vld [vmem:[%s1990 + $0x4] sm:$0xf]
      %v1993 = vld [vmem:[%s1990 + $0x8] sm:$0xf]
      %v1994 = vld [vmem:[%s1990 + $0xc] sm:$0xf]
      %v1995 = vld [vmem:[%s1990 + $0x10] sm:$0xf]
      %v1996 = vld [vmem:[%s1990 + $0x14] sm:$0xf]
      %v1997 = vld [vmem:[%s1990 + $0x18] sm:$0xf]
      %v1998 = vld [vmem:[%s1990 + $0x1c] sm:$0xf]
      %v1999 = vld [vmem:[%s1990 + $0x20] sm:$0xf]
      %v2000 = vld [vmem:[%s1990 + $0x24] sm:$0xf]
      %v2001 = vld [vmem:[%s1990 + $0x28] sm:$0xf]
      %v2002 = vld [vmem:[%s1990 + $0x2c] sm:$0xf]
      %v2003 = vld [vmem:[%s1990 + $0x30] sm:$0xf]
      %v2004 = vld [vmem:[%s1990 + $0x34] sm:$0xf]
      %v2005 = vld [vmem:[%s1990 + $0x38] sm:$0xf]
      %v2006 = vld [vmem:[%s1990 + $0x3c] sm:$0xf]
      %s2007 = scalar_lea.vmem %s3, 16
      %v2008 = vld [vmem:[%s2007] sm:$0xff]
      %v2009 = vld [vmem:[%s2007 + $0x8] sm:$0xff]
      %2011 = vset.pattern.permute.xlu0 0
      %2012 = vperm.xlu0 %2011, %v2008
      %v2013 = vpop.permute.xlu0 %2012
      %2016 = vset.pattern.permute.xlu0 0
      %2017 = vperm.xlu0 %2016, %v2009
      %v2018 = vpop.permute.xlu0 %2017
      %v2036 = vunpack.c.l.b16 %v1991
      %v2037 = vunpack.c.l.b16 %v1992
      %v2038 = vunpack.c.l.b16 %v1993
      %v2039 = vunpack.c.l.b16 %v1994
      %v2040 = vunpack.c.l.b16 %v1995
      %v2041 = vunpack.c.l.b16 %v1996
      %v2042 = vunpack.c.l.b16 %v1997
      %v2043 = vunpack.c.l.b16 %v1998
      %v2044 = vunpack.c.l.b16 %v1999
      %v2045 = vunpack.c.l.b16 %v2000
      %v2046 = vunpack.c.l.b16 %v2001
      %v2047 = vunpack.c.l.b16 %v2002
      %v2048 = vunpack.c.l.b16 %v2003
      %v2049 = vunpack.c.l.b16 %v2004
      %v2050 = vunpack.c.l.b16 %v2005
      %v2051 = vunpack.c.l.b16 %v2006
      %v2052 = vpack.c.b16 %v2037, %v2036
      %v2053 = vpack.c.b16 %v2039, %v2038
      %v2054 = vpack.c.b16 %v2041, %v2040
      %v2055 = vpack.c.b16 %v2043, %v2042
      %v2056 = vpack.c.b16 %v2045, %v2044
      %v2057 = vpack.c.b16 %v2047, %v2046
      %v2058 = vpack.c.b16 %v2049, %v2048
      %v2059 = vpack.c.b16 %v2051, %v2050
      %2068 = vmatprep.subr.bf16.mxu0 0
      %2069 = vmatpush1.bf16.msra.mxu0 %v2059
      %2070 = vmatprep.subr.bf16.mxu0 0
      %2071 = vmatpush1.bf16.msra.mxu0 %v2058
      %2072 = vmatprep.subr.bf16.mxu0 0
      %2073 = vmatpush1.bf16.msra.mxu0 %v2057
      %2074 = vmatprep.subr.bf16.mxu0 0
      %2075 = vmatpush1.bf16.msra.mxu0 %v2056
      %2076 = vmatprep.subr.bf16.mxu0 0
      %2077 = vmatpush1.bf16.msra.mxu0 %v2055
      %2078 = vmatprep.subr.bf16.mxu0 0
      %2079 = vmatpush1.bf16.msra.mxu0 %v2054
      %2080 = vmatprep.subr.bf16.mxu0 0
      %2081 = vmatpush1.bf16.msra.mxu0 %v2053
      %2082 = vmatprep.subr.bf16.mxu0 0
      %2083 = vmatpush1.bf16.msra.mxu0 %v2052
      %2084 = vmatprep.subr.bf16.mxu0 0
      %2085 = vmatpush2.bf16.msra.mxu0 0
      %2086 = vmatprep.subr.bf16.mxu0 0
      %2087 = vmatpush2.bf16.msra.mxu0 0
      %2088 = vmatprep.subr.bf16.mxu0 0
      %2089 = vmatpush2.bf16.msra.mxu0 0
      %2090 = vmatprep.subr.bf16.mxu0 0
      %2091 = vmatpush2.bf16.msra.mxu0 0
      %2092 = vmatprep.subr.bf16.mxu0 0
      %2093 = vmatpush2.bf16.msra.mxu0 0
      %2094 = vmatprep.subr.bf16.mxu0 0
      %2095 = vmatpush2.bf16.msra.mxu0 0
      %2096 = vmatprep.subr.bf16.mxu0 0
      %2097 = vmatpush2.bf16.msra.mxu0 0
      %2098 = vmatprep.subr.bf16.mxu0 0
      %2099 = vmatpush2.bf16.msra.mxu0 0
      %2100 = vmatprep.mubr.bf16.mxu0 0
      %2101 = vmatmul.mubr.bf16.gmra.mxu0 %v1989
      %v2102 = vpop.f32.mrf.mxu0
      %v2103 = vadd.f32 %v2013, %v2102
      %v2104 = vpop.f32.mrf.mxu0
      %v2105 = vpop.f32.mrf.mxu0
      %v2106 = vadd.f32 %v2018, %v2105
      %v2107 = vpop.f32.mrf.mxu0
      %2108 = vdwg.mxu0
      %v2109 = vpack.c.bf16 %v1565, %v1560
      %s2110 = scalar_lea.vmem %s8, 256
      %v2111 = vld [vmem:[%s2110] sm:$0xf]
      %v2112 = vld [vmem:[%s2110 + $0x4] sm:$0xf]
      %v2113 = vld [vmem:[%s2110 + $0x8] sm:$0xf]
      %v2114 = vld [vmem:[%s2110 + $0xc] sm:$0xf]
      %v2115 = vld [vmem:[%s2110 + $0x10] sm:$0xf]
      %v2116 = vld [vmem:[%s2110 + $0x14] sm:$0xf]
      %v2117 = vld [vmem:[%s2110 + $0x18] sm:$0xf]
      %v2118 = vld [vmem:[%s2110 + $0x1c] sm:$0xf]
      %v2119 = vld [vmem:[%s2110 + $0x20] sm:$0xf]
      %v2120 = vld [vmem:[%s2110 + $0x24] sm:$0xf]
      %v2121 = vld [vmem:[%s2110 + $0x28] sm:$0xf]
      %v2122 = vld [vmem:[%s2110 + $0x2c] sm:$0xf]
      %v2123 = vld [vmem:[%s2110 + $0x30] sm:$0xf]
      %v2124 = vld [vmem:[%s2110 + $0x34] sm:$0xf]
      %v2125 = vld [vmem:[%s2110 + $0x38] sm:$0xf]
      %v2126 = vld [vmem:[%s2110 + $0x3c] sm:$0xf]
      %s2127 = scalar_lea.vmem %s3, 32
      %v2128 = vld [vmem:[%s2127] sm:$0xff]
      %v2129 = vld [vmem:[%s2127 + $0x8] sm:$0xff]
      %2131 = vset.pattern.permute.xlu0 0
      %2132 = vperm.xlu0 %2131, %v2128
      %v2133 = vpop.permute.xlu0 %2132
      %2136 = vset.pattern.permute.xlu0 0
      %2137 = vperm.xlu0 %2136, %v2129
      %v2138 = vpop.permute.xlu0 %2137
      %v2156 = vunpack.c.l.b16 %v2111
      %v2157 = vunpack.c.l.b16 %v2112
      %v2158 = vunpack.c.l.b16 %v2113
      %v2159 = vunpack.c.l.b16 %v2114
      %v2160 = vunpack.c.l.b16 %v2115
      %v2161 = vunpack.c.l.b16 %v2116
      %v2162 = vunpack.c.l.b16 %v2117
      %v2163 = vunpack.c.l.b16 %v2118
      %v2164 = vunpack.c.l.b16 %v2119
      %v2165 = vunpack.c.l.b16 %v2120
      %v2166 = vunpack.c.l.b16 %v2121
      %v2167 = vunpack.c.l.b16 %v2122
      %v2168 = vunpack.c.l.b16 %v2123
      %v2169 = vunpack.c.l.b16 %v2124
      %v2170 = vunpack.c.l.b16 %v2125
      %v2171 = vunpack.c.l.b16 %v2126
      %v2172 = vpack.c.b16 %v2157, %v2156
      %v2173 = vpack.c.b16 %v2159, %v2158
      %v2174 = vpack.c.b16 %v2161, %v2160
      %v2175 = vpack.c.b16 %v2163, %v2162
      %v2176 = vpack.c.b16 %v2165, %v2164
      %v2177 = vpack.c.b16 %v2167, %v2166
      %v2178 = vpack.c.b16 %v2169, %v2168
      %v2179 = vpack.c.b16 %v2171, %v2170
      %2188 = vmatprep.subr.bf16.mxu0 0
      %2189 = vmatpush1.bf16.msra.mxu0 %v2179
      %2190 = vmatprep.subr.bf16.mxu0 0
      %2191 = vmatpush1.bf16.msra.mxu0 %v2178
      %2192 = vmatprep.subr.bf16.mxu0 0
      %2193 = vmatpush1.bf16.msra.mxu0 %v2177
      %2194 = vmatprep.subr.bf16.mxu0 0
      %2195 = vmatpush1.bf16.msra.mxu0 %v2176
      %2196 = vmatprep.subr.bf16.mxu0 0
      %2197 = vmatpush1.bf16.msra.mxu0 %v2175
      %2198 = vmatprep.subr.bf16.mxu0 0
      %2199 = vmatpush1.bf16.msra.mxu0 %v2174
      %2200 = vmatprep.subr.bf16.mxu0 0
      %2201 = vmatpush1.bf16.msra.mxu0 %v2173
      %2202 = vmatprep.subr.bf16.mxu0 0
      %2203 = vmatpush1.bf16.msra.mxu0 %v2172
      %2204 = vmatprep.subr.bf16.mxu0 0
      %2205 = vmatpush2.bf16.msra.mxu0 0
      %2206 = vmatprep.subr.bf16.mxu0 0
      %2207 = vmatpush2.bf16.msra.mxu0 0
      %2208 = vmatprep.subr.bf16.mxu0 0
      %2209 = vmatpush2.bf16.msra.mxu0 0
      %2210 = vmatprep.subr.bf16.mxu0 0
      %2211 = vmatpush2.bf16.msra.mxu0 0
      %2212 = vmatprep.subr.bf16.mxu0 0
      %2213 = vmatpush2.bf16.msra.mxu0 0
      %2214 = vmatprep.subr.bf16.mxu0 0
      %2215 = vmatpush2.bf16.msra.mxu0 0
      %2216 = vmatprep.subr.bf16.mxu0 0
      %2217 = vmatpush2.bf16.msra.mxu0 0
      %2218 = vmatprep.subr.bf16.mxu0 0
      %2219 = vmatpush2.bf16.msra.mxu0 0
      %2220 = vmatprep.mubr.bf16.mxu0 0
      %2221 = vmatmul.mubr.bf16.gmra.mxu0 %v2109
      %v2222 = vpop.f32.mrf.mxu0
      %v2223 = vadd.f32 %v2133, %v2222
      %v2224 = vpop.f32.mrf.mxu0
      %v2225 = vpop.f32.mrf.mxu0
      %v2226 = vadd.f32 %v2138, %v2225
      %v2227 = vpop.f32.mrf.mxu0
      %2228 = vdwg.mxu0
      %v2229 = vadd.f32 %v1987, %v2103
      %v2230 = vadd.f32 %v1988, %v2106
      %v2231 = vadd.f32 %v2229, %v2223
      %v2232 = vadd.f32 %v2230, %v2226
      %2233 = vadd.xlane.f32.xlu0 %v2231
      %v2234 = vpop.xlane.xlu0 %2233
      %2235 = vadd.xlane.f32.xlu0 %v2232
      %v2236 = vpop.xlane.xlu0 %2235
      %v2237 = vmul.f32 %v2234, 0.0078125
      %v2238 = vmul.f32 %v2236, 0.0078125
      %v2239 = vld [vmem:[%s12] sm:$0xff]
      %v2240 = vld [vmem:[%s12 + $0x8] sm:$0xff]
      %v2241 = vmul.f32 %v2239, %v2237
      %v2242 = vmul.f32 %v2240, %v2238
      %vm2243 = vcmask 64512
      %v2244 = vsel %vm2243, %v2241, 0.0
      %v2245 = vsel %vm2243, %v2242, 0.0
      %v2246 = vadd.f32 %v2244, %v2245
      %v2247 = vrot.slane %v2246, 4
      %v2248 = vadd.f32 %v2246, %v2247
      %v2249 = vrot.slane %v2248, 2
      %v2250 = vadd.f32 %v2248, %v2249
      %v2251 = vrot.slane %v2250, 1
      %v2252 = vadd.f32 %v2250, %v2251
      %v2253 = vld [vmem:[%s13] sm:$0x1]
      %v2254 = vadd.f32 %v2252, %v2253
      %v2255 = vld [vmem:[%s14] sm:$0xff]
      %v2256 = vld [vmem:[%s14 + $0x8] sm:$0xff]
      %v2257 = vlaneseq
      %v2258 = vshrl.u32 %v2257, 7
      %v2259 = vsub.s32 0, %v2258
      %v2260 = vrot.slane %v2254, %v2259
      %v2261 = vmul.f32 %v2255, %v2260
      %v2262 = vmul.f32 %v2256, %v2260
      %v2263 = vsel %vm2243, %v2261, 0.0
      %2264 = vadd.xlane.f32.xlu0 %v2263
      %v2265 = vpop.xlane.xlu0 %2264
      %v2266 = vsel %vm2243, %v2262, 0.0
      %2267 = vadd.xlane.f32.xlu0 %v2266
      %v2268 = vpop.xlane.xlu0 %2267
      %v2269 = vld [vmem:[%s15] sm:$0xff]
      %v2270 = vld [vmem:[%s15 + $0x8] sm:$0xff]
      %v2271 = vadd.f32 %v2265, %v2269
      %v2272 = vadd.f32 %v2268, %v2270
      %s2273 = scalar_lea.vmem %s14, 16
      %v2274 = vld [vmem:[%s2273] sm:$0xff]
      %v2275 = vld [vmem:[%s2273 + $0x8] sm:$0xff]
      %v2276 = vmul.f32 %v2274, %v2260
      %v2277 = vmul.f32 %v2275, %v2260
      %v2278 = vsel %vm2243, %v2276, 0.0
      %2279 = vadd.xlane.f32.xlu0 %v2278
      %v2280 = vpop.xlane.xlu0 %2279
      %v2281 = vsel %vm2243, %v2277, 0.0
      %2282 = vadd.xlane.f32.xlu0 %v2281
      %v2283 = vpop.xlane.xlu0 %2282
      %s2284 = scalar_lea.vmem %s15, 16
      %v2285 = vld [vmem:[%s2284] sm:$0xff]
      %v2286 = vld [vmem:[%s2284 + $0x8] sm:$0xff]
      %v2287 = vadd.f32 %v2280, %v2285
      %v2288 = vadd.f32 %v2283, %v2286
      %s2289 = scalar_lea.vmem %s14, 32
      %v2290 = vld [vmem:[%s2289] sm:$0xff]
      %v2291 = vld [vmem:[%s2289 + $0x8] sm:$0xff]
      %v2292 = vmul.f32 %v2290, %v2260
      %v2293 = vmul.f32 %v2291, %v2260
      %v2294 = vsel %vm2243, %v2292, 0.0
      %2295 = vadd.xlane.f32.xlu0 %v2294
      %v2296 = vpop.xlane.xlu0 %2295
      %v2297 = vsel %vm2243, %v2293, 0.0
      %2298 = vadd.xlane.f32.xlu0 %v2297
      %v2299 = vpop.xlane.xlu0 %2298
      %s2300 = scalar_lea.vmem %s15, 32
      %v2301 = vld [vmem:[%s2300] sm:$0xff]
      %v2302 = vld [vmem:[%s2300 + $0x8] sm:$0xff]
      %v2303 = vadd.f32 %v2296, %v2301
      %v2304 = vadd.f32 %v2299, %v2302
      %v2305 = vmax.f32 %v2271, %v2287
      %v2306 = vmax.f32 %v2272, %v2288
      %v2307 = vmax.f32 %v2305, %v2303
      %v2308 = vmax.f32 %v2306, %v2304
      %v2309 = vsub.f32 %v2271, %v2307
      %v2310 = vsub.f32 %v2272, %v2308
      %v2311 = vmul.f32 %v2309, 1.442695
      %v2312 = vpow.pop %v2311
      %v2313 = vmul.f32 %v2310, 1.442695
      %v2314 = vpow.pop %v2313
      %v2315 = vsub.f32 %v2287, %v2307
      %v2316 = vsub.f32 %v2288, %v2308
      %v2317 = vmul.f32 %v2315, 1.442695
      %v2318 = vpow.pop %v2317
      %v2319 = vmul.f32 %v2316, 1.442695
      %v2320 = vpow.pop %v2319
      %v2321 = vsub.f32 %v2303, %v2307
      %v2322 = vsub.f32 %v2304, %v2308
      %v2323 = vmul.f32 %v2321, 1.442695
      %v2324 = vpow.pop %v2323
      %v2325 = vmul.f32 %v2322, 1.442695
      %v2326 = vpow.pop %v2325
      %v2327 = vadd.f32 %v2312, %v2318
      %v2328 = vadd.f32 %v2314, %v2320
      %v2329 = vadd.f32 %v2327, %v2324
      %v2330 = vadd.f32 %v2328, %v2326
      %v2331 = vrcp.pop %v2329
      %v2332 = vrcp.pop %v2330
      %v2333 = vmul.f32 %v2312, %v2331
      %v2334 = vmul.f32 %v2314, %v2332
      %2336 = vset.pattern.permute.xlu0 0
      %2337 = vperm.xlu0 %2336, %v2333
      %v2338 = vpop.permute.xlu0 %2337
      %2341 = vset.pattern.permute.xlu0 0
      %2342 = vperm.xlu0 %2341, %v2334
      %v2343 = vpop.permute.xlu0 %2342
      %v2345 = vmul.f32 %v2338, %v1987
      %v2346 = vmul.f32 %v2343, %v1988
      %v2347 = vmul.f32 %v2318, %v2331
      %v2348 = vmul.f32 %v2320, %v2332
      %2350 = vset.pattern.permute.xlu0 0
      %2351 = vperm.xlu0 %2350, %v2347
      %v2352 = vpop.permute.xlu0 %2351
      %2355 = vset.pattern.permute.xlu0 0
      %2356 = vperm.xlu0 %2355, %v2348
      %v2357 = vpop.permute.xlu0 %2356
      %v2359 = vmul.f32 %v2352, %v2103
      %v2360 = vmul.f32 %v2357, %v2106
      %v2361 = vadd.f32 %v2345, %v2359
      %v2362 = vadd.f32 %v2346, %v2360
      %v2363 = vmul.f32 %v2324, %v2331
      %v2364 = vmul.f32 %v2326, %v2332
      %2366 = vset.pattern.permute.xlu0 0
      %2367 = vperm.xlu0 %2366, %v2363
      %v2368 = vpop.permute.xlu0 %2367
      %2371 = vset.pattern.permute.xlu0 0
      %2372 = vperm.xlu0 %2371, %v2364
      %v2373 = vpop.permute.xlu0 %2372
      %v2375 = vmul.f32 %v2368, %v2223
      %v2376 = vmul.f32 %v2373, %v2226
      %v2377 = vadd.f32 %v2361, %v2375
      %v2378 = vadd.f32 %v2362, %v2376
      %v2379 = vadd.f32 %v2377, %v1647
      %v2380 = vadd.f32 %v2378, %v1650
      %v2381 = vld [vmem:[%s16] sm:$0xff]
      %v2382 = vld [vmem:[%s16 + $0x8] sm:$0xff]
      %2384 = vset.pattern.permute.xlu0 0
      %2385 = vperm.xlu0 %2384, %v2381
      %v2386 = vpop.permute.xlu0 %2385
      %2389 = vset.pattern.permute.xlu0 0
      %2390 = vperm.xlu0 %2389, %v2382
      %v2391 = vpop.permute.xlu0 %2390
      %v2393 = vmul.f32 %v2379, %v2386
      %v2394 = vmul.f32 %v2380, %v2391
      %v2395 = vld [vmem:[%s17] sm:$0xff]
      %v2396 = vld [vmem:[%s17 + $0x8] sm:$0xff]
      %2398 = vset.pattern.permute.xlu0 0
      %2399 = vperm.xlu0 %2398, %v2395
      %v2400 = vpop.permute.xlu0 %2399
      %2403 = vset.pattern.permute.xlu0 0
      %2404 = vperm.xlu0 %2403, %v2396
      %v2405 = vpop.permute.xlu0 %2404
      %v2407 = vadd.f32 %v2393, %v2400
      %v2408 = vadd.f32 %v2394, %v2405
      %s2409 = scalar_lea.vmem %s3, 64
      %v2410 = vld [vmem:[%s2409] sm:$0xff]
      %v2411 = vld [vmem:[%s2409 + $0x8] sm:$0xff]
      %2413 = vset.pattern.permute.xlu0 0
      %2414 = vperm.xlu0 %2413, %v2410
      %v2415 = vpop.permute.xlu0 %2414
      %2418 = vset.pattern.permute.xlu0 0
      %2419 = vperm.xlu0 %2418, %v2411
      %v2420 = vpop.permute.xlu0 %2419
      %v2422 = vadd.f32 %v1580, %v2415
      %v2423 = vadd.f32 %v1585, %v2420
      %s2424 = scalar_lea.vmem %s3, 80
      %v2425 = vld [vmem:[%s2424] sm:$0xff]
      %v2426 = vld [vmem:[%s2424 + $0x8] sm:$0xff]
      %2428 = vset.pattern.permute.xlu0 0
      %2429 = vperm.xlu0 %2428, %v2425
      %v2430 = vpop.permute.xlu0 %2429
      %2433 = vset.pattern.permute.xlu0 0
      %2434 = vperm.xlu0 %2433, %v2426
      %v2435 = vpop.permute.xlu0 %2434
      %v2437 = vadd.f32 %v1590, %v2430
      %v2438 = vadd.f32 %v1595, %v2435
      %v2439 = vadd.f32 %v2407, %v2422
      %v2440 = vadd.f32 %v2408, %v2423
      %v2441 = vmax.f32 %v2439, 0.0
      %v2442 = vmax.f32 %v2440, 0.0
      %2443 = vrot.lane.b32.xlu0 %v2441, 64
      %v2444 = vpop.permute.xlu0 %2443
      %2445 = vrot.lane.b32.xlu0 %v2442, 64
      %v2446 = vpop.permute.xlu0 %2445
      %v2447 = vld [vmem:[%s20] sm:$0x1]
      %v2449 = vlaneseq
      %v2450 = vshrl.u32 %v2449, 7
      %v2451 = vsub.s32 0, %v2450
      %v2452 = vrot.slane %v2447, %v2451
      %v2454 = vmul.f32 %v2444, %v2452
      %v2455 = vmul.f32 %v2446, %v2452
      %v2456 = vld [vmem:[%s18] sm:$0xf]
      %v2457 = vld [vmem:[%s18 + $0x4] sm:$0xf]
      %v2458 = vpack.c.bf16 %v2455, %v2454
      %2459 = vrot.lane.b32.xlu0 %v2441, 48
      %v2460 = vpop.permute.xlu0 %2459
      %2461 = vrot.lane.b32.xlu0 %v2442, 48
      %v2462 = vpop.permute.xlu0 %2461
      %s2463 = scalar_lea.vmem %s20, 1
      %v2464 = vld [vmem:[%s2463] sm:$0x1]
      %v2466 = vlaneseq
      %v2467 = vshrl.u32 %v2466, 7
      %v2468 = vsub.s32 0, %v2467
      %v2469 = vrot.slane %v2464, %v2468
      %v2471 = vmul.f32 %v2460, %v2469
      %v2472 = vmul.f32 %v2462, %v2469
      %s2473 = scalar_lea.vmem %s18, 8
      %v2474 = vld [vmem:[%s2473] sm:$0xf]
      %v2475 = vld [vmem:[%s2473 + $0x4] sm:$0xf]
      %v2476 = vpack.c.bf16 %v2472, %v2471
      %v2479 = vunpack.c.l.b16 %v2474
      %v2480 = vunpack.c.l.b16 %v2475
      %v2481 = vpack.c.b16 %v2480, %v2479
      %v2483 = vsel %vm1253, %v2481, 0
      %2485 = vmatprep.subr.bf16.mxu0 0
      %2486 = vmatpush1.bf16.msra.mxu0 0
      %2487 = vmatprep.subr.bf16.mxu0 0
      %2488 = vmatpush1.bf16.msra.mxu0 0
      %2489 = vmatprep.subr.bf16.mxu0 0
      %2490 = vmatpush1.bf16.msra.mxu0 0
      %2491 = vmatprep.subr.bf16.mxu0 0
      %2492 = vmatpush1.bf16.msra.mxu0 0
      %2493 = vmatprep.subr.bf16.mxu0 0
      %2494 = vmatpush1.bf16.msra.mxu0 0
      %2495 = vmatprep.subr.bf16.mxu0 0
      %2496 = vmatpush1.bf16.msra.mxu0 0
      %2497 = vmatprep.subr.bf16.mxu0 0
      %2498 = vmatpush1.bf16.msra.mxu0 0
      %2499 = vmatprep.subr.bf16.mxu0 0
      %2500 = vmatpush1.bf16.msra.mxu0 %v2476
      %2501 = vmatprep.subr.bf16.mxu0 0
      %2502 = vmatpush2.bf16.msra.mxu0 0
      %2503 = vmatprep.subr.bf16.mxu0 0
      %2504 = vmatpush2.bf16.msra.mxu0 0
      %2505 = vmatprep.subr.bf16.mxu0 0
      %2506 = vmatpush2.bf16.msra.mxu0 0
      %2507 = vmatprep.subr.bf16.mxu0 0
      %2508 = vmatpush2.bf16.msra.mxu0 0
      %2509 = vmatprep.subr.bf16.mxu0 0
      %2510 = vmatpush2.bf16.msra.mxu0 0
      %2511 = vmatprep.subr.bf16.mxu0 0
      %2512 = vmatpush2.bf16.msra.mxu0 0
      %2513 = vmatprep.subr.bf16.mxu0 0
      %2514 = vmatpush2.bf16.msra.mxu0 0
      %2515 = vmatprep.subr.bf16.mxu0 0
      %2516 = vmatpush2.bf16.msra.mxu0 0
      %2517 = vmatprep.mubr.bf16.mxu0 0
      %2518 = vmatmul.mubr.bf16.gmra.mxu0 %v2483
      %v2519 = vpop.f32.mrf.mxu0
      %v2520 = vadd.f32 0.0, %v2519
      %v2521 = vpop.f32.mrf.mxu0
      %v2522 = vpop.f32.mrf.mxu0
      %v2523 = vadd.f32 0.0, %v2522
      %v2524 = vpop.f32.mrf.mxu0
      %2525 = vdwg.mxu0
      %v2528 = vunpack.c.l.b16 %v2456
      %v2529 = vunpack.c.l.b16 %v2457
      %v2530 = vpack.c.b16 %v2529, %v2528
      %v2532 = vsel %vm1253, %v2530, 0
      %2534 = vmatprep.subr.bf16.mxu0 0
      %2535 = vmatpush1.bf16.msra.mxu0 0
      %2536 = vmatprep.subr.bf16.mxu0 0
      %2537 = vmatpush1.bf16.msra.mxu0 0
      %2538 = vmatprep.subr.bf16.mxu0 0
      %2539 = vmatpush1.bf16.msra.mxu0 0
      %2540 = vmatprep.subr.bf16.mxu0 0
      %2541 = vmatpush1.bf16.msra.mxu0 0
      %2542 = vmatprep.subr.bf16.mxu0 0
      %2543 = vmatpush1.bf16.msra.mxu0 0
      %2544 = vmatprep.subr.bf16.mxu0 0
      %2545 = vmatpush1.bf16.msra.mxu0 0
      %2546 = vmatprep.subr.bf16.mxu0 0
      %2547 = vmatpush1.bf16.msra.mxu0 0
      %2548 = vmatprep.subr.bf16.mxu0 0
      %2549 = vmatpush1.bf16.msra.mxu0 %v2458
      %2550 = vmatprep.subr.bf16.mxu0 0
      %2551 = vmatpush2.bf16.msra.mxu0 0
      %2552 = vmatprep.subr.bf16.mxu0 0
      %2553 = vmatpush2.bf16.msra.mxu0 0
      %2554 = vmatprep.subr.bf16.mxu0 0
      %2555 = vmatpush2.bf16.msra.mxu0 0
      %2556 = vmatprep.subr.bf16.mxu0 0
      %2557 = vmatpush2.bf16.msra.mxu0 0
      %2558 = vmatprep.subr.bf16.mxu0 0
      %2559 = vmatpush2.bf16.msra.mxu0 0
      %2560 = vmatprep.subr.bf16.mxu0 0
      %2561 = vmatpush2.bf16.msra.mxu0 0
      %2562 = vmatprep.subr.bf16.mxu0 0
      %2563 = vmatpush2.bf16.msra.mxu0 0
      %2564 = vmatprep.subr.bf16.mxu0 0
      %2565 = vmatpush2.bf16.msra.mxu0 0
      %2566 = vmatprep.mubr.bf16.mxu0 0
      %2567 = vmatmul.mubr.bf16.gmra.mxu0 %v2532
      %v2568 = vpop.f32.mrf.mxu0
      %v2569 = vadd.f32 %v2520, %v2568
      %v2570 = vpop.f32.mrf.mxu0
      %v2571 = vpop.f32.mrf.mxu0
      %v2572 = vadd.f32 %v2523, %v2571
      %v2573 = vpop.f32.mrf.mxu0
      %2574 = vdwg.mxu0
      %2575 = vrot.lane.b32.xlu0 %v2441, 32
      %v2576 = vpop.permute.xlu0 %2575
      %2577 = vrot.lane.b32.xlu0 %v2442, 32
      %v2578 = vpop.permute.xlu0 %2577
      %s2579 = scalar_lea.vmem %s20, 2
      %v2580 = vld [vmem:[%s2579] sm:$0x1]
      %v2582 = vlaneseq
      %v2583 = vshrl.u32 %v2582, 7
      %v2584 = vsub.s32 0, %v2583
      %v2585 = vrot.slane %v2580, %v2584
      %v2587 = vmul.f32 %v2576, %v2585
      %v2588 = vmul.f32 %v2578, %v2585
      %s2589 = scalar_lea.vmem %s18, 16
      %v2590 = vld [vmem:[%s2589] sm:$0xf]
      %v2591 = vld [vmem:[%s2589 + $0x4] sm:$0xf]
      %v2592 = vpack.c.bf16 %v2588, %v2587
      %v2595 = vunpack.c.l.b16 %v2590
      %v2596 = vunpack.c.l.b16 %v2591
      %v2597 = vpack.c.b16 %v2596, %v2595
      %v2599 = vsel %vm1253, %v2597, 0
      %2601 = vmatprep.subr.bf16.mxu0 0
      %2602 = vmatpush1.bf16.msra.mxu0 0
      %2603 = vmatprep.subr.bf16.mxu0 0
      %2604 = vmatpush1.bf16.msra.mxu0 0
      %2605 = vmatprep.subr.bf16.mxu0 0
      %2606 = vmatpush1.bf16.msra.mxu0 0
      %2607 = vmatprep.subr.bf16.mxu0 0
      %2608 = vmatpush1.bf16.msra.mxu0 0
      %2609 = vmatprep.subr.bf16.mxu0 0
      %2610 = vmatpush1.bf16.msra.mxu0 0
      %2611 = vmatprep.subr.bf16.mxu0 0
      %2612 = vmatpush1.bf16.msra.mxu0 0
      %2613 = vmatprep.subr.bf16.mxu0 0
      %2614 = vmatpush1.bf16.msra.mxu0 0
      %2615 = vmatprep.subr.bf16.mxu0 0
      %2616 = vmatpush1.bf16.msra.mxu0 %v2592
      %2617 = vmatprep.subr.bf16.mxu0 0
      %2618 = vmatpush2.bf16.msra.mxu0 0
      %2619 = vmatprep.subr.bf16.mxu0 0
      %2620 = vmatpush2.bf16.msra.mxu0 0
      %2621 = vmatprep.subr.bf16.mxu0 0
      %2622 = vmatpush2.bf16.msra.mxu0 0
      %2623 = vmatprep.subr.bf16.mxu0 0
      %2624 = vmatpush2.bf16.msra.mxu0 0
      %2625 = vmatprep.subr.bf16.mxu0 0
      %2626 = vmatpush2.bf16.msra.mxu0 0
      %2627 = vmatprep.subr.bf16.mxu0 0
      %2628 = vmatpush2.bf16.msra.mxu0 0
      %2629 = vmatprep.subr.bf16.mxu0 0
      %2630 = vmatpush2.bf16.msra.mxu0 0
      %2631 = vmatprep.subr.bf16.mxu0 0
      %2632 = vmatpush2.bf16.msra.mxu0 0
      %2633 = vmatprep.mubr.bf16.mxu0 0
      %2634 = vmatmul.mubr.bf16.gmra.mxu0 %v2599
      %v2635 = vpop.f32.mrf.mxu0
      %v2636 = vadd.f32 0.0, %v2635
      %v2637 = vpop.f32.mrf.mxu0
      %v2638 = vpop.f32.mrf.mxu0
      %v2639 = vadd.f32 0.0, %v2638
      %v2640 = vpop.f32.mrf.mxu0
      %2641 = vdwg.mxu0
      %v2642 = vadd.f32 %v2569, %v2636
      %v2643 = vadd.f32 %v2572, %v2639
      %2644 = vrot.lane.b32.xlu0 %v2441, 16
      %v2645 = vpop.permute.xlu0 %2644
      %2646 = vrot.lane.b32.xlu0 %v2442, 16
      %v2647 = vpop.permute.xlu0 %2646
      %s2648 = scalar_lea.vmem %s20, 3
      %v2649 = vld [vmem:[%s2648] sm:$0x1]
      %v2651 = vlaneseq
      %v2652 = vshrl.u32 %v2651, 7
      %v2653 = vsub.s32 0, %v2652
      %v2654 = vrot.slane %v2649, %v2653
      %v2656 = vmul.f32 %v2645, %v2654
      %v2657 = vmul.f32 %v2647, %v2654
      %s2658 = scalar_lea.vmem %s18, 24
      %v2659 = vld [vmem:[%s2658] sm:$0xf]
      %v2660 = vld [vmem:[%s2658 + $0x4] sm:$0xf]
      %v2661 = vpack.c.bf16 %v2657, %v2656
      %v2664 = vunpack.c.l.b16 %v2659
      %v2665 = vunpack.c.l.b16 %v2660
      %v2666 = vpack.c.b16 %v2665, %v2664
      %v2668 = vsel %vm1253, %v2666, 0
      %2670 = vmatprep.subr.bf16.mxu0 0
      %2671 = vmatpush1.bf16.msra.mxu0 0
      %2672 = vmatprep.subr.bf16.mxu0 0
      %2673 = vmatpush1.bf16.msra.mxu0 0
      %2674 = vmatprep.subr.bf16.mxu0 0
      %2675 = vmatpush1.bf16.msra.mxu0 0
      %2676 = vmatprep.subr.bf16.mxu0 0
      %2677 = vmatpush1.bf16.msra.mxu0 0
      %2678 = vmatprep.subr.bf16.mxu0 0
      %2679 = vmatpush1.bf16.msra.mxu0 0
      %2680 = vmatprep.subr.bf16.mxu0 0
      %2681 = vmatpush1.bf16.msra.mxu0 0
      %2682 = vmatprep.subr.bf16.mxu0 0
      %2683 = vmatpush1.bf16.msra.mxu0 0
      %2684 = vmatprep.subr.bf16.mxu0 0
      %2685 = vmatpush1.bf16.msra.mxu0 %v2661
      %2686 = vmatprep.subr.bf16.mxu0 0
      %2687 = vmatpush2.bf16.msra.mxu0 0
      %2688 = vmatprep.subr.bf16.mxu0 0
      %2689 = vmatpush2.bf16.msra.mxu0 0
      %2690 = vmatprep.subr.bf16.mxu0 0
      %2691 = vmatpush2.bf16.msra.mxu0 0
      %2692 = vmatprep.subr.bf16.mxu0 0
      %2693 = vmatpush2.bf16.msra.mxu0 0
      %2694 = vmatprep.subr.bf16.mxu0 0
      %2695 = vmatpush2.bf16.msra.mxu0 0
      %2696 = vmatprep.subr.bf16.mxu0 0
      %2697 = vmatpush2.bf16.msra.mxu0 0
      %2698 = vmatprep.subr.bf16.mxu0 0
      %2699 = vmatpush2.bf16.msra.mxu0 0
      %2700 = vmatprep.subr.bf16.mxu0 0
      %2701 = vmatpush2.bf16.msra.mxu0 0
      %2702 = vmatprep.mubr.bf16.mxu0 0
      %2703 = vmatmul.mubr.bf16.gmra.mxu0 %v2668
      %v2704 = vpop.f32.mrf.mxu0
      %v2705 = vadd.f32 0.0, %v2704
      %v2706 = vpop.f32.mrf.mxu0
      %v2707 = vpop.f32.mrf.mxu0
      %v2708 = vadd.f32 0.0, %v2707
      %v2709 = vpop.f32.mrf.mxu0
      %2710 = vdwg.mxu0
      %v2711 = vadd.f32 %v2642, %v2705
      %v2712 = vadd.f32 %v2643, %v2708
      %s2713 = scalar_lea.vmem %s18, 32
      %v2714 = vld [vmem:[%s2713] sm:$0xf]
      %v2715 = vld [vmem:[%s2713 + $0x4] sm:$0xf]
      %v2716 = vpack.c.bf16 %v2442, %v2441
      %v2719 = vunpack.c.l.b16 %v2714
      %v2720 = vunpack.c.l.b16 %v2715
      %v2721 = vpack.c.b16 %v2720, %v2719
      %v2723 = vsel %vm1253, %v2721, 0
      %2725 = vmatprep.subr.bf16.mxu0 0
      %2726 = vmatpush1.bf16.msra.mxu0 0
      %2727 = vmatprep.subr.bf16.mxu0 0
      %2728 = vmatpush1.bf16.msra.mxu0 0
      %2729 = vmatprep.subr.bf16.mxu0 0
      %2730 = vmatpush1.bf16.msra.mxu0 0
      %2731 = vmatprep.subr.bf16.mxu0 0
      %2732 = vmatpush1.bf16.msra.mxu0 0
      %2733 = vmatprep.subr.bf16.mxu0 0
      %2734 = vmatpush1.bf16.msra.mxu0 0
      %2735 = vmatprep.subr.bf16.mxu0 0
      %2736 = vmatpush1.bf16.msra.mxu0 0
      %2737 = vmatprep.subr.bf16.mxu0 0
      %2738 = vmatpush1.bf16.msra.mxu0 0
      %2739 = vmatprep.subr.bf16.mxu0 0
      %2740 = vmatpush1.bf16.msra.mxu0 %v2716
      %2741 = vmatprep.subr.bf16.mxu0 0
      %2742 = vmatpush2.bf16.msra.mxu0 0
      %2743 = vmatprep.subr.bf16.mxu0 0
      %2744 = vmatpush2.bf16.msra.mxu0 0
      %2745 = vmatprep.subr.bf16.mxu0 0
      %2746 = vmatpush2.bf16.msra.mxu0 0
      %2747 = vmatprep.subr.bf16.mxu0 0
      %2748 = vmatpush2.bf16.msra.mxu0 0
      %2749 = vmatprep.subr.bf16.mxu0 0
      %2750 = vmatpush2.bf16.msra.mxu0 0
      %2751 = vmatprep.subr.bf16.mxu0 0
      %2752 = vmatpush2.bf16.msra.mxu0 0
      %2753 = vmatprep.subr.bf16.mxu0 0
      %2754 = vmatpush2.bf16.msra.mxu0 0
      %2755 = vmatprep.subr.bf16.mxu0 0
      %2756 = vmatpush2.bf16.msra.mxu0 0
      %2757 = vmatprep.mubr.bf16.mxu0 0
      %2758 = vmatmul.mubr.bf16.gmra.mxu0 %v2723
      %v2759 = vpop.f32.mrf.mxu0
      %v2760 = vadd.f32 0.0, %v2759
      %v2761 = vpop.f32.mrf.mxu0
      %v2762 = vpop.f32.mrf.mxu0
      %v2763 = vadd.f32 0.0, %v2762
      %v2764 = vpop.f32.mrf.mxu0
      %2765 = vdwg.mxu0
      %v2766 = vadd.f32 %v2711, %v2760
      %v2767 = vadd.f32 %v2712, %v2763
      %2768 = vrot.lane.b32.xlu0 %v2441, 112
      %v2769 = vpop.permute.xlu0 %2768
      %2770 = vrot.lane.b32.xlu0 %v2442, 112
      %v2771 = vpop.permute.xlu0 %2770
      %s2772 = scalar_lea.vmem %s20, 5
      %v2773 = vld [vmem:[%s2772] sm:$0x1]
      %v2775 = vlaneseq
      %v2776 = vshrl.u32 %v2775, 7
      %v2777 = vsub.s32 0, %v2776
      %v2778 = vrot.slane %v2773, %v2777
      %v2780 = vmul.f32 %v2769, %v2778
      %v2781 = vmul.f32 %v2771, %v2778
      %s2782 = scalar_lea.vmem %s18, 40
      %v2783 = vld [vmem:[%s2782] sm:$0xf]
      %v2784 = vld [vmem:[%s2782 + $0x4] sm:$0xf]
      %v2785 = vpack.c.bf16 %v2781, %v2780
      %v2788 = vunpack.c.l.b16 %v2783
      %v2789 = vunpack.c.l.b16 %v2784
      %v2790 = vpack.c.b16 %v2789, %v2788
      %v2792 = vsel %vm1253, %v2790, 0
      %2794 = vmatprep.subr.bf16.mxu0 0
      %2795 = vmatpush1.bf16.msra.mxu0 0
      %2796 = vmatprep.subr.bf16.mxu0 0
      %2797 = vmatpush1.bf16.msra.mxu0 0
      %2798 = vmatprep.subr.bf16.mxu0 0
      %2799 = vmatpush1.bf16.msra.mxu0 0
      %2800 = vmatprep.subr.bf16.mxu0 0
      %2801 = vmatpush1.bf16.msra.mxu0 0
      %2802 = vmatprep.subr.bf16.mxu0 0
      %2803 = vmatpush1.bf16.msra.mxu0 0
      %2804 = vmatprep.subr.bf16.mxu0 0
      %2805 = vmatpush1.bf16.msra.mxu0 0
      %2806 = vmatprep.subr.bf16.mxu0 0
      %2807 = vmatpush1.bf16.msra.mxu0 0
      %2808 = vmatprep.subr.bf16.mxu0 0
      %2809 = vmatpush1.bf16.msra.mxu0 %v2785
      %2810 = vmatprep.subr.bf16.mxu0 0
      %2811 = vmatpush2.bf16.msra.mxu0 0
      %2812 = vmatprep.subr.bf16.mxu0 0
      %2813 = vmatpush2.bf16.msra.mxu0 0
      %2814 = vmatprep.subr.bf16.mxu0 0
      %2815 = vmatpush2.bf16.msra.mxu0 0
      %2816 = vmatprep.subr.bf16.mxu0 0
      %2817 = vmatpush2.bf16.msra.mxu0 0
      %2818 = vmatprep.subr.bf16.mxu0 0
      %2819 = vmatpush2.bf16.msra.mxu0 0
      %2820 = vmatprep.subr.bf16.mxu0 0
      %2821 = vmatpush2.bf16.msra.mxu0 0
      %2822 = vmatprep.subr.bf16.mxu0 0
      %2823 = vmatpush2.bf16.msra.mxu0 0
      %2824 = vmatprep.subr.bf16.mxu0 0
      %2825 = vmatpush2.bf16.msra.mxu0 0
      %2826 = vmatprep.mubr.bf16.mxu0 0
      %2827 = vmatmul.mubr.bf16.gmra.mxu0 %v2792
      %v2828 = vpop.f32.mrf.mxu0
      %v2829 = vadd.f32 0.0, %v2828
      %v2830 = vpop.f32.mrf.mxu0
      %v2831 = vpop.f32.mrf.mxu0
      %v2832 = vadd.f32 0.0, %v2831
      %v2833 = vpop.f32.mrf.mxu0
      %2834 = vdwg.mxu0
      %v2835 = vadd.f32 %v2766, %v2829
      %v2836 = vadd.f32 %v2767, %v2832
      %2837 = vrot.lane.b32.xlu0 %v2441, 96
      %v2838 = vpop.permute.xlu0 %2837
      %2839 = vrot.lane.b32.xlu0 %v2442, 96
      %v2840 = vpop.permute.xlu0 %2839
      %s2841 = scalar_lea.vmem %s20, 6
      %v2842 = vld [vmem:[%s2841] sm:$0x1]
      %v2844 = vlaneseq
      %v2845 = vshrl.u32 %v2844, 7
      %v2846 = vsub.s32 0, %v2845
      %v2847 = vrot.slane %v2842, %v2846
      %v2849 = vmul.f32 %v2838, %v2847
      %v2850 = vmul.f32 %v2840, %v2847
      %s2851 = scalar_lea.vmem %s18, 48
      %v2852 = vld [vmem:[%s2851] sm:$0xf]
      %v2853 = vld [vmem:[%s2851 + $0x4] sm:$0xf]
      %v2854 = vpack.c.bf16 %v2850, %v2849
      %v2857 = vunpack.c.l.b16 %v2852
      %v2858 = vunpack.c.l.b16 %v2853
      %v2859 = vpack.c.b16 %v2858, %v2857
      %v2861 = vsel %vm1253, %v2859, 0
      %2863 = vmatprep.subr.bf16.mxu0 0
      %2864 = vmatpush1.bf16.msra.mxu0 0
      %2865 = vmatprep.subr.bf16.mxu0 0
      %2866 = vmatpush1.bf16.msra.mxu0 0
      %2867 = vmatprep.subr.bf16.mxu0 0
      %2868 = vmatpush1.bf16.msra.mxu0 0
      %2869 = vmatprep.subr.bf16.mxu0 0
      %2870 = vmatpush1.bf16.msra.mxu0 0
      %2871 = vmatprep.subr.bf16.mxu0 0
      %2872 = vmatpush1.bf16.msra.mxu0 0
      %2873 = vmatprep.subr.bf16.mxu0 0
      %2874 = vmatpush1.bf16.msra.mxu0 0
      %2875 = vmatprep.subr.bf16.mxu0 0
      %2876 = vmatpush1.bf16.msra.mxu0 0
      %2877 = vmatprep.subr.bf16.mxu0 0
      %2878 = vmatpush1.bf16.msra.mxu0 %v2854
      %2879 = vmatprep.subr.bf16.mxu0 0
      %2880 = vmatpush2.bf16.msra.mxu0 0
      %2881 = vmatprep.subr.bf16.mxu0 0
      %2882 = vmatpush2.bf16.msra.mxu0 0
      %2883 = vmatprep.subr.bf16.mxu0 0
      %2884 = vmatpush2.bf16.msra.mxu0 0
      %2885 = vmatprep.subr.bf16.mxu0 0
      %2886 = vmatpush2.bf16.msra.mxu0 0
      %2887 = vmatprep.subr.bf16.mxu0 0
      %2888 = vmatpush2.bf16.msra.mxu0 0
      %2889 = vmatprep.subr.bf16.mxu0 0
      %2890 = vmatpush2.bf16.msra.mxu0 0
      %2891 = vmatprep.subr.bf16.mxu0 0
      %2892 = vmatpush2.bf16.msra.mxu0 0
      %2893 = vmatprep.subr.bf16.mxu0 0
      %2894 = vmatpush2.bf16.msra.mxu0 0
      %2895 = vmatprep.mubr.bf16.mxu0 0
      %2896 = vmatmul.mubr.bf16.gmra.mxu0 %v2861
      %v2897 = vpop.f32.mrf.mxu0
      %v2898 = vadd.f32 0.0, %v2897
      %v2899 = vpop.f32.mrf.mxu0
      %v2900 = vpop.f32.mrf.mxu0
      %v2901 = vadd.f32 0.0, %v2900
      %v2902 = vpop.f32.mrf.mxu0
      %2903 = vdwg.mxu0
      %v2904 = vadd.f32 %v2835, %v2898
      %v2905 = vadd.f32 %v2836, %v2901
      %2906 = vrot.lane.b32.xlu0 %v2441, 80
      %v2907 = vpop.permute.xlu0 %2906
      %2908 = vrot.lane.b32.xlu0 %v2442, 80
      %v2909 = vpop.permute.xlu0 %2908
      %s2910 = scalar_lea.vmem %s20, 7
      %v2911 = vld [vmem:[%s2910] sm:$0x1]
      %v2913 = vlaneseq
      %v2914 = vshrl.u32 %v2913, 7
      %v2915 = vsub.s32 0, %v2914
      %v2916 = vrot.slane %v2911, %v2915
      %v2918 = vmul.f32 %v2907, %v2916
      %v2919 = vmul.f32 %v2909, %v2916
      %s2920 = scalar_lea.vmem %s18, 56
      %v2921 = vld [vmem:[%s2920] sm:$0xf]
      %v2922 = vld [vmem:[%s2920 + $0x4] sm:$0xf]
      %v2923 = vpack.c.bf16 %v2919, %v2918
      %v2926 = vunpack.c.l.b16 %v2921
      %v2927 = vunpack.c.l.b16 %v2922
      %v2928 = vpack.c.b16 %v2927, %v2926
      %v2930 = vsel %vm1253, %v2928, 0
      %2932 = vmatprep.subr.bf16.mxu0 0
      %2933 = vmatpush1.bf16.msra.mxu0 0
      %2934 = vmatprep.subr.bf16.mxu0 0
      %2935 = vmatpush1.bf16.msra.mxu0 0
      %2936 = vmatprep.subr.bf16.mxu0 0
      %2937 = vmatpush1.bf16.msra.mxu0 0
      %2938 = vmatprep.subr.bf16.mxu0 0
      %2939 = vmatpush1.bf16.msra.mxu0 0
      %2940 = vmatprep.subr.bf16.mxu0 0
      %2941 = vmatpush1.bf16.msra.mxu0 0
      %2942 = vmatprep.subr.bf16.mxu0 0
      %2943 = vmatpush1.bf16.msra.mxu0 0
      %2944 = vmatprep.subr.bf16.mxu0 0
      %2945 = vmatpush1.bf16.msra.mxu0 0
      %2946 = vmatprep.subr.bf16.mxu0 0
      %2947 = vmatpush1.bf16.msra.mxu0 %v2923
      %2948 = vmatprep.subr.bf16.mxu0 0
      %2949 = vmatpush2.bf16.msra.mxu0 0
      %2950 = vmatprep.subr.bf16.mxu0 0
      %2951 = vmatpush2.bf16.msra.mxu0 0
      %2952 = vmatprep.subr.bf16.mxu0 0
      %2953 = vmatpush2.bf16.msra.mxu0 0
      %2954 = vmatprep.subr.bf16.mxu0 0
      %2955 = vmatpush2.bf16.msra.mxu0 0
      %2956 = vmatprep.subr.bf16.mxu0 0
      %2957 = vmatpush2.bf16.msra.mxu0 0
      %2958 = vmatprep.subr.bf16.mxu0 0
      %2959 = vmatpush2.bf16.msra.mxu0 0
      %2960 = vmatprep.subr.bf16.mxu0 0
      %2961 = vmatpush2.bf16.msra.mxu0 0
      %2962 = vmatprep.subr.bf16.mxu0 0
      %2963 = vmatpush2.bf16.msra.mxu0 0
      %2964 = vmatprep.mubr.bf16.mxu0 0
      %2965 = vmatmul.mubr.bf16.gmra.mxu0 %v2930
      %v2966 = vpop.f32.mrf.mxu0
      %v2967 = vadd.f32 0.0, %v2966
      %v2968 = vpop.f32.mrf.mxu0
      %v2969 = vpop.f32.mrf.mxu0
      %v2970 = vadd.f32 0.0, %v2969
      %v2971 = vpop.f32.mrf.mxu0
      %2972 = vdwg.mxu0
      %v2973 = vadd.f32 %v2904, %v2967
      %v2974 = vadd.f32 %v2905, %v2970
      %s2975 = scalar_lea.vmem %s20, 8
      %v2976 = vld [vmem:[%s2975] sm:$0x1]
      %v2978 = vlaneseq
      %v2979 = vshrl.u32 %v2978, 7
      %v2980 = vsub.s32 0, %v2979
      %v2981 = vrot.slane %v2976, %v2980
      %v2983 = vmul.f32 %v2444, %v2981
      %v2984 = vmul.f32 %v2446, %v2981
      %s2985 = scalar_lea.vmem %s18, 64
      %v2986 = vld [vmem:[%s2985] sm:$0xf]
      %v2987 = vld [vmem:[%s2985 + $0x4] sm:$0xf]
      %v2988 = vpack.c.bf16 %v2984, %v2983
      %v2991 = vunpack.c.l.b16 %v2986
      %v2992 = vunpack.c.l.b16 %v2987
      %v2993 = vpack.c.b16 %v2992, %v2991
      %v2995 = vsel %vm1253, %v2993, 0
      %2997 = vmatprep.subr.bf16.mxu0 0
      %2998 = vmatpush1.bf16.msra.mxu0 0
      %2999 = vmatprep.subr.bf16.mxu0 0
      %3000 = vmatpush1.bf16.msra.mxu0 0
      %3001 = vmatprep.subr.bf16.mxu0 0
      %3002 = vmatpush1.bf16.msra.mxu0 0
      %3003 = vmatprep.subr.bf16.mxu0 0
      %3004 = vmatpush1.bf16.msra.mxu0 0
      %3005 = vmatprep.subr.bf16.mxu0 0
      %3006 = vmatpush1.bf16.msra.mxu0 0
      %3007 = vmatprep.subr.bf16.mxu0 0
      %3008 = vmatpush1.bf16.msra.mxu0 0
      %3009 = vmatprep.subr.bf16.mxu0 0
      %3010 = vmatpush1.bf16.msra.mxu0 0
      %3011 = vmatprep.subr.bf16.mxu0 0
      %3012 = vmatpush1.bf16.msra.mxu0 %v2988
      %3013 = vmatprep.subr.bf16.mxu0 0
      %3014 = vmatpush2.bf16.msra.mxu0 0
      %3015 = vmatprep.subr.bf16.mxu0 0
      %3016 = vmatpush2.bf16.msra.mxu0 0
      %3017 = vmatprep.subr.bf16.mxu0 0
      %3018 = vmatpush2.bf16.msra.mxu0 0
      %3019 = vmatprep.subr.bf16.mxu0 0
      %3020 = vmatpush2.bf16.msra.mxu0 0
      %3021 = vmatprep.subr.bf16.mxu0 0
      %3022 = vmatpush2.bf16.msra.mxu0 0
      %3023 = vmatprep.subr.bf16.mxu0 0
      %3024 = vmatpush2.bf16.msra.mxu0 0
      %3025 = vmatprep.subr.bf16.mxu0 0
      %3026 = vmatpush2.bf16.msra.mxu0 0
      %3027 = vmatprep.subr.bf16.mxu0 0
      %3028 = vmatpush2.bf16.msra.mxu0 0
      %3029 = vmatprep.mubr.bf16.mxu0 0
      %3030 = vmatmul.mubr.bf16.gmra.mxu0 %v2995
      %v3031 = vpop.f32.mrf.mxu0
      %v3032 = vadd.f32 0.0, %v3031
      %v3033 = vpop.f32.mrf.mxu0
      %v3034 = vpop.f32.mrf.mxu0
      %v3035 = vadd.f32 0.0, %v3034
      %v3036 = vpop.f32.mrf.mxu0
      %3037 = vdwg.mxu0
      %v3038 = vadd.f32 %v2973, %v3032
      %v3039 = vadd.f32 %v2974, %v3035
      %v3040 = vld [vmem:[%s19] sm:$0xff]
      %v3041 = vld [vmem:[%s19 + $0x8] sm:$0xff]
      %3043 = vset.pattern.permute.xlu0 0
      %3044 = vperm.xlu0 %3043, %v3040
      %v3045 = vpop.permute.xlu0 %3044
      %3048 = vset.pattern.permute.xlu0 0
      %3049 = vperm.xlu0 %3048, %v3041
      %v3050 = vpop.permute.xlu0 %3049
      %v3052 = vadd.f32 %v3038, %v3045
      %v3053 = vadd.f32 %v3039, %v3050
      %v3054 = vadd.f32 %v3052, %v2437
      %v3055 = vadd.f32 %v3053, %v2438
      %v3056 = vmax.f32 %v3054, 0.0
      %v3057 = vmax.f32 %v3055, 0.0
      %3058 = vst [vmem:[%s653] sm:$0xff] %v3056
      %3059 = vst [vmem:[%s653 + $0x8] sm:$0xff] %v3057
      %p3060 = scmp.lt.s32.totalorder %s32, 1
      %s3061 = scalar_select %p3060, %s32, 1
      %s3062 = smul.addr %s3061, 2
      %s3063 = smul.addr %s3062, 8
      %s3064 = scalar_lea.vmem %s21, %s3063
      // Predicated region
      $region105: #{_lambda_.1} parent=103 // pred_check
        %p3065 = pneg %p496
      $region106: #{_lambda_.1} parent=103 // pred_check_branch
        %3067 = sbr.rel (%p3065) target = $region108
      $region107: #{_lambda_.1} parent=103 // pred_region
        _
      $region108: #{_lambda_.1} parent=103 // pred_fallthru
        _
    $region104: #{_lambda_.1} parent=5 // pred_fallthru
      _
    %p3068 = scmp.le.s32.totalorder 2, %s27
    // Predicated region
    $region109: #{_lambda_.1} parent=5 // pred_check
      %p3069 = pneg %p3068
    $region110: #{_lambda_.1} parent=5 // pred_check_branch
      %3071 = sbr.rel (%p3069) target = $region112
    $region111: #{_lambda_.1} parent=5 // pred_region
      %s3072 = ssub.s32 %s27, 2
      // Predicated region
      $region113: #{_lambda_.1} parent=111 // pred_check
        %p3073 = pneg %p502
      $region114: #{_lambda_.1} parent=111 // pred_check_branch
        %3075 = sbr.rel (%p3073) target = $region116
      $region115: #{_lambda_.1} parent=111 // pred_region
        %p3076 = scmp.lt.s32.totalorder %s33, 1
        %s3077 = scalar_select %p3076, %s33, 1
        %s3078 = smul.addr %s3077, 2
        %s3079 = smul.addr %s3078, 8
        %s3080 = scalar_lea.vmem %s21, %s3079
      $region116: #{_lambda_.1} parent=111 // pred_fallthru
        _
    $region112: #{_lambda_.1} parent=5 // pred_fallthru
      _
  $region6: #{_lambda_.1} parent=0 // loop_footer
    %s31 = sadd.s32 1, %s27
  $region7: #{_lambda_.1} parent=0 // loop_footer_branch
    %26 = sbr.rel target = $region3
  $region8: #{_lambda_.1} parent=0 // loop_exit
    _

</llo_original>
